<compile_context>
chip_gen: v7x
topology: tpu7x:2x2x1
jax: 0.10.0
libtpu: 0.0.40
codegen_flags: <defaults>
</compile_context>

<pallas_src>
import math

import numpy as np
import jax
import jax.numpy as jnp
from jax.experimental import pallas as pl
from jax.experimental.pallas import tpu as pltpu


def _round_up(x, m):
    return ((x + m - 1) // m) * m


def _init_linear(key, fan_in, fan_out):
    """Deterministic nn.Linear-style uniform init."""
    kw, kb = jax.random.split(key)
    bound = 1.0 / math.sqrt(fan_in)
    w = jax.random.uniform(kw, (fan_in, fan_out), jnp.float32, -bound, bound)
    b = jax.random.uniform(kb, (1, fan_out), jnp.float32, -bound, bound)
    return w, b


# ----------------------------------------------------------------------------
# Fused Pallas kernel: whole forward pass for Bt examples per grid step.
# ----------------------------------------------------------------------------
def _make_wide_kernel(meta, Bt, want_latent):
    layers = meta["layers"]
    WBW = meta["WBW"]
    rho_off = meta["rho_off"]
    rhob_off = meta["rhob_off"]
    f32 = jnp.float32

    def kernel(x_ref, wa_ref, wb_ref, out_ref):
        x = x_ref[0]                                        # [Bt, XW]

        # ---- hoisted: data-independent first-linear matmuls, all layers ----
        pre = []
        for lm in layers:
            xi = x[:, lm["x_off"]: lm["x_off"] + lm["kpad"]]
            wt = wa_ref[lm["a_top"]: lm["a_top"] + lm["kpad"], : lm["ne0"]]
            pre.append(jnp.dot(xi, wt, preferred_element_type=f32))

        reps = jnp.zeros((Bt, WBW), f32)                    # lane-dense acc
        pp = None                                           # [Bt, WBW] wide phi
        for i, lm in enumerate(layers):
            h = pre[i]
            if lm["a_bot"] >= 0:
                # for_prev contribution: ONE matmul (was a per-row loop)
                wb0 = wa_ref[lm["a_bot"]: lm["a_bot"] + WBW, : lm["ne0"]]
                h = h + jnp.dot(pp, wb0, preferred_element_type=f32)
            h = jnp.maximum(h, 0.0)
            for (w_off, k_in, ne_j, b_off) in lm["mids"]:   # extra hidden dims
                wm = wa_ref[w_off: w_off + k_in, : ne_j]
                bm = wa_ref[b_off: b_off + 1, : ne_j]
                h = jnp.maximum(
                    jnp.dot(h, wm, preferred_element_type=f32) + bm, 0.0)
            wl = wb_ref[lm["bw"]: lm["bw"] + lm["bk"], :]
            bl = wb_ref[lm["bb"]: lm["bb"] + 1, :]
            pp = jnp.maximum(
                jnp.dot(h, wl, preferred_element_type=f32) + bl, 0.0)
            # permutation-invariant row-sum, folded into one matmul per layer
            sm = wb_ref[lm["bsum"]: lm["bsum"] + WBW, :]
            reps = reps + jnp.dot(pp, sm, preferred_element_type=f32)

        if want_latent:
            out_ref[0] = reps                               # one dense store
        else:
            rw = wb_ref[rho_off: rho_off + WBW, :]
            rb = wb_ref[rhob_off: rhob_off + 1, :]
            out_ref[0] = jnp.dot(reps, rw, preferred_element_type=f32) + rb

    return kernel


# ----------------------------------------------------------------------------
# Model: parameter setup + packing + glue (mirrors the PyTorch module)
# ----------------------------------------------------------------------------
class FullPermInvModelPallas:
    def __init__(self, dims, inside_dims=(64, 8), n_classes=2, dropout=0.5,
                 key=None):
        dims_conv, dims_fc = dims
        self.dim_channels, self.dim_kernels, self.middle_dim = dims_conv
        self.dims_fc = dims_fc
        self.inside_dims = list(inside_dims)
        assert len(self.inside_dims) >= 2, "need >= 2 phi hidden dims"
        self.total_layers = len(self.dim_channels) + len(dims_fc)
        assert len(self.dim_channels) == len(self.dim_kernels), \
            "Kernel size information missing!"
        self.dropout = dropout                     # inference: identity
        if n_classes == 2:
            n_classes = 1
        self.n_classes = n_classes
        self.d_last = self.inside_dims[-1]

        if key is None:
            key = jax.random.PRNGKey(0)
        keys = jax.random.split(key, self.total_layers + 1)

        prev_layer = 0
        self.layer_feats = []
        self.layer_prevs = []
        self.layer_lin = []                        # per layer: [(w, b), ...]
        for i in range(self.total_layers):
            is_conv = i < len(self.dim_channels)
            dim = (self.dim_channels[i] if is_conv
                   else self.dims_fc[i - len(self.dim_channels)])
            if i > 0:
                prev_layer = self.d_last * dim
            if is_conv:
                feat = (1 + dim) * self.dim_kernels[i]
            else:
                if i == len(self.dim_channels):
                    prev_layer = self.d_last * self.middle_dim
                feat = 1 + dim
            in_dim = prev_layer + feat
            self.layer_feats.append(feat)
            self.layer_prevs.append(prev_layer)

            wdims = [in_dim] + self.inside_dims
            lkeys = jax.random.split(keys[i], len(wdims) - 1)
            self.layer_lin.append(
                [_init_linear(lkeys[j], wdims[j], wdims[j + 1])
                 for j in range(len(wdims) - 1)])

        self.rho_w, self.rho_b = _init_linear(
            keys[-1], self.d_last * self.total_layers, n_classes)

        self._packed = {}     # rows tuple -> (W_A, W_B, meta)
        self._fns = {}        # (rows, B, get_latent) -> jitted callable

    # ---------------- shape bookkeeping --------------------------------------
    def _rows_from_params(self, params):
        L_conv = len(self.dim_channels)
        rows = []
        for i, p in enumerate(params):
            if i < L_conv:
                assert p.ndim == 4, p.shape
                r = int(p.shape[2])
                feat = int(p.shape[1]) * int(p.shape[3])
            else:
                assert p.ndim == 3, p.shape
                r = int(p.shape[1])
                feat = int(p.shape[2])
            assert feat == self.layer_feats[i], (i, feat, self.layer_feats[i])
            rows.append(r)
        for i in range(1, len(rows)):
            assert self.layer_prevs[i] == self.d_last * rows[i - 1], \
                "target-architecture row counts inconsistent with dims"
        return tuple(rows)

    # ---------------- host-side weight packing (done once per architecture) --
    def _get_packed(self, rows):
        if rows in self._packed:
            return self._packed[rows]
        ins = self.inside_dims
        d_last = self.d_last
        L = self.total_layers
        n_cls = self.n_classes

        WBW = _round_up(max(max(r * d_last for r in rows),
                            d_last * L, n_cls), 128)
        WA_W = _round_up(max(r * ins[j]
                             for r in rows for j in range(len(ins) - 1)), 128)

        wa_blocks, wb_blocks = [], []
        wa_off, wb_off = [0], [0]

        def add_a(block):
            off = wa_off[0]
            wa_blocks.append(block)
            wa_off[0] += block.shape[0]
            return off

        def add_b(block):
            off = wb_off[0]
            wb_blocks.append(block)
            wb_off[0] += block.shape[0]
            return off

        layer_meta = []
        x_off = 0
        for i in range(L):
            r = rows[i]
            feat = self.layer_feats[i]
            prev = self.layer_prevs[i]
            lin = [(np.asarray(w, np.float32), np.asarray(b, np.float32))
                   for (w, b) in self.layer_lin[i]]
            c1 = ins[0]
            ne0 = _round_up(r * c1, 128)
            kpad = _round_up(r * feat + 1, 128)

            # stage 0: block-diag param weights + bias row (consumed by a
            # ones-lane appended to the packed input)
            w0, b0 = lin[0]
            top = w0[:feat]                            # [feat, c1]
            bot = w0[feat:]                            # [prev, c1]
            blk = np.zeros((kpad, WA_W), np.float32)
            for rr in range(r):
                blk[rr * feat:(rr + 1) * feat, rr * c1:(rr + 1) * c1] = top
                blk[r * feat, rr * c1:(rr + 1) * c1] = b0[0]
            a_top = add_a(blk)

            a_bot = -1
            if prev > 0:                               # for_prev weight, tiled
                blkb = np.zeros((WBW, WA_W), np.float32)
                for rr in range(r):
                    blkb[:prev, rr * c1:(rr + 1) * c1] = bot
                a_bot = add_a(blkb)

            # intermediate hidden stages (none for default inside_dims=(64,8))
            mids = []
            ne_prev = ne0
            for j in range(1, len(ins) - 1):
                cin, cout = ins[j - 1], ins[j]
                wj, bj = lin[j]
                nej = _round_up(r * cout, 128)
                blk = np.zeros((ne_prev, WA_W), np.float32)
                for rr in range(r):
                    blk[rr * cin:(rr + 1) * cin,
                        rr * cout:(rr + 1) * cout] = wj
                w_off = add_a(blk)
                bblk = np.zeros((8, WA_W), np.float32)
                for rr in range(r):
                    bblk[0, rr * cout:(rr + 1) * cout] = bj[0]
                b_off = add_a(bblk)
                mids.append((w_off, ne_prev, nej, b_off))
                ne_prev = nej

            # final stage (-> d_last) lives in the narrow buffer
            cin = ins[-2]
            wl, bl = lin[-1]
            blk = np.zeros((ne_prev, WBW), np.float32)
            for rr in range(r):
                blk[rr * cin:(rr + 1) * cin,
                    rr * d_last:(rr + 1) * d_last] = wl
            bw = add_b(blk)
            bblk = np.zeros((8, WBW), np.float32)
            for rr in range(r):
                bblk[0, rr * d_last:(rr + 1) * d_last] = bl[0]
            bb = add_b(bblk)

            # permutation-invariant row-sum matrix (also places the 8-wide
            # result at its reps lane offset -> lane-dense reps accumulation)
            sm = np.zeros((WBW, WBW), np.float32)
            for rr in range(r):
                for d in range(d_last):
                    sm[rr * d_last + d, i * d_last + d] = 1.0
            bsum = add_b(sm)

            layer_meta.append(dict(
                x_off=x_off, kpad=kpad, ne0=ne0, a_top=a_top, a_bot=a_bot,
                mids=tuple(mids), bw=bw, bk=ne_prev, bb=bb, bsum=bsum,
                rows=r, feat=feat))
            x_off += kpad

        rho = np.zeros((WBW, WBW), np.float32)
        rho[:d_last * L, :n_cls] = np.asarray(self.rho_w, np.float32)
        rho_off = add_b(rho)
        rb = np.zeros((8, WBW), np.float32)
        rb[0, :n_cls] = np.asarray(self.rho_b, np.float32)[0]
        rhob_off = add_b(rb)

        W_A = jnp.asarray(np.concatenate(wa_blocks, axis=0))
        W_B = jnp.asarray(np.concatenate(wb_blocks, axis=0))

        # per-example flop estimate for pl.CostEstimate
        flops = 0
        for lm in layer_meta:
            flops += 2 * lm["kpad"] * lm["ne0"]
            if lm["a_bot"] >= 0:
                flops += 2 * WBW * lm["ne0"]
            for (_w, k_in, ne_j, _b) in lm["mids"]:
                flops += 2 * k_in * ne_j
            flops += 2 * lm["bk"] * WBW + 2 * WBW * WBW
        flops += 2 * WBW * WBW

        meta = dict(layers=tuple(layer_meta), rho_off=rho_off,
                    rhob_off=rhob_off, WBW=WBW, WA_W=WA_W, XW=x_off,
                    flops_per_example=flops)
        self._packed[rows] = (W_A, W_B, meta)
        return self._packed[rows]

    # ---------------- input prep (inside jit, free HBM reshapes) -------------
    def _prep_x(self, params, meta):
        L_conv = len(self.dim_channels)
        B = params[0].shape[0]
        pieces = []
        for i, p in enumerate(params):
            p = jnp.asarray(p, jnp.float32)
            if i < L_conv:
                p = jnp.swapaxes(p, 1, 2)          # [B, Cout, 1+Cin, K*K]
            flat = p.reshape(B, -1)                # [B, rows*feat]
            lm = meta["layers"][i]
            pad = lm["kpad"] - flat.shape[1] - 1
            cols = [flat, jnp.ones((B, 1), jnp.float32)]   # ones-lane = bias
            if pad > 0:
                cols.append(jnp.zeros((B, pad), jnp.float32))
            pieces.append(jnp.concatenate(cols, axis=1))
        return jnp.concatenate(pieces, axis=1)     # [B, XW]

    # ---------------- fused forward -------------------------------------------
    def _forward_impl(self, params, W_A, W_B, meta, want_latent):
        X = self._prep_x(params, meta)
        B = X.shape[0]
        XW = meta["XW"]
        WBW = meta["WBW"]
        # v7x: keep an explicit 2-way "parallel" split so both TCs get work;
        # v5e/v6e: this is just a short sequential loop with Bt = B//nblk.
        nblk = 2 if (B % 2 == 0 and B >= 2) else 1
        Bt = B // nblk
        Xb = X.reshape(nblk, Bt, XW)

        kernel = _make_wide_kernel(meta, Bt, want_latent)
        flops = meta["flops_per_example"] * B
        bytes_accessed = 4 * (W_A.size + W_B.size + B * XW + B * WBW)

        out = pl.pallas_call(
            kernel,
            grid=(nblk,),
            in_specs=[
                pl.BlockSpec((1, Bt, XW), lambda n: (n, 0, 0)),
                pl.BlockSpec(W_A.shape, lambda n: (0, 0)),
                pl.BlockSpec(W_B.shape, lambda n: (0, 0)),
            ],
            out_specs=pl.BlockSpec((1, Bt, WBW), lambda n: (n, 0, 0)),
            out_shape=jax.ShapeDtypeStruct((nblk, Bt, WBW), jnp.float32),
            compiler_params=pltpu.CompilerParams(
                dimension_semantics=("parallel",),
                vmem_limit_bytes=32 * 1024 * 1024),
            cost_estimate=pl.CostEstimate(
                flops=flops, transcendentals=0,
                bytes_accessed=bytes_accessed),
        )(Xb, W_A, W_B)

        out = out.reshape(B, WBW)
        if want_latent:
            return out[:, : self.d_last * self.total_layers]
        return out[:, : self.n_classes]

    def forward(self, params, get_latent=False):
        params = [jnp.asarray(p, jnp.float32) for p in params]
        rows = self._rows_from_params(params)
        B = int(params[0].shape[0])
        W_A, W_B, meta = self._get_packed(rows)
        key = (rows, B, bool(get_latent))
        if key not in self._fns:
            want_latent = bool(get_latent)

            def fn(ps, wa, wb, _meta=meta, _wl=want_latent):
                return self._forward_impl(list(ps), wa, wb, _meta, _wl)

            self._fns[key] = jax.jit(fn)
        return self._fns[key](tuple(params), W_A, W_B)

    # ---------------- pure-JAX reference (correctness validation) ------------
    def forward_reference(self, params, get_latent=False):
        L_conv = len(self.dim_channels)
        procd = []
        for i, p in enumerate(params):
            p = jnp.asarray(p, jnp.float32)
            if i < L_conv:
                p = jnp.swapaxes(p, 1, 2)
                p = p.reshape(p.shape[0], p.shape[1], -1)
            procd.append(p)
        reps = []
        for_prev = None
        for i, p in enumerate(procd):
            if for_prev is None:
                x = p
            else:
                prev_rep = jnp.tile(for_prev, (1, p.shape[1], 1))
                x = jnp.concatenate([p, prev_rep], axis=-1)
            B, r, _ = x.shape
            h = x.reshape(B * r, -1)
            for (w, b) in self.layer_lin[i]:
                h = jnp.maximum(h @ w + b, 0.0)
            pp = h.reshape(B, r, -1)
            reps.append(jnp.sum(pp, axis=1))
            for_prev = pp.reshape(B, 1, -1)
        reps = jnp.concatenate(reps, axis=1)
        if get_latent:
            return reps
        return reps @ self.rho_w + self.rho_b


# ----------------------------------------------------------------------------
# Example run
# ----------------------------------------------------------------------------
if __name__ == "__main__":
    key = jax.random.PRNGKey(0)
    k_model, k_in = jax.random.split(key)

    # Target architecture description:
    #   2 conv layers: in-channels [3, 4], 3x3 kernels (K*K = 9), last conv out = 6
    #   2 fc layers  : in-dims [16, 10]
    dims = [[[3, 4], [9, 9], 6], [16, 10]]
    model = FullPermInvModelPallas(dims, inside_dims=(64, 8), n_classes=2,
                                   key=k_model)

    B = 2
    kp = jax.random.split(k_in, 4)
    params = [
        jax.random.normal(kp[0], (B, 1 + 3, 4, 9), jnp.float32),   # conv0
        jax.random.normal(kp[1], (B, 1 + 4, 6, 9), jnp.float32),   # conv1
        jax.random.normal(kp[2], (B, 10, 1 + 16), jnp.float32),    # fc0
        jax.random.normal(kp[3], (B, 5, 1 + 10), jnp.float32),     # fc1
    ]

    logits = model.forward(params)
    jax.block_until_ready(logits)
    assert logits.shape == (B, 1), logits.shape

    latent = model.forward(params, get_latent=True)
    jax.block_until_ready(latent)
    assert latent.shape == (B, 8 * model.total_layers), latent.shape

    # validate the fused kernel against a pure-JAX reference of the module
    ref_logits = model.forward_reference(params)
    ref_latent = model.forward_reference(params, get_latent=True)
    assert jnp.allclose(logits, ref_logits, rtol=1e-3, atol=1e-3)
    assert jnp.allclose(latent, ref_latent, rtol=1e-3, atol=1e-3)

    print("KERNEL_OK")
</pallas_src>

<mosaic_0001>
module attributes {stable_mosaic.version = 11 : i64} {
  func.func @kernel(%arg0: i32, %arg1: memref<1x1x1024xf32, #tpu.memory_space<vmem>>, %arg2: memref<1408x640xf32, #tpu.memory_space<vmem>>, %arg3: memref<2344x128xf32, #tpu.memory_space<vmem>>, %arg4: memref<1x1x128xf32, #tpu.memory_space<vmem>>) attributes {dimension_semantics = [#tpu.dimension_semantics<parallel>], iteration_bounds = array<i64: 2>, scalar_prefetch = 0 : i64, scratch_operands = 0 : i64, tpu.core_type = #tpu.core_type<tc>, window_params = [{transform_indices = @transform_0, window_bounds = array<i64: 1, 1, 1024>}, {pipeline_mode = #tpu.pipeline_mode<synchronous>, transform_indices = @transform_1, window_bounds = array<i64: 1408, 640>}, {pipeline_mode = #tpu.pipeline_mode<synchronous>, transform_indices = @transform_2, window_bounds = array<i64: 2344, 128>}, {transform_indices = @transform_3, window_bounds = array<i64: 1, 1, 128>}]} {
    %c0 = arith.constant 0 : index
    %c0_0 = arith.constant 0 : index
    %c0_1 = arith.constant 0 : index
    %0 = vector.load %arg1[%c0, %c0_0, %c0_1] : memref<1x1x1024xf32, #tpu.memory_space<vmem>>, vector<1x1x1024xf32>
    %1 = vector.shape_cast %0 : vector<1x1x1024xf32> to vector<1x1024xf32>
    %2 = vector.extract_strided_slice %1 {offsets = [0, 0], sizes = [1, 256], strides = [1, 1]} : vector<1x1024xf32> to vector<1x256xf32>
    %c0_2 = arith.constant 0 : index
    %c0_3 = arith.constant 0 : index
    %3 = vector.load %arg2[%c0_2, %c0_3] : memref<1408x640xf32, #tpu.memory_space<vmem>>, vector<256x256xf32>
    %cst = arith.constant dense<0.000000e+00> : vector<1x256xf32>
    %4 = tpu.matmul %2, %3, %cst {dimension_numbers = #tpu.dot_dimension_numbers<[1], [0], [0], [1], [0, 0, 1, 1], [], []>} : vector<1x256xf32>, vector<256x256xf32>, vector<1x256xf32> -> vector<1x256xf32>
    %5 = vector.extract_strided_slice %1 {offsets = [0, 256], sizes = [1, 384], strides = [1, 1]} : vector<1x1024xf32> to vector<1x384xf32>
    %c256 = arith.constant 256 : index
    %c0_4 = arith.constant 0 : index
    %6 = vector.load %arg2[%c256, %c0_4] : memref<1408x640xf32, #tpu.memory_space<vmem>>, vector<384x384xf32>
    %cst_5 = arith.constant dense<0.000000e+00> : vector<1x384xf32>
    %7 = tpu.matmul %5, %6, %cst_5 {dimension_numbers = #tpu.dot_dimension_numbers<[1], [0], [0], [1], [0, 0, 1, 1], [], []>} : vector<1x384xf32>, vector<384x384xf32>, vector<1x384xf32> -> vector<1x384xf32>
    %8 = vector.extract_strided_slice %1 {offsets = [0, 640], sizes = [1, 256], strides = [1, 1]} : vector<1x1024xf32> to vector<1x256xf32>
    %c768 = arith.constant 768 : index
    %c0_6 = arith.constant 0 : index
    %9 = vector.load %arg2[%c768, %c0_6] : memref<1408x640xf32, #tpu.memory_space<vmem>>, vector<256x640xf32>
    %cst_7 = arith.constant dense<0.000000e+00> : vector<1x640xf32>
    %10 = tpu.matmul %8, %9, %cst_7 {dimension_numbers = #tpu.dot_dimension_numbers<[1], [0], [0], [1], [0, 0, 1, 1], [], []>} : vector<1x256xf32>, vector<256x640xf32>, vector<1x640xf32> -> vector<1x640xf32>
    %11 = vector.extract_strided_slice %1 {offsets = [0, 896], sizes = [1, 128], strides = [1, 1]} : vector<1x1024xf32> to vector<1x128xf32>
    %c1152 = arith.constant 1152 : index
    %c0_8 = arith.constant 0 : index
    %12 = vector.load %arg2[%c1152, %c0_8] : memref<1408x640xf32, #tpu.memory_space<vmem>>, vector<128x384xf32>
    %cst_9 = arith.constant dense<0.000000e+00> : vector<1x384xf32>
    %13 = tpu.matmul %11, %12, %cst_9 {dimension_numbers = #tpu.dot_dimension_numbers<[1], [0], [0], [1], [0, 0, 1, 1], [], []>} : vector<1x128xf32>, vector<128x384xf32>, vector<1x384xf32> -> vector<1x384xf32>
    %cst_10 = arith.constant 0.000000e+00 : f32
    %14 = vector.broadcast %cst_10 : f32 to vector<1x128xf32>
    %cst_11 = arith.constant 0.000000e+00 : f32
    %15 = vector.broadcast %cst_11 : f32 to vector<1x256xf32>
    %16 = arith.maximumf %4, %15 : vector<1x256xf32>
    %c0_12 = arith.constant 0 : index
    %c0_13 = arith.constant 0 : index
    %17 = vector.load %arg3[%c0_12, %c0_13] : memref<2344x128xf32, #tpu.memory_space<vmem>>, vector<256x128xf32>
    %c256_14 = arith.constant 256 : index
    %c0_15 = arith.constant 0 : index
    %18 = vector.load %arg3[%c256_14, %c0_15] : memref<2344x128xf32, #tpu.memory_space<vmem>>, vector<1x128xf32>
    %cst_16 = arith.constant dense<0.000000e+00> : vector<1x128xf32>
    %19 = tpu.matmul %16, %17, %cst_16 {dimension_numbers = #tpu.dot_dimension_numbers<[1], [0], [0], [1], [0, 0, 1, 1], [], []>} : vector<1x256xf32>, vector<256x128xf32>, vector<1x128xf32> -> vector<1x128xf32>
    %20 = arith.addf %19, %18 : vector<1x128xf32>
    %cst_17 = arith.constant 0.000000e+00 : f32
    %21 = vector.broadcast %cst_17 : f32 to vector<1x128xf32>
    %22 = arith.maximumf %20, %21 : vector<1x128xf32>
    %c264 = arith.constant 264 : index
    %c0_18 = arith.constant 0 : index
    %23 = vector.load %arg3[%c264, %c0_18] : memref<2344x128xf32, #tpu.memory_space<vmem>>, vector<128x128xf32>
    %cst_19 = arith.constant dense<0.000000e+00> : vector<1x128xf32>
    %24 = tpu.matmul %22, %23, %cst_19 {dimension_numbers = #tpu.dot_dimension_numbers<[1], [0], [0], [1], [0, 0, 1, 1], [], []>} : vector<1x128xf32>, vector<128x128xf32>, vector<1x128xf32> -> vector<1x128xf32>
    %25 = arith.addf %14, %24 : vector<1x128xf32>
    %c640 = arith.constant 640 : index
    %c0_20 = arith.constant 0 : index
    %26 = vector.load %arg2[%c640, %c0_20] : memref<1408x640xf32, #tpu.memory_space<vmem>>, vector<128x384xf32>
    %cst_21 = arith.constant dense<0.000000e+00> : vector<1x384xf32>
    %27 = tpu.matmul %22, %26, %cst_21 {dimension_numbers = #tpu.dot_dimension_numbers<[1], [0], [0], [1], [0, 0, 1, 1], [], []>} : vector<1x128xf32>, vector<128x384xf32>, vector<1x384xf32> -> vector<1x384xf32>
    %28 = arith.addf %7, %27 : vector<1x384xf32>
    %cst_22 = arith.constant 0.000000e+00 : f32
    %29 = vector.broadcast %cst_22 : f32 to vector<1x384xf32>
    %30 = arith.maximumf %28, %29 : vector<1x384xf32>
    %c392 = arith.constant 392 : index
    %c0_23 = arith.constant 0 : index
    %31 = vector.load %arg3[%c392, %c0_23] : memref<2344x128xf32, #tpu.memory_space<vmem>>, vector<384x128xf32>
    %c776 = arith.constant 776 : index
    %c0_24 = arith.constant 0 : index
    %32 = vector.load %arg3[%c776, %c0_24] : memref<2344x128xf32, #tpu.memory_space<vmem>>, vector<1x128xf32>
    %cst_25 = arith.constant dense<0.000000e+00> : vector<1x128xf32>
    %33 = tpu.matmul %30, %31, %cst_25 {dimension_numbers = #tpu.dot_dimension_numbers<[1], [0], [0], [1], [0, 0, 1, 1], [], []>} : vector<1x384xf32>, vector<384x128xf32>, vector<1x128xf32> -> vector<1x128xf32>
    %34 = arith.addf %33, %32 : vector<1x128xf32>
    %cst_26 = arith.constant 0.000000e+00 : f32
    %35 = vector.broadcast %cst_26 : f32 to vector<1x128xf32>
    %36 = arith.maximumf %34, %35 : vector<1x128xf32>
    %c784 = arith.constant 784 : index
    %c0_27 = arith.constant 0 : index
    %37 = vector.load %arg3[%c784, %c0_27] : memref<2344x128xf32, #tpu.memory_space<vmem>>, vector<128x128xf32>
    %cst_28 = arith.constant dense<0.000000e+00> : vector<1x128xf32>
    %38 = tpu.matmul %36, %37, %cst_28 {dimension_numbers = #tpu.dot_dimension_numbers<[1], [0], [0], [1], [0, 0, 1, 1], [], []>} : vector<1x128xf32>, vector<128x128xf32>, vector<1x128xf32> -> vector<1x128xf32>
    %39 = arith.addf %25, %38 : vector<1x128xf32>
    %c1024 = arith.constant 1024 : index
    %c0_29 = arith.constant 0 : index
    %40 = vector.load %arg2[%c1024, %c0_29] : memref<1408x640xf32, #tpu.memory_space<vmem>>, vector<128x640xf32>
    %cst_30 = arith.constant dense<0.000000e+00> : vector<1x640xf32>
    %41 = tpu.matmul %36, %40, %cst_30 {dimension_numbers = #tpu.dot_dimension_numbers<[1], [0], [0], [1], [0, 0, 1, 1], [], []>} : vector<1x128xf32>, vector<128x640xf32>, vector<1x640xf32> -> vector<1x640xf32>
    %42 = arith.addf %10, %41 : vector<1x640xf32>
    %cst_31 = arith.constant 0.000000e+00 : f32
    %43 = vector.broadcast %cst_31 : f32 to vector<1x640xf32>
    %44 = arith.maximumf %42, %43 : vector<1x640xf32>
    %c912 = arith.constant 912 : index
    %c0_32 = arith.constant 0 : index
    %45 = vector.load %arg3[%c912, %c0_32] : memref<2344x128xf32, #tpu.memory_space<vmem>>, vector<640x128xf32>
    %c1552 = arith.constant 1552 : index
    %c0_33 = arith.constant 0 : index
    %46 = vector.load %arg3[%c1552, %c0_33] : memref<2344x128xf32, #tpu.memory_space<vmem>>, vector<1x128xf32>
    %cst_34 = arith.constant dense<0.000000e+00> : vector<1x128xf32>
    %47 = tpu.matmul %44, %45, %cst_34 {dimension_numbers = #tpu.dot_dimension_numbers<[1], [0], [0], [1], [0, 0, 1, 1], [], []>} : vector<1x640xf32>, vector<640x128xf32>, vector<1x128xf32> -> vector<1x128xf32>
    %48 = arith.addf %47, %46 : vector<1x128xf32>
    %cst_35 = arith.constant 0.000000e+00 : f32
    %49 = vector.broadcast %cst_35 : f32 to vector<1x128xf32>
    %50 = arith.maximumf %48, %49 : vector<1x128xf32>
    %c1560 = arith.constant 1560 : index
    %c0_36 = arith.constant 0 : index
    %51 = vector.load %arg3[%c1560, %c0_36] : memref<2344x128xf32, #tpu.memory_space<vmem>>, vector<128x128xf32>
    %cst_37 = arith.constant dense<0.000000e+00> : vector<1x128xf32>
    %52 = tpu.matmul %50, %51, %cst_37 {dimension_numbers = #tpu.dot_dimension_numbers<[1], [0], [0], [1], [0, 0, 1, 1], [], []>} : vector<1x128xf32>, vector<128x128xf32>, vector<1x128xf32> -> vector<1x128xf32>
    %53 = arith.addf %39, %52 : vector<1x128xf32>
    %c1280 = arith.constant 1280 : index
    %c0_38 = arith.constant 0 : index
    %54 = vector.load %arg2[%c1280, %c0_38] : memref<1408x640xf32, #tpu.memory_space<vmem>>, vector<128x384xf32>
    %cst_39 = arith.constant dense<0.000000e+00> : vector<1x384xf32>
    %55 = tpu.matmul %50, %54, %cst_39 {dimension_numbers = #tpu.dot_dimension_numbers<[1], [0], [0], [1], [0, 0, 1, 1], [], []>} : vector<1x128xf32>, vector<128x384xf32>, vector<1x384xf32> -> vector<1x384xf32>
    %56 = arith.addf %13, %55 : vector<1x384xf32>
    %cst_40 = arith.constant 0.000000e+00 : f32
    %57 = vector.broadcast %cst_40 : f32 to vector<1x384xf32>
    %58 = arith.maximumf %56, %57 : vector<1x384xf32>
    %c1688 = arith.constant 1688 : index
    %c0_41 = arith.constant 0 : index
    %59 = vector.load %arg3[%c1688, %c0_41] : memref<2344x128xf32, #tpu.memory_space<vmem>>, vector<384x128xf32>
    %c2072 = arith.constant 2072 : index
    %c0_42 = arith.constant 0 : index
    %60 = vector.load %arg3[%c2072, %c0_42] : memref<2344x128xf32, #tpu.memory_space<vmem>>, vector<1x128xf32>
    %cst_43 = arith.constant dense<0.000000e+00> : vector<1x128xf32>
    %61 = tpu.matmul %58, %59, %cst_43 {dimension_numbers = #tpu.dot_dimension_numbers<[1], [0], [0], [1], [0, 0, 1, 1], [], []>} : vector<1x384xf32>, vector<384x128xf32>, vector<1x128xf32> -> vector<1x128xf32>
    %62 = arith.addf %61, %60 : vector<1x128xf32>
    %cst_44 = arith.constant 0.000000e+00 : f32
    %63 = vector.broadcast %cst_44 : f32 to vector<1x128xf32>
    %64 = arith.maximumf %62, %63 : vector<1x128xf32>
    %c2080 = arith.constant 2080 : index
    %c0_45 = arith.constant 0 : index
    %65 = vector.load %arg3[%c2080, %c0_45] : memref<2344x128xf32, #tpu.memory_space<vmem>>, vector<128x128xf32>
    %cst_46 = arith.constant dense<0.000000e+00> : vector<1x128xf32>
    %66 = tpu.matmul %64, %65, %cst_46 {dimension_numbers = #tpu.dot_dimension_numbers<[1], [0], [0], [1], [0, 0, 1, 1], [], []>} : vector<1x128xf32>, vector<128x128xf32>, vector<1x128xf32> -> vector<1x128xf32>
    %67 = arith.addf %53, %66 : vector<1x128xf32>
    %c2208 = arith.constant 2208 : index
    %c0_47 = arith.constant 0 : index
    %68 = vector.load %arg3[%c2208, %c0_47] : memref<2344x128xf32, #tpu.memory_space<vmem>>, vector<128x128xf32>
    %c2336 = arith.constant 2336 : index
    %c0_48 = arith.constant 0 : index
    %69 = vector.load %arg3[%c2336, %c0_48] : memref<2344x128xf32, #tpu.memory_space<vmem>>, vector<1x128xf32>
    %cst_49 = arith.constant dense<0.000000e+00> : vector<1x128xf32>
    %70 = tpu.matmul %67, %68, %cst_49 {dimension_numbers = #tpu.dot_dimension_numbers<[1], [0], [0], [1], [0, 0, 1, 1], [], []>} : vector<1x128xf32>, vector<128x128xf32>, vector<1x128xf32> -> vector<1x128xf32>
    %71 = arith.addf %70, %69 : vector<1x128xf32>
    %c0_50 = arith.constant 0 : index
    %c0_51 = arith.constant 0 : index
    %c0_52 = arith.constant 0 : index
    %72 = vector.load %arg4[%c0_50, %c0_51, %c0_52] : memref<1x1x128xf32, #tpu.memory_space<vmem>>, vector<1x1x128xf32>
    %73 = vector.shape_cast %72 : vector<1x1x128xf32> to vector<1x128xf32>
    %74 = vector.shape_cast %71 : vector<1x128xf32> to vector<1x1x128xf32>
    tpu.vector_store %arg4[%c0_50, %c0_51, %c0_52], %74 {strides = array<i32>} : memref<1x1x128xf32, #tpu.memory_space<vmem>>, vector<1x1x128xf32>,
    return
  }
  func.func @transform_0(%arg0: i32) -> (i32, i32, i32) {
    %c0_i32 = arith.constant 0 : i32
    %c0_i32_0 = arith.constant 0 : i32
    %c0_i32_1 = arith.constant 0 : i32
    return %arg0, %c0_i32, %c0_i32_0 : i32, i32, i32
  }
  func.func @transform_1(%arg0: i32) -> (i32, i32) {
    %c0_i32 = arith.constant 0 : i32
    %c0_i32_0 = arith.constant 0 : i32
    %c0_i32_1 = arith.constant 0 : i32
    return %c0_i32, %c0_i32_0 : i32, i32
  }
  func.func @transform_2(%arg0: i32) -> (i32, i32) {
    %c0_i32 = arith.constant 0 : i32
    %c0_i32_0 = arith.constant 0 : i32
    %c0_i32_1 = arith.constant 0 : i32
    return %c0_i32, %c0_i32_0 : i32, i32
  }
  func.func @transform_3(%arg0: i32) -> (i32, i32, i32) {
    %c0_i32 = arith.constant 0 : i32
    %c0_i32_0 = arith.constant 0 : i32
    %c0_i32_1 = arith.constant 0 : i32
    return %arg0, %c0_i32, %c0_i32_0 : i32, i32, i32
  }
}

</mosaic_0001>

<llo_original>
// kernel: fn.1
$region0: #{fn.1}
  #allocation0 [shape = 'u32[]', space=smem, size = 0x4, offset = 0x4, fixed_abs, tag = 'smem constant byte address 0x4 - core index']
  #allocation1 [shape = 'u32[144,128]{1,0:T(1,128)}', space=vmem, size = 0x12000, scoped, tag = 'internal scratch']
  %s0 = inlined_call_operand.vmem [shape: f32[2,1,1024], index: 0, kind: input, shape index: {}]
  %s1 = inlined_call_operand.hbm [shape: f32[1408,640], index: 1, kind: input, shape index: {}]
  %s2 = inlined_call_operand.hbm [shape: f32[2344,128], index: 2, kind: input, shape index: {}]
  %s3 = inlined_call_operand.vmem [shape: f32[2,1,128], index: 3, kind: output, shape index: {}]
  %s4 = sld [smem:[#allocation0]]
  $region53: #{fn.1} parent=0
    _
  %s6 = ssub.s32 1, %s4
  %s7 = scalar_select 0, %s6, %s4
  $region1: #{fn.1} parent=0
    #allocation2 [shape = 'u8[3604480]{0}', space=vmem, size = 0x370000, scoped, tag = 'input window, operand 1, single buffered']
    #allocation3 [shape = 's32[2]{0}', space=sflag, size = 0x8, scoped, tag = 'scoped memory for fn.1']
    #allocation4 [shape = 'u8[1200128]{0}', space=vmem, size = 0x125000, scoped, tag = 'input window, operand 2, single buffered']
    #allocation5 [shape = 's32[1]{0}', space=sflag, size = 0x4, scoped, tag = 'scoped memory for fn.1']
    %8 = vsyncpa [#allocation3], 0
    %9 = vsyncpa [#allocation5], 0
    loop: start=0, step=1, limit=4
    $region2: #{fn.1} parent=1 // loop_pre_header
      _
    $region3: #{fn.1} parent=1 // loop_header
      %s11 = sphi 0, %s15
      %p12 = scmp.ge.s32.totalorder %s11, 4
      %s21 = sphi 0, %s23
      %s24 = sphi 0, %s21
      %s25 = sphi 0, %s24
      %s41 = sphi 0, %s25
      %s45 = sphi 0, %s45
      %s47 = sphi 0, %s45
      %s48 = sphi 0, %s47
      %s62 = sphi 0, %s48
      %s66 = sphi 0, %s66
      %s68 = sphi 0, %s66
      %s69 = sphi 0, %s68
      %s83 = sphi 0, %s69
      %s89 = sphi 0, %s91
      %s92 = sphi 0, %s89
      %s93 = sphi 0, %s92
      %s109 = sphi 0, %s93
    $region4: #{fn.1} parent=1 // loop_header_branch
      %14 = sbr.rel (%p12) target = $region8
    $region5: #{fn.1} parent=1 // loop_body
      %s16 = ssub.s32 %s11, 1
      %s17 = ssub.s32 %s11, 2
      %s18 = sadd.s32 %s11, 1
      %s19 = ssub.s32 %s11, %s18
      %p20 = scmp.eq.s32.totalorder %s19, 0
      %s22 = sadd.s32 %s21, 1
      %s23 = scalar_select %p20, %s21, %s22
      %p26 = pneg %p20
      %p27 = scmp.eq.s32.totalorder %s11, 1
      %p28 = por %p26, %p27
      %p29 = scmp.ne.s32.totalorder %s21, %s24
      %p30 = scmp.eq.s32.totalorder %s11, 0
      %p31 = por %p29, %p30
      %p32 = scmp.ne.s32.totalorder %s21, %s24
      %p33 = scmp.eq.s32.totalorder %s16, 1
      %p34 = por %p32, %p33
      %p35 = scmp.ne.s32.totalorder %s24, %s25
      %p36 = scmp.eq.s32.totalorder %s16, 0
      %p37 = por %p35, %p36
      %p38 = scmp.ne.s32.totalorder %s24, %s25
      %p39 = scmp.eq.s32.totalorder %s17, 1
      %p40 = por %p38, %p39
      %p42 = scmp.ne.s32.totalorder %s25, %s41
      %p43 = scmp.eq.s32.totalorder %s17, 0
      %p44 = por %p42, %p43
      %s46 = sadd.s32 %s45, 1
      %p49 = scmp.eq.s32.totalorder %s11, 1
      %p50 = scmp.ne.s32.totalorder %s45, %s47
      %p51 = scmp.eq.s32.totalorder %s11, 0
      %p52 = por %p50, %p51
      %p53 = scmp.ne.s32.totalorder %s45, %s47
      %p54 = scmp.eq.s32.totalorder %s16, 1
      %p55 = por %p53, %p54
      %p56 = scmp.ne.s32.totalorder %s47, %s48
      %p57 = scmp.eq.s32.totalorder %s16, 0
      %p58 = por %p56, %p57
      %p59 = scmp.ne.s32.totalorder %s47, %s48
      %p60 = scmp.eq.s32.totalorder %s17, 1
      %p61 = por %p59, %p60
      %p63 = scmp.ne.s32.totalorder %s48, %s62
      %p64 = scmp.eq.s32.totalorder %s17, 0
      %p65 = por %p63, %p64
      %s67 = sadd.s32 %s66, 1
      %p70 = scmp.eq.s32.totalorder %s11, 1
      %p71 = scmp.ne.s32.totalorder %s66, %s68
      %p72 = scmp.eq.s32.totalorder %s11, 0
      %p73 = por %p71, %p72
      %p74 = scmp.ne.s32.totalorder %s66, %s68
      %p75 = scmp.eq.s32.totalorder %s16, 1
      %p76 = por %p74, %p75
      %p77 = scmp.ne.s32.totalorder %s68, %s69
      %p78 = scmp.eq.s32.totalorder %s16, 0
      %p79 = por %p77, %p78
      %p80 = scmp.ne.s32.totalorder %s68, %s69
      %p81 = scmp.eq.s32.totalorder %s17, 1
      %p82 = por %p80, %p81
      %p84 = scmp.ne.s32.totalorder %s69, %s83
      %p85 = scmp.eq.s32.totalorder %s17, 0
      %p86 = por %p84, %p85
      %s87 = ssub.s32 %s11, %s18
      %p88 = scmp.eq.s32.totalorder %s87, 0
      %s90 = sadd.s32 %s89, 1
      %s91 = scalar_select %p88, %s89, %s90
      %p94 = pneg %p88
      %p95 = scmp.eq.s32.totalorder %s11, 1
      %p96 = por %p94, %p95
      %p97 = scmp.ne.s32.totalorder %s89, %s92
      %p98 = scmp.eq.s32.totalorder %s11, 0
      %p99 = por %p97, %p98
      %p100 = scmp.ne.s32.totalorder %s89, %s92
      %p101 = scmp.eq.s32.totalorder %s16, 1
      %p102 = por %p100, %p101
      %p103 = scmp.ne.s32.totalorder %s92, %s93
      %p104 = scmp.eq.s32.totalorder %s16, 0
      %p105 = por %p103, %p104
      %p106 = scmp.ne.s32.totalorder %s92, %s93
      %p107 = scmp.eq.s32.totalorder %s17, 1
      %p108 = por %p106, %p107
      %p110 = scmp.ne.s32.totalorder %s93, %s109
      %p111 = scmp.eq.s32.totalorder %s17, 0
      %p112 = por %p110, %p111
      %p113 = scmp.le.s32.totalorder 1, %s11
      %p114 = scmp.lt.s32.totalorder %s11, 3
      %p115 = pnand %p113, %p114
      %p116 = pneg %p115
      // Predicated region
      $region9: #{fn.1} parent=5 // pred_check
        _
      $region10: #{fn.1} parent=5 // pred_check_branch
        %118 = sbr.rel (%p115) target = $region12
      $region11: #{fn.1} parent=5 // pred_region
        %s119 = ssub.s32 %s11, 1
        // Predicated region
        $region13: #{fn.1} parent=11 // pred_check
          %p120 = pneg %p58
        $region14: #{fn.1} parent=11 // pred_check_branch
          %122 = sbr.rel (%p120) target = $region16
        $region15: #{fn.1} parent=11 // pred_region
          %s124 = ssub.s32 112640, 112640
          %125 = vsyncadd [#allocation3], %s124
          %s126 = sshll.u32 [#allocation2], 4
          %s127 = int_to_ptr.vmem [resolvable:$true] %s126
          %132 = dma.hbm_to_vmem [thread:$0]  %s1, 112640, %s127, [#allocation3], 640, 640, 40
        $region16: #{fn.1} parent=11 // pred_fallthru
          _
        // Predicated region
        $region17: #{fn.1} parent=11 // pred_check
          %p133 = pneg %p79
        $region18: #{fn.1} parent=11 // pred_check_branch
          %135 = sbr.rel (%p133) target = $region20
        $region19: #{fn.1} parent=11 // pred_region
          %s137 = ssub.s32 37504, 37504
          %138 = vsyncadd [#allocation5], %s137
          %s139 = sshll.u32 [#allocation4], 4
          %s140 = int_to_ptr.vmem [resolvable:$true] %s139
          %145 = dma.hbm_to_vmem [thread:$0]  %s2, 37504, %s140, [#allocation5], 128, 128, 8
        $region20: #{fn.1} parent=11 // pred_fallthru
          _
      $region12: #{fn.1} parent=5 // pred_fallthru
        _
      %p146 = scmp.lt.s32.totalorder %s11, 2
      // Predicated region
      $region21: #{fn.1} parent=5 // pred_check
        %p147 = pneg %p146
      $region22: #{fn.1} parent=5 // pred_check_branch
        %149 = sbr.rel (%p147) target = $region24
      $region23: #{fn.1} parent=5 // pred_region
        // Predicated region
        $region25: #{fn.1} parent=23 // pred_check
          %p150 = pneg %p31
        $region26: #{fn.1} parent=23 // pred_check_branch
          %152 = sbr.rel (%p150) target = $region28
        $region27: #{fn.1} parent=23 // pred_region
          %p153 = scmp.lt.s32.totalorder %s11, 1
          %s154 = scalar_select %p153, %s11, 1
          %s155 = smul.addr %s154, 8
          %s156 = scalar_lea.vmem %s0, %s155
        $region28: #{fn.1} parent=23 // pred_fallthru
          _
      $region24: #{fn.1} parent=5 // pred_fallthru
        _
      %p157 = scmp.le.s32.totalorder 1, %s11
      %p158 = scmp.lt.s32.totalorder %s11, 3
      %p159 = pnand %p157, %p158
      %p160 = pneg %p159
      // Predicated region
      $region29: #{fn.1} parent=5 // pred_check
        _
      $region30: #{fn.1} parent=5 // pred_check_branch
        %162 = sbr.rel (%p159) target = $region32
      $region31: #{fn.1} parent=5 // pred_region
        %s163 = ssub.s32 %s11, 1
        // Predicated region
        $region33: #{fn.1} parent=31 // pred_check
          %p164 = pneg %p58
        $region34: #{fn.1} parent=31 // pred_check_branch
          %166 = sbr.rel (%p164) target = $region36
        $region35: #{fn.1} parent=31 // pred_region
          %167 = dma.done [#allocation3], 112640
        $region36: #{fn.1} parent=31 // pred_fallthru
          _
        // Predicated region
        $region37: #{fn.1} parent=31 // pred_check
          %p168 = pneg %p79
        $region38: #{fn.1} parent=31 // pred_check_branch
          %170 = sbr.rel (%p168) target = $region40
        $region39: #{fn.1} parent=31 // pred_region
          %171 = dma.done [#allocation5], 37504
        $region40: #{fn.1} parent=31 // pred_fallthru
          _
        %p172 = scmp.lt.s32.totalorder %s16, 1
        %s173 = scalar_select %p172, %s16, 1
        %s174 = smul.addr %s173, 8
        %s175 = scalar_lea.vmem %s0, %s174
        %p176 = pneg %p37
        %p177 = pneg %p34
        %p178 = pneg %p58
        %p179 = pneg %p55
        %p180 = pneg %p79
        %p181 = pneg %p76
        %p182 = pneg %p105
        %p183 = pneg %p102
        %p184 = scmp.lt.s32.totalorder %s16, 1
        %s185 = scalar_select %p184, %s16, 1
        %s186 = scalar_lea.vmem %s3, %s185
        %p187 = scmp.lt.s32.totalorder %s16, 1
        %s188 = scalar_select %p187, %s16, 1
        %s189 = smul.addr %s188, 8
        %s190 = scalar_lea.vmem %s0, %s189
        %p191 = scmp.lt.s32.totalorder %s16, 1
        %s192 = scalar_select %p191, %s16, 1
        %s193 = scalar_lea.vmem %s3, %s192
        %v194 = vld [vmem:[%s190] sm:$0xff]
        %v195 = vld [vmem:[#allocation2] sm:$0xff]
        %v196 = vld [vmem:[#allocation2 + $0x8] sm:$0xff]
        %v197 = vld [vmem:[#allocation2 + $0x28] sm:$0xff]
        %v198 = vld [vmem:[#allocation2 + $0x30] sm:$0xff]
        %v199 = vld [vmem:[#allocation2 + $0x50] sm:$0xff]
        %v200 = vld [vmem:[#allocation2 + $0x58] sm:$0xff]
        %v201 = vld [vmem:[#allocation2 + $0x78] sm:$0xff]
        %v202 = vld [vmem:[#allocation2 + $0x80] sm:$0xff]
        %v203 = vld [vmem:[#allocation2 + $0xa0] sm:$0xff]
        %v204 = vld [vmem:[#allocation2 + $0xa8] sm:$0xff]
        %v205 = vld [vmem:[#allocation2 + $0xc8] sm:$0xff]
        %v206 = vld [vmem:[#allocation2 + $0xd0] sm:$0xff]
        %v207 = vld [vmem:[#allocation2 + $0xf0] sm:$0xff]
        %v208 = vld [vmem:[#allocation2 + $0xf8] sm:$0xff]
        %v209 = vld [vmem:[#allocation2 + $0x118] sm:$0xff]
        %v210 = vld [vmem:[#allocation2 + $0x120] sm:$0xff]
        %v211 = vld [vmem:[#allocation2 + $0x140] sm:$0xff]
        %v212 = vld [vmem:[#allocation2 + $0x148] sm:$0xff]
        %v213 = vld [vmem:[#allocation2 + $0x168] sm:$0xff]
        %v214 = vld [vmem:[#allocation2 + $0x170] sm:$0xff]
        %v215 = vld [vmem:[#allocation2 + $0x190] sm:$0xff]
        %v216 = vld [vmem:[#allocation2 + $0x198] sm:$0xff]
        %v217 = vld [vmem:[#allocation2 + $0x1b8] sm:$0xff]
        %v218 = vld [vmem:[#allocation2 + $0x1c0] sm:$0xff]
        %v219 = vld [vmem:[#allocation2 + $0x1e0] sm:$0xff]
        %v220 = vld [vmem:[#allocation2 + $0x1e8] sm:$0xff]
        %v221 = vld [vmem:[#allocation2 + $0x208] sm:$0xff]
        %v222 = vld [vmem:[#allocation2 + $0x210] sm:$0xff]
        %v223 = vld [vmem:[#allocation2 + $0x230] sm:$0xff]
        %v224 = vld [vmem:[#allocation2 + $0x238] sm:$0xff]
        %v225 = vld [vmem:[#allocation2 + $0x258] sm:$0xff]
        %v226 = vld [vmem:[#allocation2 + $0x260] sm:$0xff]
        %v227 = vld [vmem:[#allocation2 + $0x280] sm:$0xff]
        %v228 = vld [vmem:[#allocation2 + $0x288] sm:$0xff]
        %v229 = vld [vmem:[#allocation2 + $0x2a8] sm:$0xff]
        %v230 = vld [vmem:[#allocation2 + $0x2b0] sm:$0xff]
        %v231 = vld [vmem:[#allocation2 + $0x2d0] sm:$0xff]
        %v232 = vld [vmem:[#allocation2 + $0x2d8] sm:$0xff]
        %v233 = vld [vmem:[#allocation2 + $0x2f8] sm:$0xff]
        %v234 = vld [vmem:[#allocation2 + $0x300] sm:$0xff]
        %v235 = vld [vmem:[#allocation2 + $0x320] sm:$0xff]
        %v236 = vld [vmem:[#allocation2 + $0x328] sm:$0xff]
        %v237 = vld [vmem:[#allocation2 + $0x348] sm:$0xff]
        %v238 = vld [vmem:[#allocation2 + $0x350] sm:$0xff]
        %v239 = vld [vmem:[#allocation2 + $0x370] sm:$0xff]
        %v240 = vld [vmem:[#allocation2 + $0x378] sm:$0xff]
        %v241 = vld [vmem:[#allocation2 + $0x398] sm:$0xff]
        %v242 = vld [vmem:[#allocation2 + $0x3a0] sm:$0xff]
        %v243 = vld [vmem:[#allocation2 + $0x3c0] sm:$0xff]
        %v244 = vld [vmem:[#allocation2 + $0x3c8] sm:$0xff]
        %v245 = vld [vmem:[#allocation2 + $0x3e8] sm:$0xff]
        %v246 = vld [vmem:[#allocation2 + $0x3f0] sm:$0xff]
        %v247 = vld [vmem:[#allocation2 + $0x410] sm:$0xff]
        %v248 = vld [vmem:[#allocation2 + $0x418] sm:$0xff]
        %v249 = vld [vmem:[#allocation2 + $0x438] sm:$0xff]
        %v250 = vld [vmem:[#allocation2 + $0x440] sm:$0xff]
        %v251 = vld [vmem:[#allocation2 + $0x460] sm:$0xff]
        %v252 = vld [vmem:[#allocation2 + $0x468] sm:$0xff]
        %v253 = vld [vmem:[#allocation2 + $0x488] sm:$0xff]
        %v254 = vld [vmem:[#allocation2 + $0x490] sm:$0xff]
        %v255 = vld [vmem:[#allocation2 + $0x4b0] sm:$0xff]
        %v256 = vld [vmem:[#allocation2 + $0x4b8] sm:$0xff]
        %v257 = vld [vmem:[#allocation2 + $0x4d8] sm:$0xff]
        %v258 = vld [vmem:[#allocation2 + $0x4e0] sm:$0xff]
        %v260 = vlaneseq
        %v261 = vshrl.u32 %v260, 7
        %v262 = vsub.s32 0, %v261
        %v263 = vrot.slane %v194, %v262
        %v264 = vlaneseq
        %v265 = vshrl.u32 %v264, 7
        %v266 = vsub.s32 1, %v265
        %v267 = vrot.slane %v194, %v266
        %270 = vmatprep.subr.mxu0 %v196
        %271 = vmatpush1.msra.mxu0 %v195
        %272 = vmatprep.subr.mxu0 %v198
        %273 = vmatpush1.msra.mxu0 %v197
        %274 = vmatprep.subr.mxu0 %v200
        %275 = vmatpush1.msra.mxu0 %v199
        %276 = vmatprep.subr.mxu0 %v202
        %277 = vmatpush1.msra.mxu0 %v201
        %278 = vmatprep.subr.mxu0 %v204
        %279 = vmatpush1.msra.mxu0 %v203
        %280 = vmatprep.subr.mxu0 %v206
        %281 = vmatpush1.msra.mxu0 %v205
        %282 = vmatprep.subr.mxu0 %v208
        %283 = vmatpush1.msra.mxu0 %v207
        %284 = vmatprep.subr.mxu0 %v210
        %285 = vmatpush1.msra.mxu0 %v209
        %286 = vmatprep.subr.mxu0 %v212
        %287 = vmatpush1.msra.mxu0 %v211
        %288 = vmatprep.subr.mxu0 %v214
        %289 = vmatpush1.msra.mxu0 %v213
        %290 = vmatprep.subr.mxu0 %v216
        %291 = vmatpush1.msra.mxu0 %v215
        %292 = vmatprep.subr.mxu0 %v218
        %293 = vmatpush1.msra.mxu0 %v217
        %294 = vmatprep.subr.mxu0 %v220
        %295 = vmatpush1.msra.mxu0 %v219
        %296 = vmatprep.subr.mxu0 %v222
        %297 = vmatpush1.msra.mxu0 %v221
        %298 = vmatprep.subr.mxu0 %v224
        %299 = vmatpush1.msra.mxu0 %v223
        %300 = vmatprep.subr.mxu0 %v226
        %301 = vmatpush1.msra.mxu0 %v225
        %302 = vmatprep.subr.mxu0 %v228
        %303 = vmatpush1.msra.mxu0 %v227
        %304 = vmatprep.subr.mxu0 %v230
        %305 = vmatpush1.msra.mxu0 %v229
        %306 = vmatprep.subr.mxu0 %v232
        %307 = vmatpush1.msra.mxu0 %v231
        %308 = vmatprep.subr.mxu0 %v234
        %309 = vmatpush1.msra.mxu0 %v233
        %310 = vmatprep.subr.mxu0 %v236
        %311 = vmatpush1.msra.mxu0 %v235
        %312 = vmatprep.subr.mxu0 %v238
        %313 = vmatpush1.msra.mxu0 %v237
        %314 = vmatprep.subr.mxu0 %v240
        %315 = vmatpush1.msra.mxu0 %v239
        %316 = vmatprep.subr.mxu0 %v242
        %317 = vmatpush1.msra.mxu0 %v241
        %318 = vmatprep.subr.mxu0 %v244
        %319 = vmatpush1.msra.mxu0 %v243
        %320 = vmatprep.subr.mxu0 %v246
        %321 = vmatpush1.msra.mxu0 %v245
        %322 = vmatprep.subr.mxu0 %v248
        %323 = vmatpush1.msra.mxu0 %v247
        %324 = vmatprep.subr.mxu0 %v250
        %325 = vmatpush1.msra.mxu0 %v249
        %326 = vmatprep.subr.mxu0 %v252
        %327 = vmatpush1.msra.mxu0 %v251
        %328 = vmatprep.subr.mxu0 %v254
        %329 = vmatpush1.msra.mxu0 %v253
        %330 = vmatprep.subr.mxu0 %v256
        %331 = vmatpush1.msra.mxu0 %v255
        %332 = vmatprep.subr.mxu0 %v258
        %333 = vmatpush1.msra.mxu0 %v257
        %334 = vmatprep.mubr.f32.mxu0 %v267
        %335 = vmatmul.mubr.f32.gmra.mrb[0].mxu0 %v263
        %v336 = vpop.f32.mrb[0].mxu0
        %v337 = vadd.f32 0.0, %v336
        %v338 = vpop.f32.mrb[0].mxu0
        %v339 = vadd.f32 0.0, %v338
        %340 = vdwg.mxu0
        %v341 = vld [vmem:[#allocation2 + $0x500] sm:$0xff]
        %v342 = vld [vmem:[#allocation2 + $0x508] sm:$0xff]
        %v343 = vld [vmem:[#allocation2 + $0x510] sm:$0xff]
        %v344 = vld [vmem:[#allocation2 + $0x528] sm:$0xff]
        %v345 = vld [vmem:[#allocation2 + $0x530] sm:$0xff]
        %v346 = vld [vmem:[#allocation2 + $0x538] sm:$0xff]
        %v347 = vld [vmem:[#allocation2 + $0x550] sm:$0xff]
        %v348 = vld [vmem:[#allocation2 + $0x558] sm:$0xff]
        %v349 = vld [vmem:[#allocation2 + $0x560] sm:$0xff]
        %v350 = vld [vmem:[#allocation2 + $0x578] sm:$0xff]
        %v351 = vld [vmem:[#allocation2 + $0x580] sm:$0xff]
        %v352 = vld [vmem:[#allocation2 + $0x588] sm:$0xff]
        %v353 = vld [vmem:[#allocation2 + $0x5a0] sm:$0xff]
        %v354 = vld [vmem:[#allocation2 + $0x5a8] sm:$0xff]
        %v355 = vld [vmem:[#allocation2 + $0x5b0] sm:$0xff]
        %v356 = vld [vmem:[#allocation2 + $0x5c8] sm:$0xff]
        %v357 = vld [vmem:[#allocation2 + $0x5d0] sm:$0xff]
        %v358 = vld [vmem:[#allocation2 + $0x5d8] sm:$0xff]
        %v359 = vld [vmem:[#allocation2 + $0x5f0] sm:$0xff]
        %v360 = vld [vmem:[#allocation2 + $0x5f8] sm:$0xff]
        %v361 = vld [vmem:[#allocation2 + $0x600] sm:$0xff]
        %v362 = vld [vmem:[#allocation2 + $0x618] sm:$0xff]
        %v363 = vld [vmem:[#allocation2 + $0x620] sm:$0xff]
        %v364 = vld [vmem:[#allocation2 + $0x628] sm:$0xff]
        %v365 = vld [vmem:[#allocation2 + $0x640] sm:$0xff]
        %v366 = vld [vmem:[#allocation2 + $0x648] sm:$0xff]
        %v367 = vld [vmem:[#allocation2 + $0x650] sm:$0xff]
        %v368 = vld [vmem:[#allocation2 + $0x668] sm:$0xff]
        %v369 = vld [vmem:[#allocation2 + $0x670] sm:$0xff]
        %v370 = vld [vmem:[#allocation2 + $0x678] sm:$0xff]
        %v371 = vld [vmem:[#allocation2 + $0x690] sm:$0xff]
        %v372 = vld [vmem:[#allocation2 + $0x698] sm:$0xff]
        %v373 = vld [vmem:[#allocation2 + $0x6a0] sm:$0xff]
        %v374 = vld [vmem:[#allocation2 + $0x6b8] sm:$0xff]
        %v375 = vld [vmem:[#allocation2 + $0x6c0] sm:$0xff]
        %v376 = vld [vmem:[#allocation2 + $0x6c8] sm:$0xff]
        %v377 = vld [vmem:[#allocation2 + $0x6e0] sm:$0xff]
        %v378 = vld [vmem:[#allocation2 + $0x6e8] sm:$0xff]
        %v379 = vld [vmem:[#allocation2 + $0x6f0] sm:$0xff]
        %v380 = vld [vmem:[#allocation2 + $0x708] sm:$0xff]
        %v381 = vld [vmem:[#allocation2 + $0x710] sm:$0xff]
        %v382 = vld [vmem:[#allocation2 + $0x718] sm:$0xff]
        %v383 = vld [vmem:[#allocation2 + $0x730] sm:$0xff]
        %v384 = vld [vmem:[#allocation2 + $0x738] sm:$0xff]
        %v385 = vld [vmem:[#allocation2 + $0x740] sm:$0xff]
        %v386 = vld [vmem:[#allocation2 + $0x758] sm:$0xff]
        %v387 = vld [vmem:[#allocation2 + $0x760] sm:$0xff]
        %v388 = vld [vmem:[#allocation2 + $0x768] sm:$0xff]
        %v389 = vld [vmem:[#allocation2 + $0x780] sm:$0xff]
        %v390 = vld [vmem:[#allocation2 + $0x788] sm:$0xff]
        %v391 = vld [vmem:[#allocation2 + $0x790] sm:$0xff]
        %v392 = vld [vmem:[#allocation2 + $0x7a8] sm:$0xff]
        %v393 = vld [vmem:[#allocation2 + $0x7b0] sm:$0xff]
        %v394 = vld [vmem:[#allocation2 + $0x7b8] sm:$0xff]
        %v395 = vld [vmem:[#allocation2 + $0x7d0] sm:$0xff]
        %v396 = vld [vmem:[#allocation2 + $0x7d8] sm:$0xff]
        %v397 = vld [vmem:[#allocation2 + $0x7e0] sm:$0xff]
        %v398 = vld [vmem:[#allocation2 + $0x7f8] sm:$0xff]
        %v399 = vld [vmem:[#allocation2 + $0x800] sm:$0xff]
        %v400 = vld [vmem:[#allocation2 + $0x808] sm:$0xff]
        %v401 = vld [vmem:[#allocation2 + $0x820] sm:$0xff]
        %v402 = vld [vmem:[#allocation2 + $0x828] sm:$0xff]
        %v403 = vld [vmem:[#allocation2 + $0x830] sm:$0xff]
        %v404 = vld [vmem:[#allocation2 + $0x848] sm:$0xff]
        %v405 = vld [vmem:[#allocation2 + $0x850] sm:$0xff]
        %v406 = vld [vmem:[#allocation2 + $0x858] sm:$0xff]
        %v407 = vld [vmem:[#allocation2 + $0x870] sm:$0xff]
        %v408 = vld [vmem:[#allocation2 + $0x878] sm:$0xff]
        %v409 = vld [vmem:[#allocation2 + $0x880] sm:$0xff]
        %v410 = vld [vmem:[#allocation2 + $0x898] sm:$0xff]
        %v411 = vld [vmem:[#allocation2 + $0x8a0] sm:$0xff]
        %v412 = vld [vmem:[#allocation2 + $0x8a8] sm:$0xff]
        %v413 = vld [vmem:[#allocation2 + $0x8c0] sm:$0xff]
        %v414 = vld [vmem:[#allocation2 + $0x8c8] sm:$0xff]
        %v415 = vld [vmem:[#allocation2 + $0x8d0] sm:$0xff]
        %v416 = vld [vmem:[#allocation2 + $0x8e8] sm:$0xff]
        %v417 = vld [vmem:[#allocation2 + $0x8f0] sm:$0xff]
        %v418 = vld [vmem:[#allocation2 + $0x8f8] sm:$0xff]
        %v419 = vld [vmem:[#allocation2 + $0x910] sm:$0xff]
        %v420 = vld [vmem:[#allocation2 + $0x918] sm:$0xff]
        %v421 = vld [vmem:[#allocation2 + $0x920] sm:$0xff]
        %v422 = vld [vmem:[#allocation2 + $0x938] sm:$0xff]
        %v423 = vld [vmem:[#allocation2 + $0x940] sm:$0xff]
        %v424 = vld [vmem:[#allocation2 + $0x948] sm:$0xff]
        %v425 = vld [vmem:[#allocation2 + $0x960] sm:$0xff]
        %v426 = vld [vmem:[#allocation2 + $0x968] sm:$0xff]
        %v427 = vld [vmem:[#allocation2 + $0x970] sm:$0xff]
        %v428 = vld [vmem:[#allocation2 + $0x988] sm:$0xff]
        %v429 = vld [vmem:[#allocation2 + $0x990] sm:$0xff]
        %v430 = vld [vmem:[#allocation2 + $0x998] sm:$0xff]
        %v431 = vld [vmem:[#allocation2 + $0x9b0] sm:$0xff]
        %v432 = vld [vmem:[#allocation2 + $0x9b8] sm:$0xff]
        %v433 = vld [vmem:[#allocation2 + $0x9c0] sm:$0xff]
        %v434 = vld [vmem:[#allocation2 + $0x9d8] sm:$0xff]
        %v435 = vld [vmem:[#allocation2 + $0x9e0] sm:$0xff]
        %v436 = vld [vmem:[#allocation2 + $0x9e8] sm:$0xff]
        %v437 = vld [vmem:[#allocation2 + $0xa00] sm:$0xff]
        %v438 = vld [vmem:[#allocation2 + $0xa08] sm:$0xff]
        %v439 = vld [vmem:[#allocation2 + $0xa10] sm:$0xff]
        %v440 = vld [vmem:[#allocation2 + $0xa28] sm:$0xff]
        %v441 = vld [vmem:[#allocation2 + $0xa30] sm:$0xff]
        %v442 = vld [vmem:[#allocation2 + $0xa38] sm:$0xff]
        %v443 = vld [vmem:[#allocation2 + $0xa50] sm:$0xff]
        %v444 = vld [vmem:[#allocation2 + $0xa58] sm:$0xff]
        %v445 = vld [vmem:[#allocation2 + $0xa60] sm:$0xff]
        %v446 = vld [vmem:[#allocation2 + $0xa78] sm:$0xff]
        %v447 = vld [vmem:[#allocation2 + $0xa80] sm:$0xff]
        %v448 = vld [vmem:[#allocation2 + $0xa88] sm:$0xff]
        %v449 = vld [vmem:[#allocation2 + $0xaa0] sm:$0xff]
        %v450 = vld [vmem:[#allocation2 + $0xaa8] sm:$0xff]
        %v451 = vld [vmem:[#allocation2 + $0xab0] sm:$0xff]
        %v452 = vld [vmem:[#allocation2 + $0xac8] sm:$0xff]
        %v453 = vld [vmem:[#allocation2 + $0xad0] sm:$0xff]
        %v454 = vld [vmem:[#allocation2 + $0xad8] sm:$0xff]
        %v455 = vld [vmem:[#allocation2 + $0xaf0] sm:$0xff]
        %v456 = vld [vmem:[#allocation2 + $0xaf8] sm:$0xff]
        %v457 = vld [vmem:[#allocation2 + $0xb00] sm:$0xff]
        %v458 = vld [vmem:[#allocation2 + $0xb18] sm:$0xff]
        %v459 = vld [vmem:[#allocation2 + $0xb20] sm:$0xff]
        %v460 = vld [vmem:[#allocation2 + $0xb28] sm:$0xff]
        %v461 = vld [vmem:[#allocation2 + $0xb40] sm:$0xff]
        %v462 = vld [vmem:[#allocation2 + $0xb48] sm:$0xff]
        %v463 = vld [vmem:[#allocation2 + $0xb50] sm:$0xff]
        %v464 = vld [vmem:[#allocation2 + $0xb68] sm:$0xff]
        %v465 = vld [vmem:[#allocation2 + $0xb70] sm:$0xff]
        %v466 = vld [vmem:[#allocation2 + $0xb78] sm:$0xff]
        %v467 = vld [vmem:[#allocation2 + $0xb90] sm:$0xff]
        %v468 = vld [vmem:[#allocation2 + $0xb98] sm:$0xff]
        %v469 = vld [vmem:[#allocation2 + $0xba0] sm:$0xff]
        %v470 = vld [vmem:[#allocation2 + $0xbb8] sm:$0xff]
        %v471 = vld [vmem:[#allocation2 + $0xbc0] sm:$0xff]
        %v472 = vld [vmem:[#allocation2 + $0xbc8] sm:$0xff]
        %v473 = vld [vmem:[#allocation2 + $0xbe0] sm:$0xff]
        %v474 = vld [vmem:[#allocation2 + $0xbe8] sm:$0xff]
        %v475 = vld [vmem:[#allocation2 + $0xbf0] sm:$0xff]
        %v476 = vld [vmem:[#allocation2 + $0xc08] sm:$0xff]
        %v477 = vld [vmem:[#allocation2 + $0xc10] sm:$0xff]
        %v478 = vld [vmem:[#allocation2 + $0xc18] sm:$0xff]
        %v479 = vld [vmem:[#allocation2 + $0xc30] sm:$0xff]
        %v480 = vld [vmem:[#allocation2 + $0xc38] sm:$0xff]
        %v481 = vld [vmem:[#allocation2 + $0xc40] sm:$0xff]
        %v482 = vld [vmem:[#allocation2 + $0xc58] sm:$0xff]
        %v483 = vld [vmem:[#allocation2 + $0xc60] sm:$0xff]
        %v484 = vld [vmem:[#allocation2 + $0xc68] sm:$0xff]
        %v485 = vld [vmem:[#allocation2 + $0xf00] sm:$0xff]
        %v486 = vld [vmem:[#allocation2 + $0xf08] sm:$0xff]
        %v487 = vld [vmem:[#allocation2 + $0xf10] sm:$0xff]
        %v488 = vld [vmem:[#allocation2 + $0xf18] sm:$0xff]
        %v489 = vld [vmem:[#allocation2 + $0xf20] sm:$0xff]
        %v490 = vld [vmem:[#allocation2 + $0xf28] sm:$0xff]
        %v491 = vld [vmem:[#allocation2 + $0xf30] sm:$0xff]
        %v492 = vld [vmem:[#allocation2 + $0xf38] sm:$0xff]
        %v493 = vld [vmem:[#allocation2 + $0xf40] sm:$0xff]
        %v494 = vld [vmem:[#allocation2 + $0xf48] sm:$0xff]
        %v495 = vld [vmem:[#allocation2 + $0xf50] sm:$0xff]
        %v496 = vld [vmem:[#allocation2 + $0xf58] sm:$0xff]
        %v497 = vld [vmem:[#allocation2 + $0xf60] sm:$0xff]
        %v498 = vld [vmem:[#allocation2 + $0xf68] sm:$0xff]
        %v499 = vld [vmem:[#allocation2 + $0xf70] sm:$0xff]
        %v500 = vld [vmem:[#allocation2 + $0xf78] sm:$0xff]
        %v501 = vld [vmem:[#allocation2 + $0xf80] sm:$0xff]
        %v502 = vld [vmem:[#allocation2 + $0xf88] sm:$0xff]
        %v503 = vld [vmem:[#allocation2 + $0xf90] sm:$0xff]
        %v504 = vld [vmem:[#allocation2 + $0xf98] sm:$0xff]
        %v505 = vld [vmem:[#allocation2 + $0xfa0] sm:$0xff]
        %v506 = vld [vmem:[#allocation2 + $0xfa8] sm:$0xff]
        %v507 = vld [vmem:[#allocation2 + $0xfb0] sm:$0xff]
        %v508 = vld [vmem:[#allocation2 + $0xfb8] sm:$0xff]
        %v509 = vld [vmem:[#allocation2 + $0xfc0] sm:$0xff]
        %v510 = vld [vmem:[#allocation2 + $0xfc8] sm:$0xff]
        %v511 = vld [vmem:[#allocation2 + $0xfd0] sm:$0xff]
        %v512 = vld [vmem:[#allocation2 + $0xfd8] sm:$0xff]
        %v513 = vld [vmem:[#allocation2 + $0xfe0] sm:$0xff]
        %v514 = vld [vmem:[#allocation2 + $0xfe8] sm:$0xff]
        %v515 = vld [vmem:[#allocation2 + $0xff0] sm:$0xff]
        %v516 = vld [vmem:[#allocation2 + $0xff8] sm:$0xff]
        %v517 = vld [vmem:[#allocation2 + $0x1000] sm:$0xff]
        %v518 = vld [vmem:[#allocation2 + $0x1008] sm:$0xff]
        %v519 = vld [vmem:[#allocation2 + $0x1010] sm:$0xff]
        %v520 = vld [vmem:[#allocation2 + $0x1018] sm:$0xff]
        %v521 = vld [vmem:[#allocation2 + $0x1020] sm:$0xff]
        %v522 = vld [vmem:[#allocation2 + $0x1028] sm:$0xff]
        %v523 = vld [vmem:[#allocation2 + $0x1030] sm:$0xff]
        %v524 = vld [vmem:[#allocation2 + $0x1038] sm:$0xff]
        %v525 = vld [vmem:[#allocation2 + $0x1040] sm:$0xff]
        %v526 = vld [vmem:[#allocation2 + $0x1048] sm:$0xff]
        %v527 = vld [vmem:[#allocation2 + $0x1050] sm:$0xff]
        %v528 = vld [vmem:[#allocation2 + $0x1058] sm:$0xff]
        %v529 = vld [vmem:[#allocation2 + $0x1060] sm:$0xff]
        %v530 = vld [vmem:[#allocation2 + $0x1068] sm:$0xff]
        %v531 = vld [vmem:[#allocation2 + $0x1070] sm:$0xff]
        %v532 = vld [vmem:[#allocation2 + $0x1078] sm:$0xff]
        %v533 = vld [vmem:[#allocation2 + $0x1080] sm:$0xff]
        %v534 = vld [vmem:[#allocation2 + $0x1088] sm:$0xff]
        %v535 = vld [vmem:[#allocation2 + $0x1090] sm:$0xff]
        %v536 = vld [vmem:[#allocation2 + $0x1098] sm:$0xff]
        %v537 = vld [vmem:[#allocation2 + $0x10a0] sm:$0xff]
        %v538 = vld [vmem:[#allocation2 + $0x10a8] sm:$0xff]
        %v539 = vld [vmem:[#allocation2 + $0x10b0] sm:$0xff]
        %v540 = vld [vmem:[#allocation2 + $0x10b8] sm:$0xff]
        %v541 = vld [vmem:[#allocation2 + $0x10c0] sm:$0xff]
        %v542 = vld [vmem:[#allocation2 + $0x10c8] sm:$0xff]
        %v543 = vld [vmem:[#allocation2 + $0x10d0] sm:$0xff]
        %v544 = vld [vmem:[#allocation2 + $0x10d8] sm:$0xff]
        %v545 = vld [vmem:[#allocation2 + $0x10e0] sm:$0xff]
        %v546 = vld [vmem:[#allocation2 + $0x10e8] sm:$0xff]
        %v547 = vld [vmem:[#allocation2 + $0x10f0] sm:$0xff]
        %v548 = vld [vmem:[#allocation2 + $0x10f8] sm:$0xff]
        %v549 = vld [vmem:[#allocation2 + $0x1100] sm:$0xff]
        %v550 = vld [vmem:[#allocation2 + $0x1108] sm:$0xff]
        %v551 = vld [vmem:[#allocation2 + $0x1110] sm:$0xff]
        %v552 = vld [vmem:[#allocation2 + $0x1118] sm:$0xff]
        %v553 = vld [vmem:[#allocation2 + $0x1120] sm:$0xff]
        %v554 = vld [vmem:[#allocation2 + $0x1128] sm:$0xff]
        %v555 = vld [vmem:[#allocation2 + $0x1130] sm:$0xff]
        %v556 = vld [vmem:[#allocation2 + $0x1138] sm:$0xff]
        %v557 = vld [vmem:[#allocation2 + $0x1140] sm:$0xff]
        %v558 = vld [vmem:[#allocation2 + $0x1148] sm:$0xff]
        %v559 = vld [vmem:[#allocation2 + $0x1150] sm:$0xff]
        %v560 = vld [vmem:[#allocation2 + $0x1158] sm:$0xff]
        %v561 = vld [vmem:[#allocation2 + $0x1160] sm:$0xff]
        %v562 = vld [vmem:[#allocation2 + $0x1168] sm:$0xff]
        %v563 = vld [vmem:[#allocation2 + $0x1170] sm:$0xff]
        %v564 = vld [vmem:[#allocation2 + $0x1178] sm:$0xff]
        %v565 = vld [vmem:[#allocation2 + $0x1180] sm:$0xff]
        %v566 = vld [vmem:[#allocation2 + $0x1188] sm:$0xff]
        %v567 = vld [vmem:[#allocation2 + $0x1190] sm:$0xff]
        %v568 = vld [vmem:[#allocation2 + $0x1198] sm:$0xff]
        %v569 = vld [vmem:[#allocation2 + $0x11a0] sm:$0xff]
        %v570 = vld [vmem:[#allocation2 + $0x11a8] sm:$0xff]
        %v571 = vld [vmem:[#allocation2 + $0x11b0] sm:$0xff]
        %v572 = vld [vmem:[#allocation2 + $0x11b8] sm:$0xff]
        %v573 = vld [vmem:[#allocation2 + $0x11c0] sm:$0xff]
        %v574 = vld [vmem:[#allocation2 + $0x11c8] sm:$0xff]
        %v575 = vld [vmem:[#allocation2 + $0x11d0] sm:$0xff]
        %v576 = vld [vmem:[#allocation2 + $0x11d8] sm:$0xff]
        %v577 = vld [vmem:[#allocation2 + $0x11e0] sm:$0xff]
        %v578 = vld [vmem:[#allocation2 + $0x11e8] sm:$0xff]
        %v579 = vld [vmem:[#allocation2 + $0x11f0] sm:$0xff]
        %v580 = vld [vmem:[#allocation2 + $0x11f8] sm:$0xff]
        %v581 = vld [vmem:[#allocation2 + $0x1200] sm:$0xff]
        %v582 = vld [vmem:[#allocation2 + $0x1208] sm:$0xff]
        %v583 = vld [vmem:[#allocation2 + $0x1210] sm:$0xff]
        %v584 = vld [vmem:[#allocation2 + $0x1218] sm:$0xff]
        %v585 = vld [vmem:[#allocation2 + $0x1220] sm:$0xff]
        %v586 = vld [vmem:[#allocation2 + $0x1228] sm:$0xff]
        %v587 = vld [vmem:[#allocation2 + $0x1230] sm:$0xff]
        %v588 = vld [vmem:[#allocation2 + $0x1238] sm:$0xff]
        %v589 = vld [vmem:[#allocation2 + $0x1240] sm:$0xff]
        %v590 = vld [vmem:[#allocation2 + $0x1248] sm:$0xff]
        %v591 = vld [vmem:[#allocation2 + $0x1250] sm:$0xff]
        %v592 = vld [vmem:[#allocation2 + $0x1258] sm:$0xff]
        %v593 = vld [vmem:[#allocation2 + $0x1260] sm:$0xff]
        %v594 = vld [vmem:[#allocation2 + $0x1268] sm:$0xff]
        %v595 = vld [vmem:[#allocation2 + $0x1270] sm:$0xff]
        %v596 = vld [vmem:[#allocation2 + $0x1278] sm:$0xff]
        %v597 = vld [vmem:[#allocation2 + $0x1280] sm:$0xff]
        %v598 = vld [vmem:[#allocation2 + $0x1288] sm:$0xff]
        %v599 = vld [vmem:[#allocation2 + $0x1290] sm:$0xff]
        %v600 = vld [vmem:[#allocation2 + $0x1298] sm:$0xff]
        %v601 = vld [vmem:[#allocation2 + $0x12a0] sm:$0xff]
        %v602 = vld [vmem:[#allocation2 + $0x12a8] sm:$0xff]
        %v603 = vld [vmem:[#allocation2 + $0x12b0] sm:$0xff]
        %v604 = vld [vmem:[#allocation2 + $0x12b8] sm:$0xff]
        %v605 = vld [vmem:[#allocation2 + $0x12c0] sm:$0xff]
        %v606 = vld [vmem:[#allocation2 + $0x12c8] sm:$0xff]
        %v607 = vld [vmem:[#allocation2 + $0x12d0] sm:$0xff]
        %v608 = vld [vmem:[#allocation2 + $0x12d8] sm:$0xff]
        %v609 = vld [vmem:[#allocation2 + $0x12e0] sm:$0xff]
        %v610 = vld [vmem:[#allocation2 + $0x12e8] sm:$0xff]
        %v611 = vld [vmem:[#allocation2 + $0x12f0] sm:$0xff]
        %v612 = vld [vmem:[#allocation2 + $0x12f8] sm:$0xff]
        %v613 = vld [vmem:[#allocation2 + $0x1300] sm:$0xff]
        %v614 = vld [vmem:[#allocation2 + $0x1308] sm:$0xff]
        %v615 = vld [vmem:[#allocation2 + $0x1310] sm:$0xff]
        %v616 = vld [vmem:[#allocation2 + $0x1318] sm:$0xff]
        %v617 = vld [vmem:[#allocation2 + $0x1320] sm:$0xff]
        %v618 = vld [vmem:[#allocation2 + $0x1328] sm:$0xff]
        %v619 = vld [vmem:[#allocation2 + $0x1330] sm:$0xff]
        %v620 = vld [vmem:[#allocation2 + $0x1338] sm:$0xff]
        %v621 = vld [vmem:[#allocation2 + $0x1340] sm:$0xff]
        %v622 = vld [vmem:[#allocation2 + $0x1348] sm:$0xff]
        %v623 = vld [vmem:[#allocation2 + $0x1350] sm:$0xff]
        %v624 = vld [vmem:[#allocation2 + $0x1358] sm:$0xff]
        %v625 = vld [vmem:[#allocation2 + $0x1360] sm:$0xff]
        %v626 = vld [vmem:[#allocation2 + $0x1368] sm:$0xff]
        %v627 = vld [vmem:[#allocation2 + $0x1370] sm:$0xff]
        %v628 = vld [vmem:[#allocation2 + $0x1378] sm:$0xff]
        %v629 = vld [vmem:[#allocation2 + $0x1380] sm:$0xff]
        %v630 = vld [vmem:[#allocation2 + $0x1388] sm:$0xff]
        %v631 = vld [vmem:[#allocation2 + $0x1390] sm:$0xff]
        %v632 = vld [vmem:[#allocation2 + $0x1398] sm:$0xff]
        %v633 = vld [vmem:[#allocation2 + $0x13a0] sm:$0xff]
        %v634 = vld [vmem:[#allocation2 + $0x13a8] sm:$0xff]
        %v635 = vld [vmem:[#allocation2 + $0x13b0] sm:$0xff]
        %v636 = vld [vmem:[#allocation2 + $0x13b8] sm:$0xff]
        %v637 = vld [vmem:[#allocation2 + $0x13c0] sm:$0xff]
        %v638 = vld [vmem:[#allocation2 + $0x13c8] sm:$0xff]
        %v639 = vld [vmem:[#allocation2 + $0x13d0] sm:$0xff]
        %v640 = vld [vmem:[#allocation2 + $0x13d8] sm:$0xff]
        %v641 = vld [vmem:[#allocation2 + $0x13e0] sm:$0xff]
        %v642 = vld [vmem:[#allocation2 + $0x13e8] sm:$0xff]
        %v643 = vld [vmem:[#allocation2 + $0x13f0] sm:$0xff]
        %v644 = vld [vmem:[#allocation2 + $0x13f8] sm:$0xff]
        %v645 = vld [vmem:[#allocation2 + $0x1680] sm:$0xff]
        %v646 = vld [vmem:[#allocation2 + $0x1688] sm:$0xff]
        %v647 = vld [vmem:[#allocation2 + $0x1690] sm:$0xff]
        %v648 = vld [vmem:[#allocation2 + $0x16a8] sm:$0xff]
        %v649 = vld [vmem:[#allocation2 + $0x16b0] sm:$0xff]
        %v650 = vld [vmem:[#allocation2 + $0x16b8] sm:$0xff]
        %v651 = vld [vmem:[#allocation2 + $0x16d0] sm:$0xff]
        %v652 = vld [vmem:[#allocation2 + $0x16d8] sm:$0xff]
        %v653 = vld [vmem:[#allocation2 + $0x16e0] sm:$0xff]
        %v654 = vld [vmem:[#allocation2 + $0x16f8] sm:$0xff]
        %v655 = vld [vmem:[#allocation2 + $0x1700] sm:$0xff]
        %v656 = vld [vmem:[#allocation2 + $0x1708] sm:$0xff]
        %v657 = vld [vmem:[#allocation2 + $0x1720] sm:$0xff]
        %v658 = vld [vmem:[#allocation2 + $0x1728] sm:$0xff]
        %v659 = vld [vmem:[#allocation2 + $0x1730] sm:$0xff]
        %v660 = vld [vmem:[#allocation2 + $0x1748] sm:$0xff]
        %v661 = vld [vmem:[#allocation2 + $0x1750] sm:$0xff]
        %v662 = vld [vmem:[#allocation2 + $0x1758] sm:$0xff]
        %v663 = vld [vmem:[#allocation2 + $0x1770] sm:$0xff]
        %v664 = vld [vmem:[#allocation2 + $0x1778] sm:$0xff]
        %v665 = vld [vmem:[#allocation2 + $0x1780] sm:$0xff]
        %v666 = vld [vmem:[#allocation2 + $0x1798] sm:$0xff]
        %v667 = vld [vmem:[#allocation2 + $0x17a0] sm:$0xff]
        %v668 = vld [vmem:[#allocation2 + $0x17a8] sm:$0xff]
        %v669 = vld [vmem:[#allocation2 + $0x17c0] sm:$0xff]
        %v670 = vld [vmem:[#allocation2 + $0x17c8] sm:$0xff]
        %v671 = vld [vmem:[#allocation2 + $0x17d0] sm:$0xff]
        %v672 = vld [vmem:[#allocation2 + $0x17e8] sm:$0xff]
        %v673 = vld [vmem:[#allocation2 + $0x17f0] sm:$0xff]
        %v674 = vld [vmem:[#allocation2 + $0x17f8] sm:$0xff]
        %v675 = vld [vmem:[#allocation2 + $0x1810] sm:$0xff]
        %v676 = vld [vmem:[#allocation2 + $0x1818] sm:$0xff]
        %v677 = vld [vmem:[#allocation2 + $0x1820] sm:$0xff]
        %v678 = vld [vmem:[#allocation2 + $0x1838] sm:$0xff]
        %v679 = vld [vmem:[#allocation2 + $0x1840] sm:$0xff]
        %v680 = vld [vmem:[#allocation2 + $0x1848] sm:$0xff]
        %v681 = vld [vmem:[#allocation2 + $0x1860] sm:$0xff]
        %v682 = vld [vmem:[#allocation2 + $0x1868] sm:$0xff]
        %v683 = vld [vmem:[#allocation2 + $0x1870] sm:$0xff]
        %v684 = vld [vmem:[#allocation2 + $0x1888] sm:$0xff]
        %v685 = vld [vmem:[#allocation2 + $0x1890] sm:$0xff]
        %v686 = vld [vmem:[#allocation2 + $0x1898] sm:$0xff]
        %v687 = vld [vmem:[#allocation2 + $0x18b0] sm:$0xff]
        %v688 = vld [vmem:[#allocation2 + $0x18b8] sm:$0xff]
        %v689 = vld [vmem:[#allocation2 + $0x18c0] sm:$0xff]
        %v690 = vld [vmem:[#allocation2 + $0x18d8] sm:$0xff]
        %v691 = vld [vmem:[#allocation2 + $0x18e0] sm:$0xff]
        %v692 = vld [vmem:[#allocation2 + $0x18e8] sm:$0xff]
        %v693 = vmax.f32 %v337, 0.0
        %v694 = vmax.f32 %v339, 0.0
        %v695 = vld [vmem:[#allocation4] sm:$0xff]
        %v696 = vld [vmem:[#allocation4 + $0x8] sm:$0xff]
        %v697 = vld [vmem:[#allocation4 + $0x10] sm:$0xff]
        %v698 = vld [vmem:[#allocation4 + $0x18] sm:$0xff]
        %v699 = vld [vmem:[#allocation4 + $0x20] sm:$0xff]
        %v700 = vld [vmem:[#allocation4 + $0x28] sm:$0xff]
        %v701 = vld [vmem:[#allocation4 + $0x30] sm:$0xff]
        %v702 = vld [vmem:[#allocation4 + $0x38] sm:$0xff]
        %v703 = vld [vmem:[#allocation4 + $0x40] sm:$0xff]
        %v704 = vld [vmem:[#allocation4 + $0x48] sm:$0xff]
        %v705 = vld [vmem:[#allocation4 + $0x50] sm:$0xff]
        %v706 = vld [vmem:[#allocation4 + $0x58] sm:$0xff]
        %v707 = vld [vmem:[#allocation4 + $0x60] sm:$0xff]
        %v708 = vld [vmem:[#allocation4 + $0x68] sm:$0xff]
        %v709 = vld [vmem:[#allocation4 + $0x70] sm:$0xff]
        %v710 = vld [vmem:[#allocation4 + $0x78] sm:$0xff]
        %v711 = vld [vmem:[#allocation4 + $0x80] sm:$0xff]
        %v712 = vld [vmem:[#allocation4 + $0x88] sm:$0xff]
        %v713 = vld [vmem:[#allocation4 + $0x90] sm:$0xff]
        %v714 = vld [vmem:[#allocation4 + $0x98] sm:$0xff]
        %v715 = vld [vmem:[#allocation4 + $0xa0] sm:$0xff]
        %v716 = vld [vmem:[#allocation4 + $0xa8] sm:$0xff]
        %v717 = vld [vmem:[#allocation4 + $0xb0] sm:$0xff]
        %v718 = vld [vmem:[#allocation4 + $0xb8] sm:$0xff]
        %v719 = vld [vmem:[#allocation4 + $0xc0] sm:$0xff]
        %v720 = vld [vmem:[#allocation4 + $0xc8] sm:$0xff]
        %v721 = vld [vmem:[#allocation4 + $0xd0] sm:$0xff]
        %v722 = vld [vmem:[#allocation4 + $0xd8] sm:$0xff]
        %v723 = vld [vmem:[#allocation4 + $0xe0] sm:$0xff]
        %v724 = vld [vmem:[#allocation4 + $0xe8] sm:$0xff]
        %v725 = vld [vmem:[#allocation4 + $0xf0] sm:$0xff]
        %v726 = vld [vmem:[#allocation4 + $0xf8] sm:$0xff]
        %v727 = vld [vmem:[#allocation4 + $0x100] sm:$0x1]
        %728 = vmatprep.subr.mxu0 0.0
        %729 = vmatpush1.msra.mxu0 %v695
        %730 = vmatprep.subr.mxu0 0.0
        %731 = vmatpush1.msra.mxu0 %v696
        %732 = vmatprep.subr.mxu0 0.0
        %733 = vmatpush1.msra.mxu0 %v697
        %734 = vmatprep.subr.mxu0 0.0
        %735 = vmatpush1.msra.mxu0 %v698
        %736 = vmatprep.subr.mxu0 0.0
        %737 = vmatpush1.msra.mxu0 %v699
        %738 = vmatprep.subr.mxu0 0.0
        %739 = vmatpush1.msra.mxu0 %v700
        %740 = vmatprep.subr.mxu0 0.0
        %741 = vmatpush1.msra.mxu0 %v701
        %742 = vmatprep.subr.mxu0 0.0
        %743 = vmatpush1.msra.mxu0 %v702
        %744 = vmatprep.subr.mxu0 0.0
        %745 = vmatpush1.msra.mxu0 %v703
        %746 = vmatprep.subr.mxu0 0.0
        %747 = vmatpush1.msra.mxu0 %v704
        %748 = vmatprep.subr.mxu0 0.0
        %749 = vmatpush1.msra.mxu0 %v705
        %750 = vmatprep.subr.mxu0 0.0
        %751 = vmatpush1.msra.mxu0 %v706
        %752 = vmatprep.subr.mxu0 0.0
        %753 = vmatpush1.msra.mxu0 %v707
        %754 = vmatprep.subr.mxu0 0.0
        %755 = vmatpush1.msra.mxu0 %v708
        %756 = vmatprep.subr.mxu0 0.0
        %757 = vmatpush1.msra.mxu0 %v709
        %758 = vmatprep.subr.mxu0 0.0
        %759 = vmatpush1.msra.mxu0 %v710
        %760 = vmatprep.subr.mxu0 0.0
        %761 = vmatpush1.msra.mxu0 %v711
        %762 = vmatprep.subr.mxu0 0.0
        %763 = vmatpush1.msra.mxu0 %v712
        %764 = vmatprep.subr.mxu0 0.0
        %765 = vmatpush1.msra.mxu0 %v713
        %766 = vmatprep.subr.mxu0 0.0
        %767 = vmatpush1.msra.mxu0 %v714
        %768 = vmatprep.subr.mxu0 0.0
        %769 = vmatpush1.msra.mxu0 %v715
        %770 = vmatprep.subr.mxu0 0.0
        %771 = vmatpush1.msra.mxu0 %v716
        %772 = vmatprep.subr.mxu0 0.0
        %773 = vmatpush1.msra.mxu0 %v717
        %774 = vmatprep.subr.mxu0 0.0
        %775 = vmatpush1.msra.mxu0 %v718
        %776 = vmatprep.subr.mxu0 0.0
        %777 = vmatpush1.msra.mxu0 %v719
        %778 = vmatprep.subr.mxu0 0.0
        %779 = vmatpush1.msra.mxu0 %v720
        %780 = vmatprep.subr.mxu0 0.0
        %781 = vmatpush1.msra.mxu0 %v721
        %782 = vmatprep.subr.mxu0 0.0
        %783 = vmatpush1.msra.mxu0 %v722
        %784 = vmatprep.subr.mxu0 0.0
        %785 = vmatpush1.msra.mxu0 %v723
        %786 = vmatprep.subr.mxu0 0.0
        %787 = vmatpush1.msra.mxu0 %v724
        %788 = vmatprep.subr.mxu0 0.0
        %789 = vmatpush1.msra.mxu0 %v725
        %790 = vmatprep.subr.mxu0 0.0
        %791 = vmatpush1.msra.mxu0 %v726
        %792 = vmatprep.mubr.f32.mxu0 %v694
        %793 = vmatmul.mubr.f32.gmra.mrb[0].mxu0 %v693
        %v794 = vpop.f32.mrb[0].mxu0
        %v795 = vadd.f32 %v727, %v794
        %v796 = vpop.f32.mrb[0].mxu0
        %797 = vdwg.mxu0
        %v798 = vmax.f32 %v795, 0.0
        %v799 = vld [vmem:[#allocation4 + $0x108] sm:$0xff]
        %v800 = vld [vmem:[#allocation4 + $0x110] sm:$0xff]
        %v801 = vld [vmem:[#allocation4 + $0x118] sm:$0xff]
        %v802 = vld [vmem:[#allocation4 + $0x120] sm:$0xff]
        %v803 = vld [vmem:[#allocation4 + $0x128] sm:$0xff]
        %v804 = vld [vmem:[#allocation4 + $0x130] sm:$0xff]
        %v805 = vld [vmem:[#allocation4 + $0x138] sm:$0xff]
        %v806 = vld [vmem:[#allocation4 + $0x140] sm:$0xff]
        %v807 = vld [vmem:[#allocation4 + $0x148] sm:$0xff]
        %v808 = vld [vmem:[#allocation4 + $0x150] sm:$0xff]
        %v809 = vld [vmem:[#allocation4 + $0x158] sm:$0xff]
        %v810 = vld [vmem:[#allocation4 + $0x160] sm:$0xff]
        %v811 = vld [vmem:[#allocation4 + $0x168] sm:$0xff]
        %v812 = vld [vmem:[#allocation4 + $0x170] sm:$0xff]
        %v813 = vld [vmem:[#allocation4 + $0x178] sm:$0xff]
        %v814 = vld [vmem:[#allocation4 + $0x180] sm:$0xff]
        %v815 = vld [vmem:[#allocation2 + $0xc80] sm:$0xff]
        %v816 = vld [vmem:[#allocation2 + $0xc88] sm:$0xff]
        %v817 = vld [vmem:[#allocation2 + $0xc90] sm:$0xff]
        %v818 = vld [vmem:[#allocation2 + $0xca8] sm:$0xff]
        %v819 = vld [vmem:[#allocation2 + $0xcb0] sm:$0xff]
        %v820 = vld [vmem:[#allocation2 + $0xcb8] sm:$0xff]
        %v821 = vld [vmem:[#allocation2 + $0xcd0] sm:$0xff]
        %v822 = vld [vmem:[#allocation2 + $0xcd8] sm:$0xff]
        %v823 = vld [vmem:[#allocation2 + $0xce0] sm:$0xff]
        %v824 = vld [vmem:[#allocation2 + $0xcf8] sm:$0xff]
        %v825 = vld [vmem:[#allocation2 + $0xd00] sm:$0xff]
        %v826 = vld [vmem:[#allocation2 + $0xd08] sm:$0xff]
        %v827 = vld [vmem:[#allocation2 + $0xd20] sm:$0xff]
        %v828 = vld [vmem:[#allocation2 + $0xd28] sm:$0xff]
        %v829 = vld [vmem:[#allocation2 + $0xd30] sm:$0xff]
        %v830 = vld [vmem:[#allocation2 + $0xd48] sm:$0xff]
        %v831 = vld [vmem:[#allocation2 + $0xd50] sm:$0xff]
        %v832 = vld [vmem:[#allocation2 + $0xd58] sm:$0xff]
        %v833 = vld [vmem:[#allocation2 + $0xd70] sm:$0xff]
        %v834 = vld [vmem:[#allocation2 + $0xd78] sm:$0xff]
        %v835 = vld [vmem:[#allocation2 + $0xd80] sm:$0xff]
        %v836 = vld [vmem:[#allocation2 + $0xd98] sm:$0xff]
        %v837 = vld [vmem:[#allocation2 + $0xda0] sm:$0xff]
        %v838 = vld [vmem:[#allocation2 + $0xda8] sm:$0xff]
        %v839 = vld [vmem:[#allocation2 + $0xdc0] sm:$0xff]
        %v840 = vld [vmem:[#allocation2 + $0xdc8] sm:$0xff]
        %v841 = vld [vmem:[#allocation2 + $0xdd0] sm:$0xff]
        %v842 = vld [vmem:[#allocation2 + $0xde8] sm:$0xff]
        %v843 = vld [vmem:[#allocation2 + $0xdf0] sm:$0xff]
        %v844 = vld [vmem:[#allocation2 + $0xdf8] sm:$0xff]
        %v845 = vld [vmem:[#allocation2 + $0xe10] sm:$0xff]
        %v846 = vld [vmem:[#allocation2 + $0xe18] sm:$0xff]
        %v847 = vld [vmem:[#allocation2 + $0xe20] sm:$0xff]
        %v848 = vld [vmem:[#allocation2 + $0xe38] sm:$0xff]
        %v849 = vld [vmem:[#allocation2 + $0xe40] sm:$0xff]
        %v850 = vld [vmem:[#allocation2 + $0xe48] sm:$0xff]
        %v851 = vld [vmem:[#allocation2 + $0xe60] sm:$0xff]
        %v852 = vld [vmem:[#allocation2 + $0xe68] sm:$0xff]
        %v853 = vld [vmem:[#allocation2 + $0xe70] sm:$0xff]
        %v854 = vld [vmem:[#allocation2 + $0xe88] sm:$0xff]
        %v855 = vld [vmem:[#allocation2 + $0xe90] sm:$0xff]
        %v856 = vld [vmem:[#allocation2 + $0xe98] sm:$0xff]
        %v857 = vld [vmem:[#allocation2 + $0xeb0] sm:$0xff]
        %v858 = vld [vmem:[#allocation2 + $0xeb8] sm:$0xff]
        %v859 = vld [vmem:[#allocation2 + $0xec0] sm:$0xff]
        %v860 = vld [vmem:[#allocation2 + $0xed8] sm:$0xff]
        %v861 = vld [vmem:[#allocation2 + $0xee0] sm:$0xff]
        %v862 = vld [vmem:[#allocation2 + $0xee8] sm:$0xff]
        %863 = vmatprep.subr.mxu0 %v816
        %864 = vmatpush1.msra.mxu0 %v815
        %865 = vmatprep.subr.mxu0 %v819
        %866 = vmatpush1.msra.mxu0 %v818
        %867 = vmatprep.subr.mxu0 %v822
        %868 = vmatpush1.msra.mxu0 %v821
        %869 = vmatprep.subr.mxu0 %v825
        %870 = vmatpush1.msra.mxu0 %v824
        %871 = vmatprep.subr.mxu0 %v828
        %872 = vmatpush1.msra.mxu0 %v827
        %873 = vmatprep.subr.mxu0 %v831
        %874 = vmatpush1.msra.mxu0 %v830
        %875 = vmatprep.subr.mxu0 %v834
        %876 = vmatpush1.msra.mxu0 %v833
        %877 = vmatprep.subr.mxu0 %v837
        %878 = vmatpush1.msra.mxu0 %v836
        %879 = vmatprep.subr.mxu0 %v840
        %880 = vmatpush1.msra.mxu0 %v839
        %881 = vmatprep.subr.mxu0 %v843
        %882 = vmatpush1.msra.mxu0 %v842
        %883 = vmatprep.subr.mxu0 %v846
        %884 = vmatpush1.msra.mxu0 %v845
        %885 = vmatprep.subr.mxu0 %v849
        %886 = vmatpush1.msra.mxu0 %v848
        %887 = vmatprep.subr.mxu0 %v852
        %888 = vmatpush1.msra.mxu0 %v851
        %889 = vmatprep.subr.mxu0 %v855
        %890 = vmatpush1.msra.mxu0 %v854
        %891 = vmatprep.subr.mxu0 %v858
        %892 = vmatpush1.msra.mxu0 %v857
        %893 = vmatprep.subr.mxu0 %v861
        %894 = vmatpush1.msra.mxu0 %v860
        %895 = vmatprep.subr.mxu0 0.0
        %896 = vmatpush1.msra.mxu0 0.0
        %897 = vmatprep.subr.mxu0 0.0
        %898 = vmatpush1.msra.mxu0 0.0
        %899 = vmatprep.subr.mxu0 0.0
        %900 = vmatpush1.msra.mxu0 0.0
        %901 = vmatprep.subr.mxu0 0.0
        %902 = vmatpush1.msra.mxu0 0.0
        %903 = vmatprep.subr.mxu0 0.0
        %904 = vmatpush1.msra.mxu0 0.0
        %905 = vmatprep.subr.mxu0 0.0
        %906 = vmatpush1.msra.mxu0 0.0
        %907 = vmatprep.subr.mxu0 0.0
        %908 = vmatpush1.msra.mxu0 0.0
        %909 = vmatprep.subr.mxu0 0.0
        %910 = vmatpush1.msra.mxu0 0.0
        %911 = vmatprep.subr.mxu0 0.0
        %912 = vmatpush1.msra.mxu0 0.0
        %913 = vmatprep.subr.mxu0 0.0
        %914 = vmatpush1.msra.mxu0 0.0
        %915 = vmatprep.subr.mxu0 0.0
        %916 = vmatpush1.msra.mxu0 0.0
        %917 = vmatprep.subr.mxu0 0.0
        %918 = vmatpush1.msra.mxu0 0.0
        %919 = vmatprep.subr.mxu0 0.0
        %920 = vmatpush1.msra.mxu0 0.0
        %921 = vmatprep.subr.mxu0 0.0
        %922 = vmatpush1.msra.mxu0 0.0
        %923 = vmatprep.subr.mxu0 0.0
        %924 = vmatpush1.msra.mxu0 0.0
        %925 = vmatprep.subr.mxu0 0.0
        %926 = vmatpush1.msra.mxu0 0.0
        %927 = vmatprep.mubr.f32.mxu0 0.0
        %928 = vmatmul.mubr.f32.gmra.mrb[0].mxu0 %v798
        %v929 = vpop.f32.mrb[0].mxu0
        %v930 = vadd.f32 0.0, %v929
        %v931 = vpop.f32.mrb[0].mxu0
        %v932 = vadd.f32 0.0, %v931
        %933 = vdwg.mxu0
        %934 = vmatprep.subr.mxu0 0.0
        %935 = vmatpush1.msra.mxu0 %v817
        %936 = vmatprep.subr.mxu0 0.0
        %937 = vmatpush1.msra.mxu0 %v820
        %938 = vmatprep.subr.mxu0 0.0
        %939 = vmatpush1.msra.mxu0 %v823
        %940 = vmatprep.subr.mxu0 0.0
        %941 = vmatpush1.msra.mxu0 %v826
        %942 = vmatprep.subr.mxu0 0.0
        %943 = vmatpush1.msra.mxu0 %v829
        %944 = vmatprep.subr.mxu0 0.0
        %945 = vmatpush1.msra.mxu0 %v832
        %946 = vmatprep.subr.mxu0 0.0
        %947 = vmatpush1.msra.mxu0 %v835
        %948 = vmatprep.subr.mxu0 0.0
        %949 = vmatpush1.msra.mxu0 %v838
        %950 = vmatprep.subr.mxu0 0.0
        %951 = vmatpush1.msra.mxu0 %v841
        %952 = vmatprep.subr.mxu0 0.0
        %953 = vmatpush1.msra.mxu0 %v844
        %954 = vmatprep.subr.mxu0 0.0
        %955 = vmatpush1.msra.mxu0 %v847
        %956 = vmatprep.subr.mxu0 0.0
        %957 = vmatpush1.msra.mxu0 %v850
        %958 = vmatprep.subr.mxu0 0.0
        %959 = vmatpush1.msra.mxu0 %v853
        %960 = vmatprep.subr.mxu0 0.0
        %961 = vmatpush1.msra.mxu0 %v856
        %962 = vmatprep.subr.mxu0 0.0
        %963 = vmatpush1.msra.mxu0 %v859
        %964 = vmatprep.subr.mxu0 0.0
        %965 = vmatpush1.msra.mxu0 %v862
        %966 = vmatprep.subr.mxu0 0.0
        %967 = vmatpush1.msra.mxu0 0.0
        %968 = vmatprep.subr.mxu0 0.0
        %969 = vmatpush1.msra.mxu0 0.0
        %970 = vmatprep.subr.mxu0 0.0
        %971 = vmatpush1.msra.mxu0 0.0
        %972 = vmatprep.subr.mxu0 0.0
        %973 = vmatpush1.msra.mxu0 0.0
        %974 = vmatprep.subr.mxu0 0.0
        %975 = vmatpush1.msra.mxu0 0.0
        %976 = vmatprep.subr.mxu0 0.0
        %977 = vmatpush1.msra.mxu0 0.0
        %978 = vmatprep.subr.mxu0 0.0
        %979 = vmatpush1.msra.mxu0 0.0
        %980 = vmatprep.subr.mxu0 0.0
        %981 = vmatpush1.msra.mxu0 0.0
        %982 = vmatprep.subr.mxu0 0.0
        %983 = vmatpush1.msra.mxu0 0.0
        %984 = vmatprep.subr.mxu0 0.0
        %985 = vmatpush1.msra.mxu0 0.0
        %986 = vmatprep.subr.mxu0 0.0
        %987 = vmatpush1.msra.mxu0 0.0
        %988 = vmatprep.subr.mxu0 0.0
        %989 = vmatpush1.msra.mxu0 0.0
        %990 = vmatprep.subr.mxu0 0.0
        %991 = vmatpush1.msra.mxu0 0.0
        %992 = vmatprep.subr.mxu0 0.0
        %993 = vmatpush1.msra.mxu0 0.0
        %994 = vmatprep.subr.mxu0 0.0
        %995 = vmatpush1.msra.mxu0 0.0
        %996 = vmatprep.subr.mxu0 0.0
        %997 = vmatpush1.msra.mxu0 0.0
        %998 = vmatprep.mubr.f32.mxu0 0.0
        %999 = vmatmul.mubr.f32.gmra.mrb[0].mxu0 %v798
        %v1000 = vpop.f32.mrb[0].mxu0
        %v1001 = vadd.f32 0.0, %v1000
        %v1002 = vpop.f32.mrb[0].mxu0
        %1003 = vdwg.mxu0
        %v1004 = vlaneseq
        %v1005 = vshrl.u32 %v1004, 7
        %v1006 = vsub.s32 2, %v1005
        %v1007 = vrot.slane %v194, %v1006
        %v1008 = vlaneseq
        %v1009 = vshrl.u32 %v1008, 7
        %v1010 = vsub.s32 3, %v1009
        %v1011 = vrot.slane %v194, %v1010
        %v1012 = vlaneseq
        %v1013 = vshrl.u32 %v1012, 7
        %v1014 = vsub.s32 4, %v1013
        %v1015 = vrot.slane %v194, %v1014
        %1019 = vmatprep.subr.mxu0 %v342
        %1020 = vmatpush1.msra.mxu0 %v341
        %1021 = vmatprep.subr.mxu0 %v345
        %1022 = vmatpush1.msra.mxu0 %v344
        %1023 = vmatprep.subr.mxu0 %v348
        %1024 = vmatpush1.msra.mxu0 %v347
        %1025 = vmatprep.subr.mxu0 %v351
        %1026 = vmatpush1.msra.mxu0 %v350
        %1027 = vmatprep.subr.mxu0 %v354
        %1028 = vmatpush1.msra.mxu0 %v353
        %1029 = vmatprep.subr.mxu0 %v357
        %1030 = vmatpush1.msra.mxu0 %v356
        %1031 = vmatprep.subr.mxu0 %v360
        %1032 = vmatpush1.msra.mxu0 %v359
        %1033 = vmatprep.subr.mxu0 %v363
        %1034 = vmatpush1.msra.mxu0 %v362
        %1035 = vmatprep.subr.mxu0 %v366
        %1036 = vmatpush1.msra.mxu0 %v365
        %1037 = vmatprep.subr.mxu0 %v369
        %1038 = vmatpush1.msra.mxu0 %v368
        %1039 = vmatprep.subr.mxu0 %v372
        %1040 = vmatpush1.msra.mxu0 %v371
        %1041 = vmatprep.subr.mxu0 %v375
        %1042 = vmatpush1.msra.mxu0 %v374
        %1043 = vmatprep.subr.mxu0 %v378
        %1044 = vmatpush1.msra.mxu0 %v377
        %1045 = vmatprep.subr.mxu0 %v381
        %1046 = vmatpush1.msra.mxu0 %v380
        %1047 = vmatprep.subr.mxu0 %v384
        %1048 = vmatpush1.msra.mxu0 %v383
        %1049 = vmatprep.subr.mxu0 %v387
        %1050 = vmatpush1.msra.mxu0 %v386
        %1051 = vmatprep.subr.mxu0 %v390
        %1052 = vmatpush1.msra.mxu0 %v389
        %1053 = vmatprep.subr.mxu0 %v393
        %1054 = vmatpush1.msra.mxu0 %v392
        %1055 = vmatprep.subr.mxu0 %v396
        %1056 = vmatpush1.msra.mxu0 %v395
        %1057 = vmatprep.subr.mxu0 %v399
        %1058 = vmatpush1.msra.mxu0 %v398
        %1059 = vmatprep.subr.mxu0 %v402
        %1060 = vmatpush1.msra.mxu0 %v401
        %1061 = vmatprep.subr.mxu0 %v405
        %1062 = vmatpush1.msra.mxu0 %v404
        %1063 = vmatprep.subr.mxu0 %v408
        %1064 = vmatpush1.msra.mxu0 %v407
        %1065 = vmatprep.subr.mxu0 %v411
        %1066 = vmatpush1.msra.mxu0 %v410
        %1067 = vmatprep.subr.mxu0 %v414
        %1068 = vmatpush1.msra.mxu0 %v413
        %1069 = vmatprep.subr.mxu0 %v417
        %1070 = vmatpush1.msra.mxu0 %v416
        %1071 = vmatprep.subr.mxu0 %v420
        %1072 = vmatpush1.msra.mxu0 %v419
        %1073 = vmatprep.subr.mxu0 %v423
        %1074 = vmatpush1.msra.mxu0 %v422
        %1075 = vmatprep.subr.mxu0 %v426
        %1076 = vmatpush1.msra.mxu0 %v425
        %1077 = vmatprep.subr.mxu0 %v429
        %1078 = vmatpush1.msra.mxu0 %v428
        %1079 = vmatprep.subr.mxu0 %v432
        %1080 = vmatpush1.msra.mxu0 %v431
        %1081 = vmatprep.subr.mxu0 %v435
        %1082 = vmatpush1.msra.mxu0 %v434
        %1083 = vmatprep.mubr.f32.mxu0 %v1011
        %1084 = vmatmul.mubr.f32.gmra.mrb[0].mxu0 %v1007
        %v1085 = vpop.f32.mrb[0].mxu0
        %v1086 = vadd.f32 %v930, %v1085
        %v1087 = vpop.f32.mrb[0].mxu0
        %v1088 = vadd.f32 %v932, %v1087
        %1089 = vdwg.mxu0
        %1090 = vmatprep.subr.mxu0 %v438
        %1091 = vmatpush1.msra.mxu0 %v437
        %1092 = vmatprep.subr.mxu0 %v441
        %1093 = vmatpush1.msra.mxu0 %v440
        %1094 = vmatprep.subr.mxu0 %v444
        %1095 = vmatpush1.msra.mxu0 %v443
        %1096 = vmatprep.subr.mxu0 %v447
        %1097 = vmatpush1.msra.mxu0 %v446
        %1098 = vmatprep.subr.mxu0 %v450
        %1099 = vmatpush1.msra.mxu0 %v449
        %1100 = vmatprep.subr.mxu0 %v453
        %1101 = vmatpush1.msra.mxu0 %v452
        %1102 = vmatprep.subr.mxu0 %v456
        %1103 = vmatpush1.msra.mxu0 %v455
        %1104 = vmatprep.subr.mxu0 %v459
        %1105 = vmatpush1.msra.mxu0 %v458
        %1106 = vmatprep.subr.mxu0 %v462
        %1107 = vmatpush1.msra.mxu0 %v461
        %1108 = vmatprep.subr.mxu0 %v465
        %1109 = vmatpush1.msra.mxu0 %v464
        %1110 = vmatprep.subr.mxu0 %v468
        %1111 = vmatpush1.msra.mxu0 %v467
        %1112 = vmatprep.subr.mxu0 %v471
        %1113 = vmatpush1.msra.mxu0 %v470
        %1114 = vmatprep.subr.mxu0 %v474
        %1115 = vmatpush1.msra.mxu0 %v473
        %1116 = vmatprep.subr.mxu0 %v477
        %1117 = vmatpush1.msra.mxu0 %v476
        %1118 = vmatprep.subr.mxu0 %v480
        %1119 = vmatpush1.msra.mxu0 %v479
        %1120 = vmatprep.subr.mxu0 %v483
        %1121 = vmatpush1.msra.mxu0 %v482
        %1122 = vmatprep.subr.mxu0 0.0
        %1123 = vmatpush1.msra.mxu0 0.0
        %1124 = vmatprep.subr.mxu0 0.0
        %1125 = vmatpush1.msra.mxu0 0.0
        %1126 = vmatprep.subr.mxu0 0.0
        %1127 = vmatpush1.msra.mxu0 0.0
        %1128 = vmatprep.subr.mxu0 0.0
        %1129 = vmatpush1.msra.mxu0 0.0
        %1130 = vmatprep.subr.mxu0 0.0
        %1131 = vmatpush1.msra.mxu0 0.0
        %1132 = vmatprep.subr.mxu0 0.0
        %1133 = vmatpush1.msra.mxu0 0.0
        %1134 = vmatprep.subr.mxu0 0.0
        %1135 = vmatpush1.msra.mxu0 0.0
        %1136 = vmatprep.subr.mxu0 0.0
        %1137 = vmatpush1.msra.mxu0 0.0
        %1138 = vmatprep.subr.mxu0 0.0
        %1139 = vmatpush1.msra.mxu0 0.0
        %1140 = vmatprep.subr.mxu0 0.0
        %1141 = vmatpush1.msra.mxu0 0.0
        %1142 = vmatprep.subr.mxu0 0.0
        %1143 = vmatpush1.msra.mxu0 0.0
        %1144 = vmatprep.subr.mxu0 0.0
        %1145 = vmatpush1.msra.mxu0 0.0
        %1146 = vmatprep.subr.mxu0 0.0
        %1147 = vmatpush1.msra.mxu0 0.0
        %1148 = vmatprep.subr.mxu0 0.0
        %1149 = vmatpush1.msra.mxu0 0.0
        %1150 = vmatprep.subr.mxu0 0.0
        %1151 = vmatpush1.msra.mxu0 0.0
        %1152 = vmatprep.subr.mxu0 0.0
        %1153 = vmatpush1.msra.mxu0 0.0
        %1154 = vmatprep.mubr.f32.mxu0 0.0
        %1155 = vmatmul.mubr.f32.gmra.mrb[0].mxu0 %v1015
        %v1156 = vpop.f32.mrb[0].mxu0
        %v1157 = vadd.f32 %v1086, %v1156
        %v1158 = vpop.f32.mrb[0].mxu0
        %v1159 = vadd.f32 %v1088, %v1158
        %1160 = vdwg.mxu0
        %1161 = vmatprep.subr.mxu0 0.0
        %1162 = vmatpush1.msra.mxu0 %v343
        %1163 = vmatprep.subr.mxu0 0.0
        %1164 = vmatpush1.msra.mxu0 %v346
        %1165 = vmatprep.subr.mxu0 0.0
        %1166 = vmatpush1.msra.mxu0 %v349
        %1167 = vmatprep.subr.mxu0 0.0
        %1168 = vmatpush1.msra.mxu0 %v352
        %1169 = vmatprep.subr.mxu0 0.0
        %1170 = vmatpush1.msra.mxu0 %v355
        %1171 = vmatprep.subr.mxu0 0.0
        %1172 = vmatpush1.msra.mxu0 %v358
        %1173 = vmatprep.subr.mxu0 0.0
        %1174 = vmatpush1.msra.mxu0 %v361
        %1175 = vmatprep.subr.mxu0 0.0
        %1176 = vmatpush1.msra.mxu0 %v364
        %1177 = vmatprep.subr.mxu0 0.0
        %1178 = vmatpush1.msra.mxu0 %v367
        %1179 = vmatprep.subr.mxu0 0.0
        %1180 = vmatpush1.msra.mxu0 %v370
        %1181 = vmatprep.subr.mxu0 0.0
        %1182 = vmatpush1.msra.mxu0 %v373
        %1183 = vmatprep.subr.mxu0 0.0
        %1184 = vmatpush1.msra.mxu0 %v376
        %1185 = vmatprep.subr.mxu0 0.0
        %1186 = vmatpush1.msra.mxu0 %v379
        %1187 = vmatprep.subr.mxu0 0.0
        %1188 = vmatpush1.msra.mxu0 %v382
        %1189 = vmatprep.subr.mxu0 0.0
        %1190 = vmatpush1.msra.mxu0 %v385
        %1191 = vmatprep.subr.mxu0 0.0
        %1192 = vmatpush1.msra.mxu0 %v388
        %1193 = vmatprep.subr.mxu0 0.0
        %1194 = vmatpush1.msra.mxu0 %v391
        %1195 = vmatprep.subr.mxu0 0.0
        %1196 = vmatpush1.msra.mxu0 %v394
        %1197 = vmatprep.subr.mxu0 0.0
        %1198 = vmatpush1.msra.mxu0 %v397
        %1199 = vmatprep.subr.mxu0 0.0
        %1200 = vmatpush1.msra.mxu0 %v400
        %1201 = vmatprep.subr.mxu0 0.0
        %1202 = vmatpush1.msra.mxu0 %v403
        %1203 = vmatprep.subr.mxu0 0.0
        %1204 = vmatpush1.msra.mxu0 %v406
        %1205 = vmatprep.subr.mxu0 0.0
        %1206 = vmatpush1.msra.mxu0 %v409
        %1207 = vmatprep.subr.mxu0 0.0
        %1208 = vmatpush1.msra.mxu0 %v412
        %1209 = vmatprep.subr.mxu0 0.0
        %1210 = vmatpush1.msra.mxu0 %v415
        %1211 = vmatprep.subr.mxu0 0.0
        %1212 = vmatpush1.msra.mxu0 %v418
        %1213 = vmatprep.subr.mxu0 0.0
        %1214 = vmatpush1.msra.mxu0 %v421
        %1215 = vmatprep.subr.mxu0 0.0
        %1216 = vmatpush1.msra.mxu0 %v424
        %1217 = vmatprep.subr.mxu0 0.0
        %1218 = vmatpush1.msra.mxu0 %v427
        %1219 = vmatprep.subr.mxu0 0.0
        %1220 = vmatpush1.msra.mxu0 %v430
        %1221 = vmatprep.subr.mxu0 0.0
        %1222 = vmatpush1.msra.mxu0 %v433
        %1223 = vmatprep.subr.mxu0 0.0
        %1224 = vmatpush1.msra.mxu0 %v436
        %1225 = vmatprep.mubr.f32.mxu0 %v1011
        %1226 = vmatmul.mubr.f32.gmra.mrb[0].mxu0 %v1007
        %v1227 = vpop.f32.mrb[0].mxu0
        %v1228 = vadd.f32 %v1001, %v1227
        %v1229 = vpop.f32.mrb[0].mxu0
        %1230 = vdwg.mxu0
        %1231 = vmatprep.subr.mxu0 0.0
        %1232 = vmatpush1.msra.mxu0 %v439
        %1233 = vmatprep.subr.mxu0 0.0
        %1234 = vmatpush1.msra.mxu0 %v442
        %1235 = vmatprep.subr.mxu0 0.0
        %1236 = vmatpush1.msra.mxu0 %v445
        %1237 = vmatprep.subr.mxu0 0.0
        %1238 = vmatpush1.msra.mxu0 %v448
        %1239 = vmatprep.subr.mxu0 0.0
        %1240 = vmatpush1.msra.mxu0 %v451
        %1241 = vmatprep.subr.mxu0 0.0
        %1242 = vmatpush1.msra.mxu0 %v454
        %1243 = vmatprep.subr.mxu0 0.0
        %1244 = vmatpush1.msra.mxu0 %v457
        %1245 = vmatprep.subr.mxu0 0.0
        %1246 = vmatpush1.msra.mxu0 %v460
        %1247 = vmatprep.subr.mxu0 0.0
        %1248 = vmatpush1.msra.mxu0 %v463
        %1249 = vmatprep.subr.mxu0 0.0
        %1250 = vmatpush1.msra.mxu0 %v466
        %1251 = vmatprep.subr.mxu0 0.0
        %1252 = vmatpush1.msra.mxu0 %v469
        %1253 = vmatprep.subr.mxu0 0.0
        %1254 = vmatpush1.msra.mxu0 %v472
        %1255 = vmatprep.subr.mxu0 0.0
        %1256 = vmatpush1.msra.mxu0 %v475
        %1257 = vmatprep.subr.mxu0 0.0
        %1258 = vmatpush1.msra.mxu0 %v478
        %1259 = vmatprep.subr.mxu0 0.0
        %1260 = vmatpush1.msra.mxu0 %v481
        %1261 = vmatprep.subr.mxu0 0.0
        %1262 = vmatpush1.msra.mxu0 %v484
        %1263 = vmatprep.subr.mxu0 0.0
        %1264 = vmatpush1.msra.mxu0 0.0
        %1265 = vmatprep.subr.mxu0 0.0
        %1266 = vmatpush1.msra.mxu0 0.0
        %1267 = vmatprep.subr.mxu0 0.0
        %1268 = vmatpush1.msra.mxu0 0.0
        %1269 = vmatprep.subr.mxu0 0.0
        %1270 = vmatpush1.msra.mxu0 0.0
        %1271 = vmatprep.subr.mxu0 0.0
        %1272 = vmatpush1.msra.mxu0 0.0
        %1273 = vmatprep.subr.mxu0 0.0
        %1274 = vmatpush1.msra.mxu0 0.0
        %1275 = vmatprep.subr.mxu0 0.0
        %1276 = vmatpush1.msra.mxu0 0.0
        %1277 = vmatprep.subr.mxu0 0.0
        %1278 = vmatpush1.msra.mxu0 0.0
        %1279 = vmatprep.subr.mxu0 0.0
        %1280 = vmatpush1.msra.mxu0 0.0
        %1281 = vmatprep.subr.mxu0 0.0
        %1282 = vmatpush1.msra.mxu0 0.0
        %1283 = vmatprep.subr.mxu0 0.0
        %1284 = vmatpush1.msra.mxu0 0.0
        %1285 = vmatprep.subr.mxu0 0.0
        %1286 = vmatpush1.msra.mxu0 0.0
        %1287 = vmatprep.subr.mxu0 0.0
        %1288 = vmatpush1.msra.mxu0 0.0
        %1289 = vmatprep.subr.mxu0 0.0
        %1290 = vmatpush1.msra.mxu0 0.0
        %1291 = vmatprep.subr.mxu0 0.0
        %1292 = vmatpush1.msra.mxu0 0.0
        %1293 = vmatprep.subr.mxu0 0.0
        %1294 = vmatpush1.msra.mxu0 0.0
        %1295 = vmatprep.mubr.f32.mxu0 0.0
        %1296 = vmatmul.mubr.f32.gmra.mrb[0].mxu0 %v1015
        %v1297 = vpop.f32.mrb[0].mxu0
        %v1298 = vadd.f32 %v1228, %v1297
        %v1299 = vpop.f32.mrb[0].mxu0
        %1300 = vdwg.mxu0
        %v1301 = vmax.f32 %v1157, 0.0
        %v1302 = vmax.f32 %v1159, 0.0
        %v1303 = vmax.f32 %v1298, 0.0
        %v1304 = vld [vmem:[#allocation4 + $0x188] sm:$0xff]
        %v1305 = vld [vmem:[#allocation4 + $0x190] sm:$0xff]
        %v1306 = vld [vmem:[#allocation4 + $0x198] sm:$0xff]
        %v1307 = vld [vmem:[#allocation4 + $0x1a0] sm:$0xff]
        %v1308 = vld [vmem:[#allocation4 + $0x1a8] sm:$0xff]
        %v1309 = vld [vmem:[#allocation4 + $0x1b0] sm:$0xff]
        %v1310 = vld [vmem:[#allocation4 + $0x1b8] sm:$0xff]
        %v1311 = vld [vmem:[#allocation4 + $0x1c0] sm:$0xff]
        %v1312 = vld [vmem:[#allocation4 + $0x1c8] sm:$0xff]
        %v1313 = vld [vmem:[#allocation4 + $0x1d0] sm:$0xff]
        %v1314 = vld [vmem:[#allocation4 + $0x1d8] sm:$0xff]
        %v1315 = vld [vmem:[#allocation4 + $0x1e0] sm:$0xff]
        %v1316 = vld [vmem:[#allocation4 + $0x1e8] sm:$0xff]
        %v1317 = vld [vmem:[#allocation4 + $0x1f0] sm:$0xff]
        %v1318 = vld [vmem:[#allocation4 + $0x1f8] sm:$0xff]
        %v1319 = vld [vmem:[#allocation4 + $0x200] sm:$0xff]
        %v1320 = vld [vmem:[#allocation4 + $0x208] sm:$0xff]
        %v1321 = vld [vmem:[#allocation4 + $0x210] sm:$0xff]
        %v1322 = vld [vmem:[#allocation4 + $0x218] sm:$0xff]
        %v1323 = vld [vmem:[#allocation4 + $0x220] sm:$0xff]
        %v1324 = vld [vmem:[#allocation4 + $0x228] sm:$0xff]
        %v1325 = vld [vmem:[#allocation4 + $0x230] sm:$0xff]
        %v1326 = vld [vmem:[#allocation4 + $0x238] sm:$0xff]
        %v1327 = vld [vmem:[#allocation4 + $0x240] sm:$0xff]
        %v1328 = vld [vmem:[#allocation4 + $0x248] sm:$0xff]
        %v1329 = vld [vmem:[#allocation4 + $0x250] sm:$0xff]
        %v1330 = vld [vmem:[#allocation4 + $0x258] sm:$0xff]
        %v1331 = vld [vmem:[#allocation4 + $0x260] sm:$0xff]
        %v1332 = vld [vmem:[#allocation4 + $0x268] sm:$0xff]
        %v1333 = vld [vmem:[#allocation4 + $0x270] sm:$0xff]
        %v1334 = vld [vmem:[#allocation4 + $0x278] sm:$0xff]
        %v1335 = vld [vmem:[#allocation4 + $0x280] sm:$0xff]
        %v1336 = vld [vmem:[#allocation4 + $0x288] sm:$0xff]
        %v1337 = vld [vmem:[#allocation4 + $0x290] sm:$0xff]
        %v1338 = vld [vmem:[#allocation4 + $0x298] sm:$0xff]
        %v1339 = vld [vmem:[#allocation4 + $0x2a0] sm:$0xff]
        %v1340 = vld [vmem:[#allocation4 + $0x2a8] sm:$0xff]
        %v1341 = vld [vmem:[#allocation4 + $0x2b0] sm:$0xff]
        %v1342 = vld [vmem:[#allocation4 + $0x2b8] sm:$0xff]
        %v1343 = vld [vmem:[#allocation4 + $0x2c0] sm:$0xff]
        %v1344 = vld [vmem:[#allocation4 + $0x2c8] sm:$0xff]
        %v1345 = vld [vmem:[#allocation4 + $0x2d0] sm:$0xff]
        %v1346 = vld [vmem:[#allocation4 + $0x2d8] sm:$0xff]
        %v1347 = vld [vmem:[#allocation4 + $0x2e0] sm:$0xff]
        %v1348 = vld [vmem:[#allocation4 + $0x2e8] sm:$0xff]
        %v1349 = vld [vmem:[#allocation4 + $0x2f0] sm:$0xff]
        %v1350 = vld [vmem:[#allocation4 + $0x2f8] sm:$0xff]
        %v1351 = vld [vmem:[#allocation4 + $0x300] sm:$0xff]
        %v1352 = vld [vmem:[#allocation4 + $0x308] sm:$0x1]
        %1353 = vmatprep.subr.mxu0 0.0
        %1354 = vmatpush1.msra.mxu0 %v1304
        %1355 = vmatprep.subr.mxu0 0.0
        %1356 = vmatpush1.msra.mxu0 %v1305
        %1357 = vmatprep.subr.mxu0 0.0
        %1358 = vmatpush1.msra.mxu0 %v1306
        %1359 = vmatprep.subr.mxu0 0.0
        %1360 = vmatpush1.msra.mxu0 %v1307
        %1361 = vmatprep.subr.mxu0 0.0
        %1362 = vmatpush1.msra.mxu0 %v1308
        %1363 = vmatprep.subr.mxu0 0.0
        %1364 = vmatpush1.msra.mxu0 %v1309
        %1365 = vmatprep.subr.mxu0 0.0
        %1366 = vmatpush1.msra.mxu0 %v1310
        %1367 = vmatprep.subr.mxu0 0.0
        %1368 = vmatpush1.msra.mxu0 %v1311
        %1369 = vmatprep.subr.mxu0 0.0
        %1370 = vmatpush1.msra.mxu0 %v1312
        %1371 = vmatprep.subr.mxu0 0.0
        %1372 = vmatpush1.msra.mxu0 %v1313
        %1373 = vmatprep.subr.mxu0 0.0
        %1374 = vmatpush1.msra.mxu0 %v1314
        %1375 = vmatprep.subr.mxu0 0.0
        %1376 = vmatpush1.msra.mxu0 %v1315
        %1377 = vmatprep.subr.mxu0 0.0
        %1378 = vmatpush1.msra.mxu0 %v1316
        %1379 = vmatprep.subr.mxu0 0.0
        %1380 = vmatpush1.msra.mxu0 %v1317
        %1381 = vmatprep.subr.mxu0 0.0
        %1382 = vmatpush1.msra.mxu0 %v1318
        %1383 = vmatprep.subr.mxu0 0.0
        %1384 = vmatpush1.msra.mxu0 %v1319
        %1385 = vmatprep.subr.mxu0 0.0
        %1386 = vmatpush1.msra.mxu0 %v1320
        %1387 = vmatprep.subr.mxu0 0.0
        %1388 = vmatpush1.msra.mxu0 %v1321
        %1389 = vmatprep.subr.mxu0 0.0
        %1390 = vmatpush1.msra.mxu0 %v1322
        %1391 = vmatprep.subr.mxu0 0.0
        %1392 = vmatpush1.msra.mxu0 %v1323
        %1393 = vmatprep.subr.mxu0 0.0
        %1394 = vmatpush1.msra.mxu0 %v1324
        %1395 = vmatprep.subr.mxu0 0.0
        %1396 = vmatpush1.msra.mxu0 %v1325
        %1397 = vmatprep.subr.mxu0 0.0
        %1398 = vmatpush1.msra.mxu0 %v1326
        %1399 = vmatprep.subr.mxu0 0.0
        %1400 = vmatpush1.msra.mxu0 %v1327
        %1401 = vmatprep.subr.mxu0 0.0
        %1402 = vmatpush1.msra.mxu0 %v1328
        %1403 = vmatprep.subr.mxu0 0.0
        %1404 = vmatpush1.msra.mxu0 %v1329
        %1405 = vmatprep.subr.mxu0 0.0
        %1406 = vmatpush1.msra.mxu0 %v1330
        %1407 = vmatprep.subr.mxu0 0.0
        %1408 = vmatpush1.msra.mxu0 %v1331
        %1409 = vmatprep.subr.mxu0 0.0
        %1410 = vmatpush1.msra.mxu0 %v1332
        %1411 = vmatprep.subr.mxu0 0.0
        %1412 = vmatpush1.msra.mxu0 %v1333
        %1413 = vmatprep.subr.mxu0 0.0
        %1414 = vmatpush1.msra.mxu0 %v1334
        %1415 = vmatprep.subr.mxu0 0.0
        %1416 = vmatpush1.msra.mxu0 %v1335
        %1417 = vmatprep.mubr.f32.mxu0 %v1302
        %1418 = vmatmul.mubr.f32.gmra.mrb[0].mxu0 %v1301
        %v1419 = vpop.f32.mrb[0].mxu0
        %v1420 = vadd.f32 %v1352, %v1419
        %v1421 = vpop.f32.mrb[0].mxu0
        %1422 = vdwg.mxu0
        %1423 = vmatprep.subr.mxu0 0.0
        %1424 = vmatpush1.msra.mxu0 %v1336
        %1425 = vmatprep.subr.mxu0 0.0
        %1426 = vmatpush1.msra.mxu0 %v1337
        %1427 = vmatprep.subr.mxu0 0.0
        %1428 = vmatpush1.msra.mxu0 %v1338
        %1429 = vmatprep.subr.mxu0 0.0
        %1430 = vmatpush1.msra.mxu0 %v1339
        %1431 = vmatprep.subr.mxu0 0.0
        %1432 = vmatpush1.msra.mxu0 %v1340
        %1433 = vmatprep.subr.mxu0 0.0
        %1434 = vmatpush1.msra.mxu0 %v1341
        %1435 = vmatprep.subr.mxu0 0.0
        %1436 = vmatpush1.msra.mxu0 %v1342
        %1437 = vmatprep.subr.mxu0 0.0
        %1438 = vmatpush1.msra.mxu0 %v1343
        %1439 = vmatprep.subr.mxu0 0.0
        %1440 = vmatpush1.msra.mxu0 %v1344
        %1441 = vmatprep.subr.mxu0 0.0
        %1442 = vmatpush1.msra.mxu0 %v1345
        %1443 = vmatprep.subr.mxu0 0.0
        %1444 = vmatpush1.msra.mxu0 %v1346
        %1445 = vmatprep.subr.mxu0 0.0
        %1446 = vmatpush1.msra.mxu0 %v1347
        %1447 = vmatprep.subr.mxu0 0.0
        %1448 = vmatpush1.msra.mxu0 %v1348
        %1449 = vmatprep.subr.mxu0 0.0
        %1450 = vmatpush1.msra.mxu0 %v1349
        %1451 = vmatprep.subr.mxu0 0.0
        %1452 = vmatpush1.msra.mxu0 %v1350
        %1453 = vmatprep.subr.mxu0 0.0
        %1454 = vmatpush1.msra.mxu0 %v1351
        %1455 = vmatprep.subr.mxu0 0.0
        %1456 = vmatpush1.msra.mxu0 0.0
        %1457 = vmatprep.subr.mxu0 0.0
        %1458 = vmatpush1.msra.mxu0 0.0
        %1459 = vmatprep.subr.mxu0 0.0
        %1460 = vmatpush1.msra.mxu0 0.0
        %1461 = vmatprep.subr.mxu0 0.0
        %1462 = vmatpush1.msra.mxu0 0.0
        %1463 = vmatprep.subr.mxu0 0.0
        %1464 = vmatpush1.msra.mxu0 0.0
        %1465 = vmatprep.subr.mxu0 0.0
        %1466 = vmatpush1.msra.mxu0 0.0
        %1467 = vmatprep.subr.mxu0 0.0
        %1468 = vmatpush1.msra.mxu0 0.0
        %1469 = vmatprep.subr.mxu0 0.0
        %1470 = vmatpush1.msra.mxu0 0.0
        %1471 = vmatprep.subr.mxu0 0.0
        %1472 = vmatpush1.msra.mxu0 0.0
        %1473 = vmatprep.subr.mxu0 0.0
        %1474 = vmatpush1.msra.mxu0 0.0
        %1475 = vmatprep.subr.mxu0 0.0
        %1476 = vmatpush1.msra.mxu0 0.0
        %1477 = vmatprep.subr.mxu0 0.0
        %1478 = vmatpush1.msra.mxu0 0.0
        %1479 = vmatprep.subr.mxu0 0.0
        %1480 = vmatpush1.msra.mxu0 0.0
        %1481 = vmatprep.subr.mxu0 0.0
        %1482 = vmatpush1.msra.mxu0 0.0
        %1483 = vmatprep.subr.mxu0 0.0
        %1484 = vmatpush1.msra.mxu0 0.0
        %1485 = vmatprep.subr.mxu0 0.0
        %1486 = vmatpush1.msra.mxu0 0.0
        %1487 = vmatprep.mubr.f32.mxu0 0.0
        %1488 = vmatmul.mubr.f32.gmra.mrb[0].mxu0 %v1303
        %v1489 = vpop.f32.mrb[0].mxu0
        %v1490 = vadd.f32 %v1420, %v1489
        %v1491 = vpop.f32.mrb[0].mxu0
        %1492 = vdwg.mxu0
        %v1493 = vmax.f32 %v1490, 0.0
        %v1494 = vld [vmem:[#allocation4 + $0x310] sm:$0xff]
        %v1495 = vld [vmem:[#allocation4 + $0x318] sm:$0xff]
        %v1496 = vld [vmem:[#allocation4 + $0x320] sm:$0xff]
        %v1497 = vld [vmem:[#allocation4 + $0x328] sm:$0xff]
        %v1498 = vld [vmem:[#allocation4 + $0x330] sm:$0xff]
        %v1499 = vld [vmem:[#allocation4 + $0x338] sm:$0xff]
        %v1500 = vld [vmem:[#allocation4 + $0x340] sm:$0xff]
        %v1501 = vld [vmem:[#allocation4 + $0x348] sm:$0xff]
        %v1502 = vld [vmem:[#allocation4 + $0x350] sm:$0xff]
        %v1503 = vld [vmem:[#allocation4 + $0x358] sm:$0xff]
        %v1504 = vld [vmem:[#allocation4 + $0x360] sm:$0xff]
        %v1505 = vld [vmem:[#allocation4 + $0x368] sm:$0xff]
        %v1506 = vld [vmem:[#allocation4 + $0x370] sm:$0xff]
        %v1507 = vld [vmem:[#allocation4 + $0x378] sm:$0xff]
        %v1508 = vld [vmem:[#allocation4 + $0x380] sm:$0xff]
        %v1509 = vld [vmem:[#allocation4 + $0x388] sm:$0xff]
        %1510 = vmatprep.subr.mxu0 0.0
        %1511 = vmatpush1.msra.mxu0 %v1494
        %1512 = vmatprep.subr.mxu0 0.0
        %1513 = vmatpush1.msra.mxu0 %v1495
        %1514 = vmatprep.subr.mxu0 0.0
        %1515 = vmatpush1.msra.mxu0 %v1496
        %1516 = vmatprep.subr.mxu0 0.0
        %1517 = vmatpush1.msra.mxu0 %v1497
        %1518 = vmatprep.subr.mxu0 0.0
        %1519 = vmatpush1.msra.mxu0 %v1498
        %1520 = vmatprep.subr.mxu0 0.0
        %1521 = vmatpush1.msra.mxu0 %v1499
        %1522 = vmatprep.subr.mxu0 0.0
        %1523 = vmatpush1.msra.mxu0 %v1500
        %1524 = vmatprep.subr.mxu0 0.0
        %1525 = vmatpush1.msra.mxu0 %v1501
        %1526 = vmatprep.subr.mxu0 0.0
        %1527 = vmatpush1.msra.mxu0 %v1502
        %1528 = vmatprep.subr.mxu0 0.0
        %1529 = vmatpush1.msra.mxu0 %v1503
        %1530 = vmatprep.subr.mxu0 0.0
        %1531 = vmatpush1.msra.mxu0 %v1504
        %1532 = vmatprep.subr.mxu0 0.0
        %1533 = vmatpush1.msra.mxu0 %v1505
        %1534 = vmatprep.subr.mxu0 0.0
        %1535 = vmatpush1.msra.mxu0 %v1506
        %1536 = vmatprep.subr.mxu0 0.0
        %1537 = vmatpush1.msra.mxu0 %v1507
        %1538 = vmatprep.subr.mxu0 0.0
        %1539 = vmatpush1.msra.mxu0 %v1508
        %1540 = vmatprep.subr.mxu0 0.0
        %1541 = vmatpush1.msra.mxu0 %v1509
        %1542 = vmatprep.subr.mxu0 0.0
        %1543 = vmatpush1.msra.mxu0 0.0
        %1544 = vmatprep.subr.mxu0 0.0
        %1545 = vmatpush1.msra.mxu0 0.0
        %1546 = vmatprep.subr.mxu0 0.0
        %1547 = vmatpush1.msra.mxu0 0.0
        %1548 = vmatprep.subr.mxu0 0.0
        %1549 = vmatpush1.msra.mxu0 0.0
        %1550 = vmatprep.subr.mxu0 0.0
        %1551 = vmatpush1.msra.mxu0 0.0
        %1552 = vmatprep.subr.mxu0 0.0
        %1553 = vmatpush1.msra.mxu0 0.0
        %1554 = vmatprep.subr.mxu0 0.0
        %1555 = vmatpush1.msra.mxu0 0.0
        %1556 = vmatprep.subr.mxu0 0.0
        %1557 = vmatpush1.msra.mxu0 0.0
        %1558 = vmatprep.subr.mxu0 0.0
        %1559 = vmatpush1.msra.mxu0 0.0
        %1560 = vmatprep.subr.mxu0 0.0
        %1561 = vmatpush1.msra.mxu0 0.0
        %1562 = vmatprep.subr.mxu0 0.0
        %1563 = vmatpush1.msra.mxu0 0.0
        %1564 = vmatprep.subr.mxu0 0.0
        %1565 = vmatpush1.msra.mxu0 0.0
        %1566 = vmatprep.subr.mxu0 0.0
        %1567 = vmatpush1.msra.mxu0 0.0
        %1568 = vmatprep.subr.mxu0 0.0
        %1569 = vmatpush1.msra.mxu0 0.0
        %1570 = vmatprep.subr.mxu0 0.0
        %1571 = vmatpush1.msra.mxu0 0.0
        %1572 = vmatprep.subr.mxu0 0.0
        %1573 = vmatpush1.msra.mxu0 0.0
        %1574 = vmatprep.mubr.f32.mxu0 0.0
        %1575 = vmatmul.mubr.f32.gmra.mrb[0].mxu0 %v1493
        %v1576 = vpop.f32.mrb[0].mxu0
        %v1577 = vadd.f32 0.0, %v1576
        %v1578 = vpop.f32.mrb[0].mxu0
        %1579 = vdwg.mxu0
        %1580 = vmatprep.subr.mxu0 0.0
        %1581 = vmatpush1.msra.mxu0 %v799
        %1582 = vmatprep.subr.mxu0 0.0
        %1583 = vmatpush1.msra.mxu0 %v800
        %1584 = vmatprep.subr.mxu0 0.0
        %1585 = vmatpush1.msra.mxu0 %v801
        %1586 = vmatprep.subr.mxu0 0.0
        %1587 = vmatpush1.msra.mxu0 %v802
        %1588 = vmatprep.subr.mxu0 0.0
        %1589 = vmatpush1.msra.mxu0 %v803
        %1590 = vmatprep.subr.mxu0 0.0
        %1591 = vmatpush1.msra.mxu0 %v804
        %1592 = vmatprep.subr.mxu0 0.0
        %1593 = vmatpush1.msra.mxu0 %v805
        %1594 = vmatprep.subr.mxu0 0.0
        %1595 = vmatpush1.msra.mxu0 %v806
        %1596 = vmatprep.subr.mxu0 0.0
        %1597 = vmatpush1.msra.mxu0 %v807
        %1598 = vmatprep.subr.mxu0 0.0
        %1599 = vmatpush1.msra.mxu0 %v808
        %1600 = vmatprep.subr.mxu0 0.0
        %1601 = vmatpush1.msra.mxu0 %v809
        %1602 = vmatprep.subr.mxu0 0.0
        %1603 = vmatpush1.msra.mxu0 %v810
        %1604 = vmatprep.subr.mxu0 0.0
        %1605 = vmatpush1.msra.mxu0 %v811
        %1606 = vmatprep.subr.mxu0 0.0
        %1607 = vmatpush1.msra.mxu0 %v812
        %1608 = vmatprep.subr.mxu0 0.0
        %1609 = vmatpush1.msra.mxu0 %v813
        %1610 = vmatprep.subr.mxu0 0.0
        %1611 = vmatpush1.msra.mxu0 %v814
        %1612 = vmatprep.subr.mxu0 0.0
        %1613 = vmatpush1.msra.mxu0 0.0
        %1614 = vmatprep.subr.mxu0 0.0
        %1615 = vmatpush1.msra.mxu0 0.0
        %1616 = vmatprep.subr.mxu0 0.0
        %1617 = vmatpush1.msra.mxu0 0.0
        %1618 = vmatprep.subr.mxu0 0.0
        %1619 = vmatpush1.msra.mxu0 0.0
        %1620 = vmatprep.subr.mxu0 0.0
        %1621 = vmatpush1.msra.mxu0 0.0
        %1622 = vmatprep.subr.mxu0 0.0
        %1623 = vmatpush1.msra.mxu0 0.0
        %1624 = vmatprep.subr.mxu0 0.0
        %1625 = vmatpush1.msra.mxu0 0.0
        %1626 = vmatprep.subr.mxu0 0.0
        %1627 = vmatpush1.msra.mxu0 0.0
        %1628 = vmatprep.subr.mxu0 0.0
        %1629 = vmatpush1.msra.mxu0 0.0
        %1630 = vmatprep.subr.mxu0 0.0
        %1631 = vmatpush1.msra.mxu0 0.0
        %1632 = vmatprep.subr.mxu0 0.0
        %1633 = vmatpush1.msra.mxu0 0.0
        %1634 = vmatprep.subr.mxu0 0.0
        %1635 = vmatpush1.msra.mxu0 0.0
        %1636 = vmatprep.subr.mxu0 0.0
        %1637 = vmatpush1.msra.mxu0 0.0
        %1638 = vmatprep.subr.mxu0 0.0
        %1639 = vmatpush1.msra.mxu0 0.0
        %1640 = vmatprep.subr.mxu0 0.0
        %1641 = vmatpush1.msra.mxu0 0.0
        %1642 = vmatprep.subr.mxu0 0.0
        %1643 = vmatpush1.msra.mxu0 0.0
        %1644 = vmatprep.mubr.f32.mxu0 0.0
        %1645 = vmatmul.mubr.f32.gmra.mrb[0].mxu0 %v798
        %v1646 = vpop.f32.mrb[0].mxu0
        %v1647 = vadd.f32 %v1577, %v1646
        %v1648 = vpop.f32.mrb[0].mxu0
        %1649 = vdwg.mxu0
        %v1650 = vld [vmem:[#allocation2 + $0x1400] sm:$0xff]
        %v1651 = vld [vmem:[#allocation2 + $0x1408] sm:$0xff]
        %v1652 = vld [vmem:[#allocation2 + $0x1410] sm:$0xff]
        %v1653 = vld [vmem:[#allocation2 + $0x1418] sm:$0xff]
        %v1654 = vld [vmem:[#allocation2 + $0x1420] sm:$0xff]
        %v1655 = vld [vmem:[#allocation2 + $0x1428] sm:$0xff]
        %v1656 = vld [vmem:[#allocation2 + $0x1430] sm:$0xff]
        %v1657 = vld [vmem:[#allocation2 + $0x1438] sm:$0xff]
        %v1658 = vld [vmem:[#allocation2 + $0x1440] sm:$0xff]
        %v1659 = vld [vmem:[#allocation2 + $0x1448] sm:$0xff]
        %v1660 = vld [vmem:[#allocation2 + $0x1450] sm:$0xff]
        %v1661 = vld [vmem:[#allocation2 + $0x1458] sm:$0xff]
        %v1662 = vld [vmem:[#allocation2 + $0x1460] sm:$0xff]
        %v1663 = vld [vmem:[#allocation2 + $0x1468] sm:$0xff]
        %v1664 = vld [vmem:[#allocation2 + $0x1470] sm:$0xff]
        %v1665 = vld [vmem:[#allocation2 + $0x1478] sm:$0xff]
        %v1666 = vld [vmem:[#allocation2 + $0x1480] sm:$0xff]
        %v1667 = vld [vmem:[#allocation2 + $0x1488] sm:$0xff]
        %v1668 = vld [vmem:[#allocation2 + $0x1490] sm:$0xff]
        %v1669 = vld [vmem:[#allocation2 + $0x1498] sm:$0xff]
        %v1670 = vld [vmem:[#allocation2 + $0x14a0] sm:$0xff]
        %v1671 = vld [vmem:[#allocation2 + $0x14a8] sm:$0xff]
        %v1672 = vld [vmem:[#allocation2 + $0x14b0] sm:$0xff]
        %v1673 = vld [vmem:[#allocation2 + $0x14b8] sm:$0xff]
        %v1674 = vld [vmem:[#allocation2 + $0x14c0] sm:$0xff]
        %v1675 = vld [vmem:[#allocation2 + $0x14c8] sm:$0xff]
        %v1676 = vld [vmem:[#allocation2 + $0x14d0] sm:$0xff]
        %v1677 = vld [vmem:[#allocation2 + $0x14d8] sm:$0xff]
        %v1678 = vld [vmem:[#allocation2 + $0x14e0] sm:$0xff]
        %v1679 = vld [vmem:[#allocation2 + $0x14e8] sm:$0xff]
        %v1680 = vld [vmem:[#allocation2 + $0x14f0] sm:$0xff]
        %v1681 = vld [vmem:[#allocation2 + $0x14f8] sm:$0xff]
        %v1682 = vld [vmem:[#allocation2 + $0x1500] sm:$0xff]
        %v1683 = vld [vmem:[#allocation2 + $0x1508] sm:$0xff]
        %v1684 = vld [vmem:[#allocation2 + $0x1510] sm:$0xff]
        %v1685 = vld [vmem:[#allocation2 + $0x1518] sm:$0xff]
        %v1686 = vld [vmem:[#allocation2 + $0x1520] sm:$0xff]
        %v1687 = vld [vmem:[#allocation2 + $0x1528] sm:$0xff]
        %v1688 = vld [vmem:[#allocation2 + $0x1530] sm:$0xff]
        %v1689 = vld [vmem:[#allocation2 + $0x1538] sm:$0xff]
        %v1690 = vld [vmem:[#allocation2 + $0x1540] sm:$0xff]
        %v1691 = vld [vmem:[#allocation2 + $0x1548] sm:$0xff]
        %v1692 = vld [vmem:[#allocation2 + $0x1550] sm:$0xff]
        %v1693 = vld [vmem:[#allocation2 + $0x1558] sm:$0xff]
        %v1694 = vld [vmem:[#allocation2 + $0x1560] sm:$0xff]
        %v1695 = vld [vmem:[#allocation2 + $0x1568] sm:$0xff]
        %v1696 = vld [vmem:[#allocation2 + $0x1570] sm:$0xff]
        %v1697 = vld [vmem:[#allocation2 + $0x1578] sm:$0xff]
        %v1698 = vld [vmem:[#allocation2 + $0x1580] sm:$0xff]
        %v1699 = vld [vmem:[#allocation2 + $0x1588] sm:$0xff]
        %v1700 = vld [vmem:[#allocation2 + $0x1590] sm:$0xff]
        %v1701 = vld [vmem:[#allocation2 + $0x1598] sm:$0xff]
        %v1702 = vld [vmem:[#allocation2 + $0x15a0] sm:$0xff]
        %v1703 = vld [vmem:[#allocation2 + $0x15a8] sm:$0xff]
        %v1704 = vld [vmem:[#allocation2 + $0x15b0] sm:$0xff]
        %v1705 = vld [vmem:[#allocation2 + $0x15b8] sm:$0xff]
        %v1706 = vld [vmem:[#allocation2 + $0x15c0] sm:$0xff]
        %v1707 = vld [vmem:[#allocation2 + $0x15c8] sm:$0xff]
        %v1708 = vld [vmem:[#allocation2 + $0x15d0] sm:$0xff]
        %v1709 = vld [vmem:[#allocation2 + $0x15d8] sm:$0xff]
        %v1710 = vld [vmem:[#allocation2 + $0x15e0] sm:$0xff]
        %v1711 = vld [vmem:[#allocation2 + $0x15e8] sm:$0xff]
        %v1712 = vld [vmem:[#allocation2 + $0x15f0] sm:$0xff]
        %v1713 = vld [vmem:[#allocation2 + $0x15f8] sm:$0xff]
        %v1714 = vld [vmem:[#allocation2 + $0x1600] sm:$0xff]
        %v1715 = vld [vmem:[#allocation2 + $0x1608] sm:$0xff]
        %v1716 = vld [vmem:[#allocation2 + $0x1610] sm:$0xff]
        %v1717 = vld [vmem:[#allocation2 + $0x1618] sm:$0xff]
        %v1718 = vld [vmem:[#allocation2 + $0x1620] sm:$0xff]
        %v1719 = vld [vmem:[#allocation2 + $0x1628] sm:$0xff]
        %v1720 = vld [vmem:[#allocation2 + $0x1630] sm:$0xff]
        %v1721 = vld [vmem:[#allocation2 + $0x1638] sm:$0xff]
        %v1722 = vld [vmem:[#allocation2 + $0x1640] sm:$0xff]
        %v1723 = vld [vmem:[#allocation2 + $0x1648] sm:$0xff]
        %v1724 = vld [vmem:[#allocation2 + $0x1650] sm:$0xff]
        %v1725 = vld [vmem:[#allocation2 + $0x1658] sm:$0xff]
        %v1726 = vld [vmem:[#allocation2 + $0x1660] sm:$0xff]
        %v1727 = vld [vmem:[#allocation2 + $0x1668] sm:$0xff]
        %v1728 = vld [vmem:[#allocation2 + $0x1670] sm:$0xff]
        %v1729 = vld [vmem:[#allocation2 + $0x1678] sm:$0xff]
        %1730 = vmatprep.subr.mxu0 %v1651
        %1731 = vmatpush1.msra.mxu0 %v1650
        %1732 = vmatprep.subr.mxu0 %v1656
        %1733 = vmatpush1.msra.mxu0 %v1655
        %1734 = vmatprep.subr.mxu0 %v1661
        %1735 = vmatpush1.msra.mxu0 %v1660
        %1736 = vmatprep.subr.mxu0 %v1666
        %1737 = vmatpush1.msra.mxu0 %v1665
        %1738 = vmatprep.subr.mxu0 %v1671
        %1739 = vmatpush1.msra.mxu0 %v1670
        %1740 = vmatprep.subr.mxu0 %v1676
        %1741 = vmatpush1.msra.mxu0 %v1675
        %1742 = vmatprep.subr.mxu0 %v1681
        %1743 = vmatpush1.msra.mxu0 %v1680
        %1744 = vmatprep.subr.mxu0 %v1686
        %1745 = vmatpush1.msra.mxu0 %v1685
        %1746 = vmatprep.subr.mxu0 %v1691
        %1747 = vmatpush1.msra.mxu0 %v1690
        %1748 = vmatprep.subr.mxu0 %v1696
        %1749 = vmatpush1.msra.mxu0 %v1695
        %1750 = vmatprep.subr.mxu0 %v1701
        %1751 = vmatpush1.msra.mxu0 %v1700
        %1752 = vmatprep.subr.mxu0 %v1706
        %1753 = vmatpush1.msra.mxu0 %v1705
        %1754 = vmatprep.subr.mxu0 %v1711
        %1755 = vmatpush1.msra.mxu0 %v1710
        %1756 = vmatprep.subr.mxu0 %v1716
        %1757 = vmatpush1.msra.mxu0 %v1715
        %1758 = vmatprep.subr.mxu0 %v1721
        %1759 = vmatpush1.msra.mxu0 %v1720
        %1760 = vmatprep.subr.mxu0 %v1726
        %1761 = vmatpush1.msra.mxu0 %v1725
        %1762 = vmatprep.subr.mxu0 0.0
        %1763 = vmatpush1.msra.mxu0 0.0
        %1764 = vmatprep.subr.mxu0 0.0
        %1765 = vmatpush1.msra.mxu0 0.0
        %1766 = vmatprep.subr.mxu0 0.0
        %1767 = vmatpush1.msra.mxu0 0.0
        %1768 = vmatprep.subr.mxu0 0.0
        %1769 = vmatpush1.msra.mxu0 0.0
        %1770 = vmatprep.subr.mxu0 0.0
        %1771 = vmatpush1.msra.mxu0 0.0
        %1772 = vmatprep.subr.mxu0 0.0
        %1773 = vmatpush1.msra.mxu0 0.0
        %1774 = vmatprep.subr.mxu0 0.0
        %1775 = vmatpush1.msra.mxu0 0.0
        %1776 = vmatprep.subr.mxu0 0.0
        %1777 = vmatpush1.msra.mxu0 0.0
        %1778 = vmatprep.subr.mxu0 0.0
        %1779 = vmatpush1.msra.mxu0 0.0
        %1780 = vmatprep.subr.mxu0 0.0
        %1781 = vmatpush1.msra.mxu0 0.0
        %1782 = vmatprep.subr.mxu0 0.0
        %1783 = vmatpush1.msra.mxu0 0.0
        %1784 = vmatprep.subr.mxu0 0.0
        %1785 = vmatpush1.msra.mxu0 0.0
        %1786 = vmatprep.subr.mxu0 0.0
        %1787 = vmatpush1.msra.mxu0 0.0
        %1788 = vmatprep.subr.mxu0 0.0
        %1789 = vmatpush1.msra.mxu0 0.0
        %1790 = vmatprep.subr.mxu0 0.0
        %1791 = vmatpush1.msra.mxu0 0.0
        %1792 = vmatprep.subr.mxu0 0.0
        %1793 = vmatpush1.msra.mxu0 0.0
        %1794 = vmatprep.mubr.f32.mxu0 0.0
        %1795 = vmatmul.mubr.f32.gmra.mrb[0].mxu0 %v1493
        %v1796 = vpop.f32.mrb[0].mxu0
        %v1797 = vadd.f32 0.0, %v1796
        %v1798 = vpop.f32.mrb[0].mxu0
        %v1799 = vadd.f32 0.0, %v1798
        %1800 = vdwg.mxu0
        %1801 = vmatprep.subr.mxu0 %v1653
        %1802 = vmatpush1.msra.mxu0 %v1652
        %1803 = vmatprep.subr.mxu0 %v1658
        %1804 = vmatpush1.msra.mxu0 %v1657
        %1805 = vmatprep.subr.mxu0 %v1663
        %1806 = vmatpush1.msra.mxu0 %v1662
        %1807 = vmatprep.subr.mxu0 %v1668
        %1808 = vmatpush1.msra.mxu0 %v1667
        %1809 = vmatprep.subr.mxu0 %v1673
        %1810 = vmatpush1.msra.mxu0 %v1672
        %1811 = vmatprep.subr.mxu0 %v1678
        %1812 = vmatpush1.msra.mxu0 %v1677
        %1813 = vmatprep.subr.mxu0 %v1683
        %1814 = vmatpush1.msra.mxu0 %v1682
        %1815 = vmatprep.subr.mxu0 %v1688
        %1816 = vmatpush1.msra.mxu0 %v1687
        %1817 = vmatprep.subr.mxu0 %v1693
        %1818 = vmatpush1.msra.mxu0 %v1692
        %1819 = vmatprep.subr.mxu0 %v1698
        %1820 = vmatpush1.msra.mxu0 %v1697
        %1821 = vmatprep.subr.mxu0 %v1703
        %1822 = vmatpush1.msra.mxu0 %v1702
        %1823 = vmatprep.subr.mxu0 %v1708
        %1824 = vmatpush1.msra.mxu0 %v1707
        %1825 = vmatprep.subr.mxu0 %v1713
        %1826 = vmatpush1.msra.mxu0 %v1712
        %1827 = vmatprep.subr.mxu0 %v1718
        %1828 = vmatpush1.msra.mxu0 %v1717
        %1829 = vmatprep.subr.mxu0 %v1723
        %1830 = vmatpush1.msra.mxu0 %v1722
        %1831 = vmatprep.subr.mxu0 %v1728
        %1832 = vmatpush1.msra.mxu0 %v1727
        %1833 = vmatprep.subr.mxu0 0.0
        %1834 = vmatpush1.msra.mxu0 0.0
        %1835 = vmatprep.subr.mxu0 0.0
        %1836 = vmatpush1.msra.mxu0 0.0
        %1837 = vmatprep.subr.mxu0 0.0
        %1838 = vmatpush1.msra.mxu0 0.0
        %1839 = vmatprep.subr.mxu0 0.0
        %1840 = vmatpush1.msra.mxu0 0.0
        %1841 = vmatprep.subr.mxu0 0.0
        %1842 = vmatpush1.msra.mxu0 0.0
        %1843 = vmatprep.subr.mxu0 0.0
        %1844 = vmatpush1.msra.mxu0 0.0
        %1845 = vmatprep.subr.mxu0 0.0
        %1846 = vmatpush1.msra.mxu0 0.0
        %1847 = vmatprep.subr.mxu0 0.0
        %1848 = vmatpush1.msra.mxu0 0.0
        %1849 = vmatprep.subr.mxu0 0.0
        %1850 = vmatpush1.msra.mxu0 0.0
        %1851 = vmatprep.subr.mxu0 0.0
        %1852 = vmatpush1.msra.mxu0 0.0
        %1853 = vmatprep.subr.mxu0 0.0
        %1854 = vmatpush1.msra.mxu0 0.0
        %1855 = vmatprep.subr.mxu0 0.0
        %1856 = vmatpush1.msra.mxu0 0.0
        %1857 = vmatprep.subr.mxu0 0.0
        %1858 = vmatpush1.msra.mxu0 0.0
        %1859 = vmatprep.subr.mxu0 0.0
        %1860 = vmatpush1.msra.mxu0 0.0
        %1861 = vmatprep.subr.mxu0 0.0
        %1862 = vmatpush1.msra.mxu0 0.0
        %1863 = vmatprep.subr.mxu0 0.0
        %1864 = vmatpush1.msra.mxu0 0.0
        %1865 = vmatprep.mubr.f32.mxu0 0.0
        %1866 = vmatmul.mubr.f32.gmra.mrb[0].mxu0 %v1493
        %v1867 = vpop.f32.mrb[0].mxu0
        %v1868 = vadd.f32 0.0, %v1867
        %v1869 = vpop.f32.mrb[0].mxu0
        %v1870 = vadd.f32 0.0, %v1869
        %1871 = vdwg.mxu0
        %1872 = vmatprep.subr.mxu0 0.0
        %1873 = vmatpush1.msra.mxu0 %v1654
        %1874 = vmatprep.subr.mxu0 0.0
        %1875 = vmatpush1.msra.mxu0 %v1659
        %1876 = vmatprep.subr.mxu0 0.0
        %1877 = vmatpush1.msra.mxu0 %v1664
        %1878 = vmatprep.subr.mxu0 0.0
        %1879 = vmatpush1.msra.mxu0 %v1669
        %1880 = vmatprep.subr.mxu0 0.0
        %1881 = vmatpush1.msra.mxu0 %v1674
        %1882 = vmatprep.subr.mxu0 0.0
        %1883 = vmatpush1.msra.mxu0 %v1679
        %1884 = vmatprep.subr.mxu0 0.0
        %1885 = vmatpush1.msra.mxu0 %v1684
        %1886 = vmatprep.subr.mxu0 0.0
        %1887 = vmatpush1.msra.mxu0 %v1689
        %1888 = vmatprep.subr.mxu0 0.0
        %1889 = vmatpush1.msra.mxu0 %v1694
        %1890 = vmatprep.subr.mxu0 0.0
        %1891 = vmatpush1.msra.mxu0 %v1699
        %1892 = vmatprep.subr.mxu0 0.0
        %1893 = vmatpush1.msra.mxu0 %v1704
        %1894 = vmatprep.subr.mxu0 0.0
        %1895 = vmatpush1.msra.mxu0 %v1709
        %1896 = vmatprep.subr.mxu0 0.0
        %1897 = vmatpush1.msra.mxu0 %v1714
        %1898 = vmatprep.subr.mxu0 0.0
        %1899 = vmatpush1.msra.mxu0 %v1719
        %1900 = vmatprep.subr.mxu0 0.0
        %1901 = vmatpush1.msra.mxu0 %v1724
        %1902 = vmatprep.subr.mxu0 0.0
        %1903 = vmatpush1.msra.mxu0 %v1729
        %1904 = vmatprep.subr.mxu0 0.0
        %1905 = vmatpush1.msra.mxu0 0.0
        %1906 = vmatprep.subr.mxu0 0.0
        %1907 = vmatpush1.msra.mxu0 0.0
        %1908 = vmatprep.subr.mxu0 0.0
        %1909 = vmatpush1.msra.mxu0 0.0
        %1910 = vmatprep.subr.mxu0 0.0
        %1911 = vmatpush1.msra.mxu0 0.0
        %1912 = vmatprep.subr.mxu0 0.0
        %1913 = vmatpush1.msra.mxu0 0.0
        %1914 = vmatprep.subr.mxu0 0.0
        %1915 = vmatpush1.msra.mxu0 0.0
        %1916 = vmatprep.subr.mxu0 0.0
        %1917 = vmatpush1.msra.mxu0 0.0
        %1918 = vmatprep.subr.mxu0 0.0
        %1919 = vmatpush1.msra.mxu0 0.0
        %1920 = vmatprep.subr.mxu0 0.0
        %1921 = vmatpush1.msra.mxu0 0.0
        %1922 = vmatprep.subr.mxu0 0.0
        %1923 = vmatpush1.msra.mxu0 0.0
        %1924 = vmatprep.subr.mxu0 0.0
        %1925 = vmatpush1.msra.mxu0 0.0
        %1926 = vmatprep.subr.mxu0 0.0
        %1927 = vmatpush1.msra.mxu0 0.0
        %1928 = vmatprep.subr.mxu0 0.0
        %1929 = vmatpush1.msra.mxu0 0.0
        %1930 = vmatprep.subr.mxu0 0.0
        %1931 = vmatpush1.msra.mxu0 0.0
        %1932 = vmatprep.subr.mxu0 0.0
        %1933 = vmatpush1.msra.mxu0 0.0
        %1934 = vmatprep.subr.mxu0 0.0
        %1935 = vmatpush1.msra.mxu0 0.0
        %1936 = vmatprep.mubr.f32.mxu0 0.0
        %1937 = vmatmul.mubr.f32.gmra.mrb[0].mxu0 %v1493
        %v1938 = vpop.f32.mrb[0].mxu0
        %v1939 = vadd.f32 0.0, %v1938
        %v1940 = vpop.f32.mrb[0].mxu0
        %1941 = vdwg.mxu0
        %v1942 = vlaneseq
        %v1943 = vshrl.u32 %v1942, 7
        %v1944 = vsub.s32 5, %v1943
        %v1945 = vrot.slane %v194, %v1944
        %v1946 = vlaneseq
        %v1947 = vshrl.u32 %v1946, 7
        %v1948 = vsub.s32 6, %v1947
        %v1949 = vrot.slane %v194, %v1948
        %1952 = vmatprep.subr.mxu0 %v486
        %1953 = vmatpush1.msra.mxu0 %v485
        %1954 = vmatprep.subr.mxu0 %v491
        %1955 = vmatpush1.msra.mxu0 %v490
        %1956 = vmatprep.subr.mxu0 %v496
        %1957 = vmatpush1.msra.mxu0 %v495
        %1958 = vmatprep.subr.mxu0 %v501
        %1959 = vmatpush1.msra.mxu0 %v500
        %1960 = vmatprep.subr.mxu0 %v506
        %1961 = vmatpush1.msra.mxu0 %v505
        %1962 = vmatprep.subr.mxu0 %v511
        %1963 = vmatpush1.msra.mxu0 %v510
        %1964 = vmatprep.subr.mxu0 %v516
        %1965 = vmatpush1.msra.mxu0 %v515
        %1966 = vmatprep.subr.mxu0 %v521
        %1967 = vmatpush1.msra.mxu0 %v520
        %1968 = vmatprep.subr.mxu0 %v526
        %1969 = vmatpush1.msra.mxu0 %v525
        %1970 = vmatprep.subr.mxu0 %v531
        %1971 = vmatpush1.msra.mxu0 %v530
        %1972 = vmatprep.subr.mxu0 %v536
        %1973 = vmatpush1.msra.mxu0 %v535
        %1974 = vmatprep.subr.mxu0 %v541
        %1975 = vmatpush1.msra.mxu0 %v540
        %1976 = vmatprep.subr.mxu0 %v546
        %1977 = vmatpush1.msra.mxu0 %v545
        %1978 = vmatprep.subr.mxu0 %v551
        %1979 = vmatpush1.msra.mxu0 %v550
        %1980 = vmatprep.subr.mxu0 %v556
        %1981 = vmatpush1.msra.mxu0 %v555
        %1982 = vmatprep.subr.mxu0 %v561
        %1983 = vmatpush1.msra.mxu0 %v560
        %1984 = vmatprep.subr.mxu0 %v566
        %1985 = vmatpush1.msra.mxu0 %v565
        %1986 = vmatprep.subr.mxu0 %v571
        %1987 = vmatpush1.msra.mxu0 %v570
        %1988 = vmatprep.subr.mxu0 %v576
        %1989 = vmatpush1.msra.mxu0 %v575
        %1990 = vmatprep.subr.mxu0 %v581
        %1991 = vmatpush1.msra.mxu0 %v580
        %1992 = vmatprep.subr.mxu0 %v586
        %1993 = vmatpush1.msra.mxu0 %v585
        %1994 = vmatprep.subr.mxu0 %v591
        %1995 = vmatpush1.msra.mxu0 %v590
        %1996 = vmatprep.subr.mxu0 %v596
        %1997 = vmatpush1.msra.mxu0 %v595
        %1998 = vmatprep.subr.mxu0 %v601
        %1999 = vmatpush1.msra.mxu0 %v600
        %2000 = vmatprep.subr.mxu0 %v606
        %2001 = vmatpush1.msra.mxu0 %v605
        %2002 = vmatprep.subr.mxu0 %v611
        %2003 = vmatpush1.msra.mxu0 %v610
        %2004 = vmatprep.subr.mxu0 %v616
        %2005 = vmatpush1.msra.mxu0 %v615
        %2006 = vmatprep.subr.mxu0 %v621
        %2007 = vmatpush1.msra.mxu0 %v620
        %2008 = vmatprep.subr.mxu0 %v626
        %2009 = vmatpush1.msra.mxu0 %v625
        %2010 = vmatprep.subr.mxu0 %v631
        %2011 = vmatpush1.msra.mxu0 %v630
        %2012 = vmatprep.subr.mxu0 %v636
        %2013 = vmatpush1.msra.mxu0 %v635
        %2014 = vmatprep.subr.mxu0 %v641
        %2015 = vmatpush1.msra.mxu0 %v640
        %2016 = vmatprep.mubr.f32.mxu0 %v1949
        %2017 = vmatmul.mubr.f32.gmra.mrb[0].mxu0 %v1945
        %v2018 = vpop.f32.mrb[0].mxu0
        %v2019 = vadd.f32 %v1797, %v2018
        %v2020 = vpop.f32.mrb[0].mxu0
        %v2021 = vadd.f32 %v1799, %v2020
        %2022 = vdwg.mxu0
        %2023 = vmatprep.subr.mxu0 %v488
        %2024 = vmatpush1.msra.mxu0 %v487
        %2025 = vmatprep.subr.mxu0 %v493
        %2026 = vmatpush1.msra.mxu0 %v492
        %2027 = vmatprep.subr.mxu0 %v498
        %2028 = vmatpush1.msra.mxu0 %v497
        %2029 = vmatprep.subr.mxu0 %v503
        %2030 = vmatpush1.msra.mxu0 %v502
        %2031 = vmatprep.subr.mxu0 %v508
        %2032 = vmatpush1.msra.mxu0 %v507
        %2033 = vmatprep.subr.mxu0 %v513
        %2034 = vmatpush1.msra.mxu0 %v512
        %2035 = vmatprep.subr.mxu0 %v518
        %2036 = vmatpush1.msra.mxu0 %v517
        %2037 = vmatprep.subr.mxu0 %v523
        %2038 = vmatpush1.msra.mxu0 %v522
        %2039 = vmatprep.subr.mxu0 %v528
        %2040 = vmatpush1.msra.mxu0 %v527
        %2041 = vmatprep.subr.mxu0 %v533
        %2042 = vmatpush1.msra.mxu0 %v532
        %2043 = vmatprep.subr.mxu0 %v538
        %2044 = vmatpush1.msra.mxu0 %v537
        %2045 = vmatprep.subr.mxu0 %v543
        %2046 = vmatpush1.msra.mxu0 %v542
        %2047 = vmatprep.subr.mxu0 %v548
        %2048 = vmatpush1.msra.mxu0 %v547
        %2049 = vmatprep.subr.mxu0 %v553
        %2050 = vmatpush1.msra.mxu0 %v552
        %2051 = vmatprep.subr.mxu0 %v558
        %2052 = vmatpush1.msra.mxu0 %v557
        %2053 = vmatprep.subr.mxu0 %v563
        %2054 = vmatpush1.msra.mxu0 %v562
        %2055 = vmatprep.subr.mxu0 %v568
        %2056 = vmatpush1.msra.mxu0 %v567
        %2057 = vmatprep.subr.mxu0 %v573
        %2058 = vmatpush1.msra.mxu0 %v572
        %2059 = vmatprep.subr.mxu0 %v578
        %2060 = vmatpush1.msra.mxu0 %v577
        %2061 = vmatprep.subr.mxu0 %v583
        %2062 = vmatpush1.msra.mxu0 %v582
        %2063 = vmatprep.subr.mxu0 %v588
        %2064 = vmatpush1.msra.mxu0 %v587
        %2065 = vmatprep.subr.mxu0 %v593
        %2066 = vmatpush1.msra.mxu0 %v592
        %2067 = vmatprep.subr.mxu0 %v598
        %2068 = vmatpush1.msra.mxu0 %v597
        %2069 = vmatprep.subr.mxu0 %v603
        %2070 = vmatpush1.msra.mxu0 %v602
        %2071 = vmatprep.subr.mxu0 %v608
        %2072 = vmatpush1.msra.mxu0 %v607
        %2073 = vmatprep.subr.mxu0 %v613
        %2074 = vmatpush1.msra.mxu0 %v612
        %2075 = vmatprep.subr.mxu0 %v618
        %2076 = vmatpush1.msra.mxu0 %v617
        %2077 = vmatprep.subr.mxu0 %v623
        %2078 = vmatpush1.msra.mxu0 %v622
        %2079 = vmatprep.subr.mxu0 %v628
        %2080 = vmatpush1.msra.mxu0 %v627
        %2081 = vmatprep.subr.mxu0 %v633
        %2082 = vmatpush1.msra.mxu0 %v632
        %2083 = vmatprep.subr.mxu0 %v638
        %2084 = vmatpush1.msra.mxu0 %v637
        %2085 = vmatprep.subr.mxu0 %v643
        %2086 = vmatpush1.msra.mxu0 %v642
        %2087 = vmatprep.mubr.f32.mxu0 %v1949
        %2088 = vmatmul.mubr.f32.gmra.mrb[0].mxu0 %v1945
        %v2089 = vpop.f32.mrb[0].mxu0
        %v2090 = vadd.f32 %v1868, %v2089
        %v2091 = vpop.f32.mrb[0].mxu0
        %v2092 = vadd.f32 %v1870, %v2091
        %2093 = vdwg.mxu0
        %2094 = vmatprep.subr.mxu0 0.0
        %2095 = vmatpush1.msra.mxu0 %v489
        %2096 = vmatprep.subr.mxu0 0.0
        %2097 = vmatpush1.msra.mxu0 %v494
        %2098 = vmatprep.subr.mxu0 0.0
        %2099 = vmatpush1.msra.mxu0 %v499
        %2100 = vmatprep.subr.mxu0 0.0
        %2101 = vmatpush1.msra.mxu0 %v504
        %2102 = vmatprep.subr.mxu0 0.0
        %2103 = vmatpush1.msra.mxu0 %v509
        %2104 = vmatprep.subr.mxu0 0.0
        %2105 = vmatpush1.msra.mxu0 %v514
        %2106 = vmatprep.subr.mxu0 0.0
        %2107 = vmatpush1.msra.mxu0 %v519
        %2108 = vmatprep.subr.mxu0 0.0
        %2109 = vmatpush1.msra.mxu0 %v524
        %2110 = vmatprep.subr.mxu0 0.0
        %2111 = vmatpush1.msra.mxu0 %v529
        %2112 = vmatprep.subr.mxu0 0.0
        %2113 = vmatpush1.msra.mxu0 %v534
        %2114 = vmatprep.subr.mxu0 0.0
        %2115 = vmatpush1.msra.mxu0 %v539
        %2116 = vmatprep.subr.mxu0 0.0
        %2117 = vmatpush1.msra.mxu0 %v544
        %2118 = vmatprep.subr.mxu0 0.0
        %2119 = vmatpush1.msra.mxu0 %v549
        %2120 = vmatprep.subr.mxu0 0.0
        %2121 = vmatpush1.msra.mxu0 %v554
        %2122 = vmatprep.subr.mxu0 0.0
        %2123 = vmatpush1.msra.mxu0 %v559
        %2124 = vmatprep.subr.mxu0 0.0
        %2125 = vmatpush1.msra.mxu0 %v564
        %2126 = vmatprep.subr.mxu0 0.0
        %2127 = vmatpush1.msra.mxu0 %v569
        %2128 = vmatprep.subr.mxu0 0.0
        %2129 = vmatpush1.msra.mxu0 %v574
        %2130 = vmatprep.subr.mxu0 0.0
        %2131 = vmatpush1.msra.mxu0 %v579
        %2132 = vmatprep.subr.mxu0 0.0
        %2133 = vmatpush1.msra.mxu0 %v584
        %2134 = vmatprep.subr.mxu0 0.0
        %2135 = vmatpush1.msra.mxu0 %v589
        %2136 = vmatprep.subr.mxu0 0.0
        %2137 = vmatpush1.msra.mxu0 %v594
        %2138 = vmatprep.subr.mxu0 0.0
        %2139 = vmatpush1.msra.mxu0 %v599
        %2140 = vmatprep.subr.mxu0 0.0
        %2141 = vmatpush1.msra.mxu0 %v604
        %2142 = vmatprep.subr.mxu0 0.0
        %2143 = vmatpush1.msra.mxu0 %v609
        %2144 = vmatprep.subr.mxu0 0.0
        %2145 = vmatpush1.msra.mxu0 %v614
        %2146 = vmatprep.subr.mxu0 0.0
        %2147 = vmatpush1.msra.mxu0 %v619
        %2148 = vmatprep.subr.mxu0 0.0
        %2149 = vmatpush1.msra.mxu0 %v624
        %2150 = vmatprep.subr.mxu0 0.0
        %2151 = vmatpush1.msra.mxu0 %v629
        %2152 = vmatprep.subr.mxu0 0.0
        %2153 = vmatpush1.msra.mxu0 %v634
        %2154 = vmatprep.subr.mxu0 0.0
        %2155 = vmatpush1.msra.mxu0 %v639
        %2156 = vmatprep.subr.mxu0 0.0
        %2157 = vmatpush1.msra.mxu0 %v644
        %2158 = vmatprep.mubr.f32.mxu0 %v1949
        %2159 = vmatmul.mubr.f32.gmra.mrb[0].mxu0 %v1945
        %v2160 = vpop.f32.mrb[0].mxu0
        %v2161 = vadd.f32 %v1939, %v2160
        %v2162 = vpop.f32.mrb[0].mxu0
        %2163 = vdwg.mxu0
        %v2164 = vmax.f32 %v2019, 0.0
        %v2165 = vmax.f32 %v2021, 0.0
        %v2166 = vmax.f32 %v2090, 0.0
        %v2167 = vmax.f32 %v2092, 0.0
        %v2168 = vmax.f32 %v2161, 0.0
        %v2169 = vld [vmem:[#allocation4 + $0x390] sm:$0xff]
        %v2170 = vld [vmem:[#allocation4 + $0x398] sm:$0xff]
        %v2171 = vld [vmem:[#allocation4 + $0x3a0] sm:$0xff]
        %v2172 = vld [vmem:[#allocation4 + $0x3a8] sm:$0xff]
        %v2173 = vld [vmem:[#allocation4 + $0x3b0] sm:$0xff]
        %v2174 = vld [vmem:[#allocation4 + $0x3b8] sm:$0xff]
        %v2175 = vld [vmem:[#allocation4 + $0x3c0] sm:$0xff]
        %v2176 = vld [vmem:[#allocation4 + $0x3c8] sm:$0xff]
        %v2177 = vld [vmem:[#allocation4 + $0x3d0] sm:$0xff]
        %v2178 = vld [vmem:[#allocation4 + $0x3d8] sm:$0xff]
        %v2179 = vld [vmem:[#allocation4 + $0x3e0] sm:$0xff]
        %v2180 = vld [vmem:[#allocation4 + $0x3e8] sm:$0xff]
        %v2181 = vld [vmem:[#allocation4 + $0x3f0] sm:$0xff]
        %v2182 = vld [vmem:[#allocation4 + $0x3f8] sm:$0xff]
        %v2183 = vld [vmem:[#allocation4 + $0x400] sm:$0xff]
        %v2184 = vld [vmem:[#allocation4 + $0x408] sm:$0xff]
        %v2185 = vld [vmem:[#allocation4 + $0x410] sm:$0xff]
        %v2186 = vld [vmem:[#allocation4 + $0x418] sm:$0xff]
        %v2187 = vld [vmem:[#allocation4 + $0x420] sm:$0xff]
        %v2188 = vld [vmem:[#allocation4 + $0x428] sm:$0xff]
        %v2189 = vld [vmem:[#allocation4 + $0x430] sm:$0xff]
        %v2190 = vld [vmem:[#allocation4 + $0x438] sm:$0xff]
        %v2191 = vld [vmem:[#allocation4 + $0x440] sm:$0xff]
        %v2192 = vld [vmem:[#allocation4 + $0x448] sm:$0xff]
        %v2193 = vld [vmem:[#allocation4 + $0x450] sm:$0xff]
        %v2194 = vld [vmem:[#allocation4 + $0x458] sm:$0xff]
        %v2195 = vld [vmem:[#allocation4 + $0x460] sm:$0xff]
        %v2196 = vld [vmem:[#allocation4 + $0x468] sm:$0xff]
        %v2197 = vld [vmem:[#allocation4 + $0x470] sm:$0xff]
        %v2198 = vld [vmem:[#allocation4 + $0x478] sm:$0xff]
        %v2199 = vld [vmem:[#allocation4 + $0x480] sm:$0xff]
        %v2200 = vld [vmem:[#allocation4 + $0x488] sm:$0xff]
        %v2201 = vld [vmem:[#allocation4 + $0x490] sm:$0xff]
        %v2202 = vld [vmem:[#allocation4 + $0x498] sm:$0xff]
        %v2203 = vld [vmem:[#allocation4 + $0x4a0] sm:$0xff]
        %v2204 = vld [vmem:[#allocation4 + $0x4a8] sm:$0xff]
        %v2205 = vld [vmem:[#allocation4 + $0x4b0] sm:$0xff]
        %v2206 = vld [vmem:[#allocation4 + $0x4b8] sm:$0xff]
        %v2207 = vld [vmem:[#allocation4 + $0x4c0] sm:$0xff]
        %v2208 = vld [vmem:[#allocation4 + $0x4c8] sm:$0xff]
        %v2209 = vld [vmem:[#allocation4 + $0x4d0] sm:$0xff]
        %v2210 = vld [vmem:[#allocation4 + $0x4d8] sm:$0xff]
        %v2211 = vld [vmem:[#allocation4 + $0x4e0] sm:$0xff]
        %v2212 = vld [vmem:[#allocation4 + $0x4e8] sm:$0xff]
        %v2213 = vld [vmem:[#allocation4 + $0x4f0] sm:$0xff]
        %v2214 = vld [vmem:[#allocation4 + $0x4f8] sm:$0xff]
        %v2215 = vld [vmem:[#allocation4 + $0x500] sm:$0xff]
        %v2216 = vld [vmem:[#allocation4 + $0x508] sm:$0xff]
        %v2217 = vld [vmem:[#allocation4 + $0x510] sm:$0xff]
        %v2218 = vld [vmem:[#allocation4 + $0x518] sm:$0xff]
        %v2219 = vld [vmem:[#allocation4 + $0x520] sm:$0xff]
        %v2220 = vld [vmem:[#allocation4 + $0x528] sm:$0xff]
        %v2221 = vld [vmem:[#allocation4 + $0x530] sm:$0xff]
        %v2222 = vld [vmem:[#allocation4 + $0x538] sm:$0xff]
        %v2223 = vld [vmem:[#allocation4 + $0x540] sm:$0xff]
        %v2224 = vld [vmem:[#allocation4 + $0x548] sm:$0xff]
        %v2225 = vld [vmem:[#allocation4 + $0x550] sm:$0xff]
        %v2226 = vld [vmem:[#allocation4 + $0x558] sm:$0xff]
        %v2227 = vld [vmem:[#allocation4 + $0x560] sm:$0xff]
        %v2228 = vld [vmem:[#allocation4 + $0x568] sm:$0xff]
        %v2229 = vld [vmem:[#allocation4 + $0x570] sm:$0xff]
        %v2230 = vld [vmem:[#allocation4 + $0x578] sm:$0xff]
        %v2231 = vld [vmem:[#allocation4 + $0x580] sm:$0xff]
        %v2232 = vld [vmem:[#allocation4 + $0x588] sm:$0xff]
        %v2233 = vld [vmem:[#allocation4 + $0x590] sm:$0xff]
        %v2234 = vld [vmem:[#allocation4 + $0x598] sm:$0xff]
        %v2235 = vld [vmem:[#allocation4 + $0x5a0] sm:$0xff]
        %v2236 = vld [vmem:[#allocation4 + $0x5a8] sm:$0xff]
        %v2237 = vld [vmem:[#allocation4 + $0x5b0] sm:$0xff]
        %v2238 = vld [vmem:[#allocation4 + $0x5b8] sm:$0xff]
        %v2239 = vld [vmem:[#allocation4 + $0x5c0] sm:$0xff]
        %v2240 = vld [vmem:[#allocation4 + $0x5c8] sm:$0xff]
        %v2241 = vld [vmem:[#allocation4 + $0x5d0] sm:$0xff]
        %v2242 = vld [vmem:[#allocation4 + $0x5d8] sm:$0xff]
        %v2243 = vld [vmem:[#allocation4 + $0x5e0] sm:$0xff]
        %v2244 = vld [vmem:[#allocation4 + $0x5e8] sm:$0xff]
        %v2245 = vld [vmem:[#allocation4 + $0x5f0] sm:$0xff]
        %v2246 = vld [vmem:[#allocation4 + $0x5f8] sm:$0xff]
        %v2247 = vld [vmem:[#allocation4 + $0x600] sm:$0xff]
        %v2248 = vld [vmem:[#allocation4 + $0x608] sm:$0xff]
        %v2249 = vld [vmem:[#allocation4 + $0x610] sm:$0x1]
        %2250 = vmatprep.subr.mxu0 0.0
        %2251 = vmatpush1.msra.mxu0 %v2169
        %2252 = vmatprep.subr.mxu0 0.0
        %2253 = vmatpush1.msra.mxu0 %v2170
        %2254 = vmatprep.subr.mxu0 0.0
        %2255 = vmatpush1.msra.mxu0 %v2171
        %2256 = vmatprep.subr.mxu0 0.0
        %2257 = vmatpush1.msra.mxu0 %v2172
        %2258 = vmatprep.subr.mxu0 0.0
        %2259 = vmatpush1.msra.mxu0 %v2173
        %2260 = vmatprep.subr.mxu0 0.0
        %2261 = vmatpush1.msra.mxu0 %v2174
        %2262 = vmatprep.subr.mxu0 0.0
        %2263 = vmatpush1.msra.mxu0 %v2175
        %2264 = vmatprep.subr.mxu0 0.0
        %2265 = vmatpush1.msra.mxu0 %v2176
        %2266 = vmatprep.subr.mxu0 0.0
        %2267 = vmatpush1.msra.mxu0 %v2177
        %2268 = vmatprep.subr.mxu0 0.0
        %2269 = vmatpush1.msra.mxu0 %v2178
        %2270 = vmatprep.subr.mxu0 0.0
        %2271 = vmatpush1.msra.mxu0 %v2179
        %2272 = vmatprep.subr.mxu0 0.0
        %2273 = vmatpush1.msra.mxu0 %v2180
        %2274 = vmatprep.subr.mxu0 0.0
        %2275 = vmatpush1.msra.mxu0 %v2181
        %2276 = vmatprep.subr.mxu0 0.0
        %2277 = vmatpush1.msra.mxu0 %v2182
        %2278 = vmatprep.subr.mxu0 0.0
        %2279 = vmatpush1.msra.mxu0 %v2183
        %2280 = vmatprep.subr.mxu0 0.0
        %2281 = vmatpush1.msra.mxu0 %v2184
        %2282 = vmatprep.subr.mxu0 0.0
        %2283 = vmatpush1.msra.mxu0 %v2185
        %2284 = vmatprep.subr.mxu0 0.0
        %2285 = vmatpush1.msra.mxu0 %v2186
        %2286 = vmatprep.subr.mxu0 0.0
        %2287 = vmatpush1.msra.mxu0 %v2187
        %2288 = vmatprep.subr.mxu0 0.0
        %2289 = vmatpush1.msra.mxu0 %v2188
        %2290 = vmatprep.subr.mxu0 0.0
        %2291 = vmatpush1.msra.mxu0 %v2189
        %2292 = vmatprep.subr.mxu0 0.0
        %2293 = vmatpush1.msra.mxu0 %v2190
        %2294 = vmatprep.subr.mxu0 0.0
        %2295 = vmatpush1.msra.mxu0 %v2191
        %2296 = vmatprep.subr.mxu0 0.0
        %2297 = vmatpush1.msra.mxu0 %v2192
        %2298 = vmatprep.subr.mxu0 0.0
        %2299 = vmatpush1.msra.mxu0 %v2193
        %2300 = vmatprep.subr.mxu0 0.0
        %2301 = vmatpush1.msra.mxu0 %v2194
        %2302 = vmatprep.subr.mxu0 0.0
        %2303 = vmatpush1.msra.mxu0 %v2195
        %2304 = vmatprep.subr.mxu0 0.0
        %2305 = vmatpush1.msra.mxu0 %v2196
        %2306 = vmatprep.subr.mxu0 0.0
        %2307 = vmatpush1.msra.mxu0 %v2197
        %2308 = vmatprep.subr.mxu0 0.0
        %2309 = vmatpush1.msra.mxu0 %v2198
        %2310 = vmatprep.subr.mxu0 0.0
        %2311 = vmatpush1.msra.mxu0 %v2199
        %2312 = vmatprep.subr.mxu0 0.0
        %2313 = vmatpush1.msra.mxu0 %v2200
        %2314 = vmatprep.mubr.f32.mxu0 %v2165
        %2315 = vmatmul.mubr.f32.gmra.mrb[0].mxu0 %v2164
        %v2316 = vpop.f32.mrb[0].mxu0
        %v2317 = vadd.f32 %v2249, %v2316
        %v2318 = vpop.f32.mrb[0].mxu0
        %2319 = vdwg.mxu0
        %2320 = vmatprep.subr.mxu0 0.0
        %2321 = vmatpush1.msra.mxu0 %v2201
        %2322 = vmatprep.subr.mxu0 0.0
        %2323 = vmatpush1.msra.mxu0 %v2202
        %2324 = vmatprep.subr.mxu0 0.0
        %2325 = vmatpush1.msra.mxu0 %v2203
        %2326 = vmatprep.subr.mxu0 0.0
        %2327 = vmatpush1.msra.mxu0 %v2204
        %2328 = vmatprep.subr.mxu0 0.0
        %2329 = vmatpush1.msra.mxu0 %v2205
        %2330 = vmatprep.subr.mxu0 0.0
        %2331 = vmatpush1.msra.mxu0 %v2206
        %2332 = vmatprep.subr.mxu0 0.0
        %2333 = vmatpush1.msra.mxu0 %v2207
        %2334 = vmatprep.subr.mxu0 0.0
        %2335 = vmatpush1.msra.mxu0 %v2208
        %2336 = vmatprep.subr.mxu0 0.0
        %2337 = vmatpush1.msra.mxu0 %v2209
        %2338 = vmatprep.subr.mxu0 0.0
        %2339 = vmatpush1.msra.mxu0 %v2210
        %2340 = vmatprep.subr.mxu0 0.0
        %2341 = vmatpush1.msra.mxu0 %v2211
        %2342 = vmatprep.subr.mxu0 0.0
        %2343 = vmatpush1.msra.mxu0 %v2212
        %2344 = vmatprep.subr.mxu0 0.0
        %2345 = vmatpush1.msra.mxu0 %v2213
        %2346 = vmatprep.subr.mxu0 0.0
        %2347 = vmatpush1.msra.mxu0 %v2214
        %2348 = vmatprep.subr.mxu0 0.0
        %2349 = vmatpush1.msra.mxu0 %v2215
        %2350 = vmatprep.subr.mxu0 0.0
        %2351 = vmatpush1.msra.mxu0 %v2216
        %2352 = vmatprep.subr.mxu0 0.0
        %2353 = vmatpush1.msra.mxu0 %v2217
        %2354 = vmatprep.subr.mxu0 0.0
        %2355 = vmatpush1.msra.mxu0 %v2218
        %2356 = vmatprep.subr.mxu0 0.0
        %2357 = vmatpush1.msra.mxu0 %v2219
        %2358 = vmatprep.subr.mxu0 0.0
        %2359 = vmatpush1.msra.mxu0 %v2220
        %2360 = vmatprep.subr.mxu0 0.0
        %2361 = vmatpush1.msra.mxu0 %v2221
        %2362 = vmatprep.subr.mxu0 0.0
        %2363 = vmatpush1.msra.mxu0 %v2222
        %2364 = vmatprep.subr.mxu0 0.0
        %2365 = vmatpush1.msra.mxu0 %v2223
        %2366 = vmatprep.subr.mxu0 0.0
        %2367 = vmatpush1.msra.mxu0 %v2224
        %2368 = vmatprep.subr.mxu0 0.0
        %2369 = vmatpush1.msra.mxu0 %v2225
        %2370 = vmatprep.subr.mxu0 0.0
        %2371 = vmatpush1.msra.mxu0 %v2226
        %2372 = vmatprep.subr.mxu0 0.0
        %2373 = vmatpush1.msra.mxu0 %v2227
        %2374 = vmatprep.subr.mxu0 0.0
        %2375 = vmatpush1.msra.mxu0 %v2228
        %2376 = vmatprep.subr.mxu0 0.0
        %2377 = vmatpush1.msra.mxu0 %v2229
        %2378 = vmatprep.subr.mxu0 0.0
        %2379 = vmatpush1.msra.mxu0 %v2230
        %2380 = vmatprep.subr.mxu0 0.0
        %2381 = vmatpush1.msra.mxu0 %v2231
        %2382 = vmatprep.subr.mxu0 0.0
        %2383 = vmatpush1.msra.mxu0 %v2232
        %2384 = vmatprep.mubr.f32.mxu0 %v2167
        %2385 = vmatmul.mubr.f32.gmra.mrb[0].mxu0 %v2166
        %v2386 = vpop.f32.mrb[0].mxu0
        %v2387 = vadd.f32 %v2317, %v2386
        %v2388 = vpop.f32.mrb[0].mxu0
        %2389 = vdwg.mxu0
        %2390 = vmatprep.subr.mxu0 0.0
        %2391 = vmatpush1.msra.mxu0 %v2233
        %2392 = vmatprep.subr.mxu0 0.0
        %2393 = vmatpush1.msra.mxu0 %v2234
        %2394 = vmatprep.subr.mxu0 0.0
        %2395 = vmatpush1.msra.mxu0 %v2235
        %2396 = vmatprep.subr.mxu0 0.0
        %2397 = vmatpush1.msra.mxu0 %v2236
        %2398 = vmatprep.subr.mxu0 0.0
        %2399 = vmatpush1.msra.mxu0 %v2237
        %2400 = vmatprep.subr.mxu0 0.0
        %2401 = vmatpush1.msra.mxu0 %v2238
        %2402 = vmatprep.subr.mxu0 0.0
        %2403 = vmatpush1.msra.mxu0 %v2239
        %2404 = vmatprep.subr.mxu0 0.0
        %2405 = vmatpush1.msra.mxu0 %v2240
        %2406 = vmatprep.subr.mxu0 0.0
        %2407 = vmatpush1.msra.mxu0 %v2241
        %2408 = vmatprep.subr.mxu0 0.0
        %2409 = vmatpush1.msra.mxu0 %v2242
        %2410 = vmatprep.subr.mxu0 0.0
        %2411 = vmatpush1.msra.mxu0 %v2243
        %2412 = vmatprep.subr.mxu0 0.0
        %2413 = vmatpush1.msra.mxu0 %v2244
        %2414 = vmatprep.subr.mxu0 0.0
        %2415 = vmatpush1.msra.mxu0 %v2245
        %2416 = vmatprep.subr.mxu0 0.0
        %2417 = vmatpush1.msra.mxu0 %v2246
        %2418 = vmatprep.subr.mxu0 0.0
        %2419 = vmatpush1.msra.mxu0 %v2247
        %2420 = vmatprep.subr.mxu0 0.0
        %2421 = vmatpush1.msra.mxu0 %v2248
        %2422 = vmatprep.subr.mxu0 0.0
        %2423 = vmatpush1.msra.mxu0 0.0
        %2424 = vmatprep.subr.mxu0 0.0
        %2425 = vmatpush1.msra.mxu0 0.0
        %2426 = vmatprep.subr.mxu0 0.0
        %2427 = vmatpush1.msra.mxu0 0.0
        %2428 = vmatprep.subr.mxu0 0.0
        %2429 = vmatpush1.msra.mxu0 0.0
        %2430 = vmatprep.subr.mxu0 0.0
        %2431 = vmatpush1.msra.mxu0 0.0
        %2432 = vmatprep.subr.mxu0 0.0
        %2433 = vmatpush1.msra.mxu0 0.0
        %2434 = vmatprep.subr.mxu0 0.0
        %2435 = vmatpush1.msra.mxu0 0.0
        %2436 = vmatprep.subr.mxu0 0.0
        %2437 = vmatpush1.msra.mxu0 0.0
        %2438 = vmatprep.subr.mxu0 0.0
        %2439 = vmatpush1.msra.mxu0 0.0
        %2440 = vmatprep.subr.mxu0 0.0
        %2441 = vmatpush1.msra.mxu0 0.0
        %2442 = vmatprep.subr.mxu0 0.0
        %2443 = vmatpush1.msra.mxu0 0.0
        %2444 = vmatprep.subr.mxu0 0.0
        %2445 = vmatpush1.msra.mxu0 0.0
        %2446 = vmatprep.subr.mxu0 0.0
        %2447 = vmatpush1.msra.mxu0 0.0
        %2448 = vmatprep.subr.mxu0 0.0
        %2449 = vmatpush1.msra.mxu0 0.0
        %2450 = vmatprep.subr.mxu0 0.0
        %2451 = vmatpush1.msra.mxu0 0.0
        %2452 = vmatprep.subr.mxu0 0.0
        %2453 = vmatpush1.msra.mxu0 0.0
        %2454 = vmatprep.mubr.f32.mxu0 0.0
        %2455 = vmatmul.mubr.f32.gmra.mrb[0].mxu0 %v2168
        %v2456 = vpop.f32.mrb[0].mxu0
        %v2457 = vadd.f32 %v2387, %v2456
        %v2458 = vpop.f32.mrb[0].mxu0
        %2459 = vdwg.mxu0
        %v2460 = vmax.f32 %v2457, 0.0
        %v2461 = vld [vmem:[#allocation4 + $0x618] sm:$0xff]
        %v2462 = vld [vmem:[#allocation4 + $0x620] sm:$0xff]
        %v2463 = vld [vmem:[#allocation4 + $0x628] sm:$0xff]
        %v2464 = vld [vmem:[#allocation4 + $0x630] sm:$0xff]
        %v2465 = vld [vmem:[#allocation4 + $0x638] sm:$0xff]
        %v2466 = vld [vmem:[#allocation4 + $0x640] sm:$0xff]
        %v2467 = vld [vmem:[#allocation4 + $0x648] sm:$0xff]
        %v2468 = vld [vmem:[#allocation4 + $0x650] sm:$0xff]
        %v2469 = vld [vmem:[#allocation4 + $0x658] sm:$0xff]
        %v2470 = vld [vmem:[#allocation4 + $0x660] sm:$0xff]
        %v2471 = vld [vmem:[#allocation4 + $0x668] sm:$0xff]
        %v2472 = vld [vmem:[#allocation4 + $0x670] sm:$0xff]
        %v2473 = vld [vmem:[#allocation4 + $0x678] sm:$0xff]
        %v2474 = vld [vmem:[#allocation4 + $0x680] sm:$0xff]
        %v2475 = vld [vmem:[#allocation4 + $0x688] sm:$0xff]
        %v2476 = vld [vmem:[#allocation4 + $0x690] sm:$0xff]
        %2477 = vmatprep.subr.mxu0 0.0
        %2478 = vmatpush1.msra.mxu0 %v2461
        %2479 = vmatprep.subr.mxu0 0.0
        %2480 = vmatpush1.msra.mxu0 %v2462
        %2481 = vmatprep.subr.mxu0 0.0
        %2482 = vmatpush1.msra.mxu0 %v2463
        %2483 = vmatprep.subr.mxu0 0.0
        %2484 = vmatpush1.msra.mxu0 %v2464
        %2485 = vmatprep.subr.mxu0 0.0
        %2486 = vmatpush1.msra.mxu0 %v2465
        %2487 = vmatprep.subr.mxu0 0.0
        %2488 = vmatpush1.msra.mxu0 %v2466
        %2489 = vmatprep.subr.mxu0 0.0
        %2490 = vmatpush1.msra.mxu0 %v2467
        %2491 = vmatprep.subr.mxu0 0.0
        %2492 = vmatpush1.msra.mxu0 %v2468
        %2493 = vmatprep.subr.mxu0 0.0
        %2494 = vmatpush1.msra.mxu0 %v2469
        %2495 = vmatprep.subr.mxu0 0.0
        %2496 = vmatpush1.msra.mxu0 %v2470
        %2497 = vmatprep.subr.mxu0 0.0
        %2498 = vmatpush1.msra.mxu0 %v2471
        %2499 = vmatprep.subr.mxu0 0.0
        %2500 = vmatpush1.msra.mxu0 %v2472
        %2501 = vmatprep.subr.mxu0 0.0
        %2502 = vmatpush1.msra.mxu0 %v2473
        %2503 = vmatprep.subr.mxu0 0.0
        %2504 = vmatpush1.msra.mxu0 %v2474
        %2505 = vmatprep.subr.mxu0 0.0
        %2506 = vmatpush1.msra.mxu0 %v2475
        %2507 = vmatprep.subr.mxu0 0.0
        %2508 = vmatpush1.msra.mxu0 %v2476
        %2509 = vmatprep.subr.mxu0 0.0
        %2510 = vmatpush1.msra.mxu0 0.0
        %2511 = vmatprep.subr.mxu0 0.0
        %2512 = vmatpush1.msra.mxu0 0.0
        %2513 = vmatprep.subr.mxu0 0.0
        %2514 = vmatpush1.msra.mxu0 0.0
        %2515 = vmatprep.subr.mxu0 0.0
        %2516 = vmatpush1.msra.mxu0 0.0
        %2517 = vmatprep.subr.mxu0 0.0
        %2518 = vmatpush1.msra.mxu0 0.0
        %2519 = vmatprep.subr.mxu0 0.0
        %2520 = vmatpush1.msra.mxu0 0.0
        %2521 = vmatprep.subr.mxu0 0.0
        %2522 = vmatpush1.msra.mxu0 0.0
        %2523 = vmatprep.subr.mxu0 0.0
        %2524 = vmatpush1.msra.mxu0 0.0
        %2525 = vmatprep.subr.mxu0 0.0
        %2526 = vmatpush1.msra.mxu0 0.0
        %2527 = vmatprep.subr.mxu0 0.0
        %2528 = vmatpush1.msra.mxu0 0.0
        %2529 = vmatprep.subr.mxu0 0.0
        %2530 = vmatpush1.msra.mxu0 0.0
        %2531 = vmatprep.subr.mxu0 0.0
        %2532 = vmatpush1.msra.mxu0 0.0
        %2533 = vmatprep.subr.mxu0 0.0
        %2534 = vmatpush1.msra.mxu0 0.0
        %2535 = vmatprep.subr.mxu0 0.0
        %2536 = vmatpush1.msra.mxu0 0.0
        %2537 = vmatprep.subr.mxu0 0.0
        %2538 = vmatpush1.msra.mxu0 0.0
        %2539 = vmatprep.subr.mxu0 0.0
        %2540 = vmatpush1.msra.mxu0 0.0
        %2541 = vmatprep.mubr.f32.mxu0 0.0
        %2542 = vmatmul.mubr.f32.gmra.mrb[0].mxu0 %v2460
        %v2543 = vpop.f32.mrb[0].mxu0
        %v2544 = vadd.f32 0.0, %v2543
        %v2545 = vpop.f32.mrb[0].mxu0
        %2546 = vdwg.mxu0
        %v2547 = vadd.f32 %v1647, %v2544
        %v2548 = vld [vmem:[#allocation2 + $0x1900] sm:$0xff]
        %v2549 = vld [vmem:[#allocation2 + $0x1908] sm:$0xff]
        %v2550 = vld [vmem:[#allocation2 + $0x1910] sm:$0xff]
        %v2551 = vld [vmem:[#allocation2 + $0x1928] sm:$0xff]
        %v2552 = vld [vmem:[#allocation2 + $0x1930] sm:$0xff]
        %v2553 = vld [vmem:[#allocation2 + $0x1938] sm:$0xff]
        %v2554 = vld [vmem:[#allocation2 + $0x1950] sm:$0xff]
        %v2555 = vld [vmem:[#allocation2 + $0x1958] sm:$0xff]
        %v2556 = vld [vmem:[#allocation2 + $0x1960] sm:$0xff]
        %v2557 = vld [vmem:[#allocation2 + $0x1978] sm:$0xff]
        %v2558 = vld [vmem:[#allocation2 + $0x1980] sm:$0xff]
        %v2559 = vld [vmem:[#allocation2 + $0x1988] sm:$0xff]
        %v2560 = vld [vmem:[#allocation2 + $0x19a0] sm:$0xff]
        %v2561 = vld [vmem:[#allocation2 + $0x19a8] sm:$0xff]
        %v2562 = vld [vmem:[#allocation2 + $0x19b0] sm:$0xff]
        %v2563 = vld [vmem:[#allocation2 + $0x19c8] sm:$0xff]
        %v2564 = vld [vmem:[#allocation2 + $0x19d0] sm:$0xff]
        %v2565 = vld [vmem:[#allocation2 + $0x19d8] sm:$0xff]
        %v2566 = vld [vmem:[#allocation2 + $0x19f0] sm:$0xff]
        %v2567 = vld [vmem:[#allocation2 + $0x19f8] sm:$0xff]
        %v2568 = vld [vmem:[#allocation2 + $0x1a00] sm:$0xff]
        %v2569 = vld [vmem:[#allocation2 + $0x1a18] sm:$0xff]
        %v2570 = vld [vmem:[#allocation2 + $0x1a20] sm:$0xff]
        %v2571 = vld [vmem:[#allocation2 + $0x1a28] sm:$0xff]
        %v2572 = vld [vmem:[#allocation2 + $0x1a40] sm:$0xff]
        %v2573 = vld [vmem:[#allocation2 + $0x1a48] sm:$0xff]
        %v2574 = vld [vmem:[#allocation2 + $0x1a50] sm:$0xff]
        %v2575 = vld [vmem:[#allocation2 + $0x1a68] sm:$0xff]
        %v2576 = vld [vmem:[#allocation2 + $0x1a70] sm:$0xff]
        %v2577 = vld [vmem:[#allocation2 + $0x1a78] sm:$0xff]
        %v2578 = vld [vmem:[#allocation2 + $0x1a90] sm:$0xff]
        %v2579 = vld [vmem:[#allocation2 + $0x1a98] sm:$0xff]
        %v2580 = vld [vmem:[#allocation2 + $0x1aa0] sm:$0xff]
        %v2581 = vld [vmem:[#allocation2 + $0x1ab8] sm:$0xff]
        %v2582 = vld [vmem:[#allocation2 + $0x1ac0] sm:$0xff]
        %v2583 = vld [vmem:[#allocation2 + $0x1ac8] sm:$0xff]
        %v2584 = vld [vmem:[#allocation2 + $0x1ae0] sm:$0xff]
        %v2585 = vld [vmem:[#allocation2 + $0x1ae8] sm:$0xff]
        %v2586 = vld [vmem:[#allocation2 + $0x1af0] sm:$0xff]
        %v2587 = vld [vmem:[#allocation2 + $0x1b08] sm:$0xff]
        %v2588 = vld [vmem:[#allocation2 + $0x1b10] sm:$0xff]
        %v2589 = vld [vmem:[#allocation2 + $0x1b18] sm:$0xff]
        %v2590 = vld [vmem:[#allocation2 + $0x1b30] sm:$0xff]
        %v2591 = vld [vmem:[#allocation2 + $0x1b38] sm:$0xff]
        %v2592 = vld [vmem:[#allocation2 + $0x1b40] sm:$0xff]
        %v2593 = vld [vmem:[#allocation2 + $0x1b58] sm:$0xff]
        %v2594 = vld [vmem:[#allocation2 + $0x1b60] sm:$0xff]
        %v2595 = vld [vmem:[#allocation2 + $0x1b68] sm:$0xff]
        %2596 = vmatprep.subr.mxu0 %v2549
        %2597 = vmatpush1.msra.mxu0 %v2548
        %2598 = vmatprep.subr.mxu0 %v2552
        %2599 = vmatpush1.msra.mxu0 %v2551
        %2600 = vmatprep.subr.mxu0 %v2555
        %2601 = vmatpush1.msra.mxu0 %v2554
        %2602 = vmatprep.subr.mxu0 %v2558
        %2603 = vmatpush1.msra.mxu0 %v2557
        %2604 = vmatprep.subr.mxu0 %v2561
        %2605 = vmatpush1.msra.mxu0 %v2560
        %2606 = vmatprep.subr.mxu0 %v2564
        %2607 = vmatpush1.msra.mxu0 %v2563
        %2608 = vmatprep.subr.mxu0 %v2567
        %2609 = vmatpush1.msra.mxu0 %v2566
        %2610 = vmatprep.subr.mxu0 %v2570
        %2611 = vmatpush1.msra.mxu0 %v2569
        %2612 = vmatprep.subr.mxu0 %v2573
        %2613 = vmatpush1.msra.mxu0 %v2572
        %2614 = vmatprep.subr.mxu0 %v2576
        %2615 = vmatpush1.msra.mxu0 %v2575
        %2616 = vmatprep.subr.mxu0 %v2579
        %2617 = vmatpush1.msra.mxu0 %v2578
        %2618 = vmatprep.subr.mxu0 %v2582
        %2619 = vmatpush1.msra.mxu0 %v2581
        %2620 = vmatprep.subr.mxu0 %v2585
        %2621 = vmatpush1.msra.mxu0 %v2584
        %2622 = vmatprep.subr.mxu0 %v2588
        %2623 = vmatpush1.msra.mxu0 %v2587
        %2624 = vmatprep.subr.mxu0 %v2591
        %2625 = vmatpush1.msra.mxu0 %v2590
        %2626 = vmatprep.subr.mxu0 %v2594
        %2627 = vmatpush1.msra.mxu0 %v2593
        %2628 = vmatprep.subr.mxu0 0.0
        %2629 = vmatpush1.msra.mxu0 0.0
        %2630 = vmatprep.subr.mxu0 0.0
        %2631 = vmatpush1.msra.mxu0 0.0
        %2632 = vmatprep.subr.mxu0 0.0
        %2633 = vmatpush1.msra.mxu0 0.0
        %2634 = vmatprep.subr.mxu0 0.0
        %2635 = vmatpush1.msra.mxu0 0.0
        %2636 = vmatprep.subr.mxu0 0.0
        %2637 = vmatpush1.msra.mxu0 0.0
        %2638 = vmatprep.subr.mxu0 0.0
        %2639 = vmatpush1.msra.mxu0 0.0
        %2640 = vmatprep.subr.mxu0 0.0
        %2641 = vmatpush1.msra.mxu0 0.0
        %2642 = vmatprep.subr.mxu0 0.0
        %2643 = vmatpush1.msra.mxu0 0.0
        %2644 = vmatprep.subr.mxu0 0.0
        %2645 = vmatpush1.msra.mxu0 0.0
        %2646 = vmatprep.subr.mxu0 0.0
        %2647 = vmatpush1.msra.mxu0 0.0
        %2648 = vmatprep.subr.mxu0 0.0
        %2649 = vmatpush1.msra.mxu0 0.0
        %2650 = vmatprep.subr.mxu0 0.0
        %2651 = vmatpush1.msra.mxu0 0.0
        %2652 = vmatprep.subr.mxu0 0.0
        %2653 = vmatpush1.msra.mxu0 0.0
        %2654 = vmatprep.subr.mxu0 0.0
        %2655 = vmatpush1.msra.mxu0 0.0
        %2656 = vmatprep.subr.mxu0 0.0
        %2657 = vmatpush1.msra.mxu0 0.0
        %2658 = vmatprep.subr.mxu0 0.0
        %2659 = vmatpush1.msra.mxu0 0.0
        %2660 = vmatprep.mubr.f32.mxu0 0.0
        %2661 = vmatmul.mubr.f32.gmra.mrb[0].mxu0 %v2460
        %v2662 = vpop.f32.mrb[0].mxu0
        %v2663 = vadd.f32 0.0, %v2662
        %v2664 = vpop.f32.mrb[0].mxu0
        %v2665 = vadd.f32 0.0, %v2664
        %2666 = vdwg.mxu0
        %2667 = vmatprep.subr.mxu0 0.0
        %2668 = vmatpush1.msra.mxu0 %v2550
        %2669 = vmatprep.subr.mxu0 0.0
        %2670 = vmatpush1.msra.mxu0 %v2553
        %2671 = vmatprep.subr.mxu0 0.0
        %2672 = vmatpush1.msra.mxu0 %v2556
        %2673 = vmatprep.subr.mxu0 0.0
        %2674 = vmatpush1.msra.mxu0 %v2559
        %2675 = vmatprep.subr.mxu0 0.0
        %2676 = vmatpush1.msra.mxu0 %v2562
        %2677 = vmatprep.subr.mxu0 0.0
        %2678 = vmatpush1.msra.mxu0 %v2565
        %2679 = vmatprep.subr.mxu0 0.0
        %2680 = vmatpush1.msra.mxu0 %v2568
        %2681 = vmatprep.subr.mxu0 0.0
        %2682 = vmatpush1.msra.mxu0 %v2571
        %2683 = vmatprep.subr.mxu0 0.0
        %2684 = vmatpush1.msra.mxu0 %v2574
        %2685 = vmatprep.subr.mxu0 0.0
        %2686 = vmatpush1.msra.mxu0 %v2577
        %2687 = vmatprep.subr.mxu0 0.0
        %2688 = vmatpush1.msra.mxu0 %v2580
        %2689 = vmatprep.subr.mxu0 0.0
        %2690 = vmatpush1.msra.mxu0 %v2583
        %2691 = vmatprep.subr.mxu0 0.0
        %2692 = vmatpush1.msra.mxu0 %v2586
        %2693 = vmatprep.subr.mxu0 0.0
        %2694 = vmatpush1.msra.mxu0 %v2589
        %2695 = vmatprep.subr.mxu0 0.0
        %2696 = vmatpush1.msra.mxu0 %v2592
        %2697 = vmatprep.subr.mxu0 0.0
        %2698 = vmatpush1.msra.mxu0 %v2595
        %2699 = vmatprep.subr.mxu0 0.0
        %2700 = vmatpush1.msra.mxu0 0.0
        %2701 = vmatprep.subr.mxu0 0.0
        %2702 = vmatpush1.msra.mxu0 0.0
        %2703 = vmatprep.subr.mxu0 0.0
        %2704 = vmatpush1.msra.mxu0 0.0
        %2705 = vmatprep.subr.mxu0 0.0
        %2706 = vmatpush1.msra.mxu0 0.0
        %2707 = vmatprep.subr.mxu0 0.0
        %2708 = vmatpush1.msra.mxu0 0.0
        %2709 = vmatprep.subr.mxu0 0.0
        %2710 = vmatpush1.msra.mxu0 0.0
        %2711 = vmatprep.subr.mxu0 0.0
        %2712 = vmatpush1.msra.mxu0 0.0
        %2713 = vmatprep.subr.mxu0 0.0
        %2714 = vmatpush1.msra.mxu0 0.0
        %2715 = vmatprep.subr.mxu0 0.0
        %2716 = vmatpush1.msra.mxu0 0.0
        %2717 = vmatprep.subr.mxu0 0.0
        %2718 = vmatpush1.msra.mxu0 0.0
        %2719 = vmatprep.subr.mxu0 0.0
        %2720 = vmatpush1.msra.mxu0 0.0
        %2721 = vmatprep.subr.mxu0 0.0
        %2722 = vmatpush1.msra.mxu0 0.0
        %2723 = vmatprep.subr.mxu0 0.0
        %2724 = vmatpush1.msra.mxu0 0.0
        %2725 = vmatprep.subr.mxu0 0.0
        %2726 = vmatpush1.msra.mxu0 0.0
        %2727 = vmatprep.subr.mxu0 0.0
        %2728 = vmatpush1.msra.mxu0 0.0
        %2729 = vmatprep.subr.mxu0 0.0
        %2730 = vmatpush1.msra.mxu0 0.0
        %2731 = vmatprep.mubr.f32.mxu0 0.0
        %2732 = vmatmul.mubr.f32.gmra.mrb[0].mxu0 %v2460
        %v2733 = vpop.f32.mrb[0].mxu0
        %v2734 = vadd.f32 0.0, %v2733
        %v2735 = vpop.f32.mrb[0].mxu0
        %2736 = vdwg.mxu0
        %v2737 = vlaneseq
        %v2738 = vshrl.u32 %v2737, 7
        %v2739 = vsub.s32 7, %v2738
        %v2740 = vrot.slane %v194, %v2739
        %2742 = vmatprep.subr.mxu0 %v646
        %2743 = vmatpush1.msra.mxu0 %v645
        %2744 = vmatprep.subr.mxu0 %v649
        %2745 = vmatpush1.msra.mxu0 %v648
        %2746 = vmatprep.subr.mxu0 %v652
        %2747 = vmatpush1.msra.mxu0 %v651
        %2748 = vmatprep.subr.mxu0 %v655
        %2749 = vmatpush1.msra.mxu0 %v654
        %2750 = vmatprep.subr.mxu0 %v658
        %2751 = vmatpush1.msra.mxu0 %v657
        %2752 = vmatprep.subr.mxu0 %v661
        %2753 = vmatpush1.msra.mxu0 %v660
        %2754 = vmatprep.subr.mxu0 %v664
        %2755 = vmatpush1.msra.mxu0 %v663
        %2756 = vmatprep.subr.mxu0 %v667
        %2757 = vmatpush1.msra.mxu0 %v666
        %2758 = vmatprep.subr.mxu0 %v670
        %2759 = vmatpush1.msra.mxu0 %v669
        %2760 = vmatprep.subr.mxu0 %v673
        %2761 = vmatpush1.msra.mxu0 %v672
        %2762 = vmatprep.subr.mxu0 %v676
        %2763 = vmatpush1.msra.mxu0 %v675
        %2764 = vmatprep.subr.mxu0 %v679
        %2765 = vmatpush1.msra.mxu0 %v678
        %2766 = vmatprep.subr.mxu0 %v682
        %2767 = vmatpush1.msra.mxu0 %v681
        %2768 = vmatprep.subr.mxu0 %v685
        %2769 = vmatpush1.msra.mxu0 %v684
        %2770 = vmatprep.subr.mxu0 %v688
        %2771 = vmatpush1.msra.mxu0 %v687
        %2772 = vmatprep.subr.mxu0 %v691
        %2773 = vmatpush1.msra.mxu0 %v690
        %2774 = vmatprep.subr.mxu0 0.0
        %2775 = vmatpush1.msra.mxu0 0.0
        %2776 = vmatprep.subr.mxu0 0.0
        %2777 = vmatpush1.msra.mxu0 0.0
        %2778 = vmatprep.subr.mxu0 0.0
        %2779 = vmatpush1.msra.mxu0 0.0
        %2780 = vmatprep.subr.mxu0 0.0
        %2781 = vmatpush1.msra.mxu0 0.0
        %2782 = vmatprep.subr.mxu0 0.0
        %2783 = vmatpush1.msra.mxu0 0.0
        %2784 = vmatprep.subr.mxu0 0.0
        %2785 = vmatpush1.msra.mxu0 0.0
        %2786 = vmatprep.subr.mxu0 0.0
        %2787 = vmatpush1.msra.mxu0 0.0
        %2788 = vmatprep.subr.mxu0 0.0
        %2789 = vmatpush1.msra.mxu0 0.0
        %2790 = vmatprep.subr.mxu0 0.0
        %2791 = vmatpush1.msra.mxu0 0.0
        %2792 = vmatprep.subr.mxu0 0.0
        %2793 = vmatpush1.msra.mxu0 0.0
        %2794 = vmatprep.subr.mxu0 0.0
        %2795 = vmatpush1.msra.mxu0 0.0
        %2796 = vmatprep.subr.mxu0 0.0
        %2797 = vmatpush1.msra.mxu0 0.0
        %2798 = vmatprep.subr.mxu0 0.0
        %2799 = vmatpush1.msra.mxu0 0.0
        %2800 = vmatprep.subr.mxu0 0.0
        %2801 = vmatpush1.msra.mxu0 0.0
        %2802 = vmatprep.subr.mxu0 0.0
        %2803 = vmatpush1.msra.mxu0 0.0
        %2804 = vmatprep.subr.mxu0 0.0
        %2805 = vmatpush1.msra.mxu0 0.0
        %2806 = vmatprep.mubr.f32.mxu0 0.0
        %2807 = vmatmul.mubr.f32.gmra.mrb[0].mxu0 %v2740
        %v2808 = vpop.f32.mrb[0].mxu0
        %v2809 = vadd.f32 %v2663, %v2808
        %v2810 = vpop.f32.mrb[0].mxu0
        %v2811 = vadd.f32 %v2665, %v2810
        %2812 = vdwg.mxu0
        %2813 = vmatprep.subr.mxu0 0.0
        %2814 = vmatpush1.msra.mxu0 %v647
        %2815 = vmatprep.subr.mxu0 0.0
        %2816 = vmatpush1.msra.mxu0 %v650
        %2817 = vmatprep.subr.mxu0 0.0
        %2818 = vmatpush1.msra.mxu0 %v653
        %2819 = vmatprep.subr.mxu0 0.0
        %2820 = vmatpush1.msra.mxu0 %v656
        %2821 = vmatprep.subr.mxu0 0.0
        %2822 = vmatpush1.msra.mxu0 %v659
        %2823 = vmatprep.subr.mxu0 0.0
        %2824 = vmatpush1.msra.mxu0 %v662
        %2825 = vmatprep.subr.mxu0 0.0
        %2826 = vmatpush1.msra.mxu0 %v665
        %2827 = vmatprep.subr.mxu0 0.0
        %2828 = vmatpush1.msra.mxu0 %v668
        %2829 = vmatprep.subr.mxu0 0.0
        %2830 = vmatpush1.msra.mxu0 %v671
        %2831 = vmatprep.subr.mxu0 0.0
        %2832 = vmatpush1.msra.mxu0 %v674
        %2833 = vmatprep.subr.mxu0 0.0
        %2834 = vmatpush1.msra.mxu0 %v677
        %2835 = vmatprep.subr.mxu0 0.0
        %2836 = vmatpush1.msra.mxu0 %v680
        %2837 = vmatprep.subr.mxu0 0.0
        %2838 = vmatpush1.msra.mxu0 %v683
        %2839 = vmatprep.subr.mxu0 0.0
        %2840 = vmatpush1.msra.mxu0 %v686
        %2841 = vmatprep.subr.mxu0 0.0
        %2842 = vmatpush1.msra.mxu0 %v689
        %2843 = vmatprep.subr.mxu0 0.0
        %2844 = vmatpush1.msra.mxu0 %v692
        %2845 = vmatprep.subr.mxu0 0.0
        %2846 = vmatpush1.msra.mxu0 0.0
        %2847 = vmatprep.subr.mxu0 0.0
        %2848 = vmatpush1.msra.mxu0 0.0
        %2849 = vmatprep.subr.mxu0 0.0
        %2850 = vmatpush1.msra.mxu0 0.0
        %2851 = vmatprep.subr.mxu0 0.0
        %2852 = vmatpush1.msra.mxu0 0.0
        %2853 = vmatprep.subr.mxu0 0.0
        %2854 = vmatpush1.msra.mxu0 0.0
        %2855 = vmatprep.subr.mxu0 0.0
        %2856 = vmatpush1.msra.mxu0 0.0
        %2857 = vmatprep.subr.mxu0 0.0
        %2858 = vmatpush1.msra.mxu0 0.0
        %2859 = vmatprep.subr.mxu0 0.0
        %2860 = vmatpush1.msra.mxu0 0.0
        %2861 = vmatprep.subr.mxu0 0.0
        %2862 = vmatpush1.msra.mxu0 0.0
        %2863 = vmatprep.subr.mxu0 0.0
        %2864 = vmatpush1.msra.mxu0 0.0
        %2865 = vmatprep.subr.mxu0 0.0
        %2866 = vmatpush1.msra.mxu0 0.0
        %2867 = vmatprep.subr.mxu0 0.0
        %2868 = vmatpush1.msra.mxu0 0.0
        %2869 = vmatprep.subr.mxu0 0.0
        %2870 = vmatpush1.msra.mxu0 0.0
        %2871 = vmatprep.subr.mxu0 0.0
        %2872 = vmatpush1.msra.mxu0 0.0
        %2873 = vmatprep.subr.mxu0 0.0
        %2874 = vmatpush1.msra.mxu0 0.0
        %2875 = vmatprep.subr.mxu0 0.0
        %2876 = vmatpush1.msra.mxu0 0.0
        %2877 = vmatprep.mubr.f32.mxu0 0.0
        %2878 = vmatmul.mubr.f32.gmra.mrb[0].mxu0 %v2740
        %v2879 = vpop.f32.mrb[0].mxu0
        %v2880 = vadd.f32 %v2734, %v2879
        %v2881 = vpop.f32.mrb[0].mxu0
        %2882 = vdwg.mxu0
        %v2883 = vmax.f32 %v2809, 0.0
        %v2884 = vmax.f32 %v2811, 0.0
        %v2885 = vmax.f32 %v2880, 0.0
        %v2886 = vld [vmem:[#allocation4 + $0x698] sm:$0xff]
        %v2887 = vld [vmem:[#allocation4 + $0x6a0] sm:$0xff]
        %v2888 = vld [vmem:[#allocation4 + $0x6a8] sm:$0xff]
        %v2889 = vld [vmem:[#allocation4 + $0x6b0] sm:$0xff]
        %v2890 = vld [vmem:[#allocation4 + $0x6b8] sm:$0xff]
        %v2891 = vld [vmem:[#allocation4 + $0x6c0] sm:$0xff]
        %v2892 = vld [vmem:[#allocation4 + $0x6c8] sm:$0xff]
        %v2893 = vld [vmem:[#allocation4 + $0x6d0] sm:$0xff]
        %v2894 = vld [vmem:[#allocation4 + $0x6d8] sm:$0xff]
        %v2895 = vld [vmem:[#allocation4 + $0x6e0] sm:$0xff]
        %v2896 = vld [vmem:[#allocation4 + $0x6e8] sm:$0xff]
        %v2897 = vld [vmem:[#allocation4 + $0x6f0] sm:$0xff]
        %v2898 = vld [vmem:[#allocation4 + $0x6f8] sm:$0xff]
        %v2899 = vld [vmem:[#allocation4 + $0x700] sm:$0xff]
        %v2900 = vld [vmem:[#allocation4 + $0x708] sm:$0xff]
        %v2901 = vld [vmem:[#allocation4 + $0x710] sm:$0xff]
        %v2902 = vld [vmem:[#allocation4 + $0x718] sm:$0xff]
        %v2903 = vld [vmem:[#allocation4 + $0x720] sm:$0xff]
        %v2904 = vld [vmem:[#allocation4 + $0x728] sm:$0xff]
        %v2905 = vld [vmem:[#allocation4 + $0x730] sm:$0xff]
        %v2906 = vld [vmem:[#allocation4 + $0x738] sm:$0xff]
        %v2907 = vld [vmem:[#allocation4 + $0x740] sm:$0xff]
        %v2908 = vld [vmem:[#allocation4 + $0x748] sm:$0xff]
        %v2909 = vld [vmem:[#allocation4 + $0x750] sm:$0xff]
        %v2910 = vld [vmem:[#allocation4 + $0x758] sm:$0xff]
        %v2911 = vld [vmem:[#allocation4 + $0x760] sm:$0xff]
        %v2912 = vld [vmem:[#allocation4 + $0x768] sm:$0xff]
        %v2913 = vld [vmem:[#allocation4 + $0x770] sm:$0xff]
        %v2914 = vld [vmem:[#allocation4 + $0x778] sm:$0xff]
        %v2915 = vld [vmem:[#allocation4 + $0x780] sm:$0xff]
        %v2916 = vld [vmem:[#allocation4 + $0x788] sm:$0xff]
        %v2917 = vld [vmem:[#allocation4 + $0x790] sm:$0xff]
        %v2918 = vld [vmem:[#allocation4 + $0x798] sm:$0xff]
        %v2919 = vld [vmem:[#allocation4 + $0x7a0] sm:$0xff]
        %v2920 = vld [vmem:[#allocation4 + $0x7a8] sm:$0xff]
        %v2921 = vld [vmem:[#allocation4 + $0x7b0] sm:$0xff]
        %v2922 = vld [vmem:[#allocation4 + $0x7b8] sm:$0xff]
        %v2923 = vld [vmem:[#allocation4 + $0x7c0] sm:$0xff]
        %v2924 = vld [vmem:[#allocation4 + $0x7c8] sm:$0xff]
        %v2925 = vld [vmem:[#allocation4 + $0x7d0] sm:$0xff]
        %v2926 = vld [vmem:[#allocation4 + $0x7d8] sm:$0xff]
        %v2927 = vld [vmem:[#allocation4 + $0x7e0] sm:$0xff]
        %v2928 = vld [vmem:[#allocation4 + $0x7e8] sm:$0xff]
        %v2929 = vld [vmem:[#allocation4 + $0x7f0] sm:$0xff]
        %v2930 = vld [vmem:[#allocation4 + $0x7f8] sm:$0xff]
        %v2931 = vld [vmem:[#allocation4 + $0x800] sm:$0xff]
        %v2932 = vld [vmem:[#allocation4 + $0x808] sm:$0xff]
        %v2933 = vld [vmem:[#allocation4 + $0x810] sm:$0xff]
        %v2934 = vld [vmem:[#allocation4 + $0x818] sm:$0x1]
        %2935 = vmatprep.subr.mxu0 0.0
        %2936 = vmatpush1.msra.mxu0 %v2886
        %2937 = vmatprep.subr.mxu0 0.0
        %2938 = vmatpush1.msra.mxu0 %v2887
        %2939 = vmatprep.subr.mxu0 0.0
        %2940 = vmatpush1.msra.mxu0 %v2888
        %2941 = vmatprep.subr.mxu0 0.0
        %2942 = vmatpush1.msra.mxu0 %v2889
        %2943 = vmatprep.subr.mxu0 0.0
        %2944 = vmatpush1.msra.mxu0 %v2890
        %2945 = vmatprep.subr.mxu0 0.0
        %2946 = vmatpush1.msra.mxu0 %v2891
        %2947 = vmatprep.subr.mxu0 0.0
        %2948 = vmatpush1.msra.mxu0 %v2892
        %2949 = vmatprep.subr.mxu0 0.0
        %2950 = vmatpush1.msra.mxu0 %v2893
        %2951 = vmatprep.subr.mxu0 0.0
        %2952 = vmatpush1.msra.mxu0 %v2894
        %2953 = vmatprep.subr.mxu0 0.0
        %2954 = vmatpush1.msra.mxu0 %v2895
        %2955 = vmatprep.subr.mxu0 0.0
        %2956 = vmatpush1.msra.mxu0 %v2896
        %2957 = vmatprep.subr.mxu0 0.0
        %2958 = vmatpush1.msra.mxu0 %v2897
        %2959 = vmatprep.subr.mxu0 0.0
        %2960 = vmatpush1.msra.mxu0 %v2898
        %2961 = vmatprep.subr.mxu0 0.0
        %2962 = vmatpush1.msra.mxu0 %v2899
        %2963 = vmatprep.subr.mxu0 0.0
        %2964 = vmatpush1.msra.mxu0 %v2900
        %2965 = vmatprep.subr.mxu0 0.0
        %2966 = vmatpush1.msra.mxu0 %v2901
        %2967 = vmatprep.subr.mxu0 0.0
        %2968 = vmatpush1.msra.mxu0 %v2902
        %2969 = vmatprep.subr.mxu0 0.0
        %2970 = vmatpush1.msra.mxu0 %v2903
        %2971 = vmatprep.subr.mxu0 0.0
        %2972 = vmatpush1.msra.mxu0 %v2904
        %2973 = vmatprep.subr.mxu0 0.0
        %2974 = vmatpush1.msra.mxu0 %v2905
        %2975 = vmatprep.subr.mxu0 0.0
        %2976 = vmatpush1.msra.mxu0 %v2906
        %2977 = vmatprep.subr.mxu0 0.0
        %2978 = vmatpush1.msra.mxu0 %v2907
        %2979 = vmatprep.subr.mxu0 0.0
        %2980 = vmatpush1.msra.mxu0 %v2908
        %2981 = vmatprep.subr.mxu0 0.0
        %2982 = vmatpush1.msra.mxu0 %v2909
        %2983 = vmatprep.subr.mxu0 0.0
        %2984 = vmatpush1.msra.mxu0 %v2910
        %2985 = vmatprep.subr.mxu0 0.0
        %2986 = vmatpush1.msra.mxu0 %v2911
        %2987 = vmatprep.subr.mxu0 0.0
        %2988 = vmatpush1.msra.mxu0 %v2912
        %2989 = vmatprep.subr.mxu0 0.0
        %2990 = vmatpush1.msra.mxu0 %v2913
        %2991 = vmatprep.subr.mxu0 0.0
        %2992 = vmatpush1.msra.mxu0 %v2914
        %2993 = vmatprep.subr.mxu0 0.0
        %2994 = vmatpush1.msra.mxu0 %v2915
        %2995 = vmatprep.subr.mxu0 0.0
        %2996 = vmatpush1.msra.mxu0 %v2916
        %2997 = vmatprep.subr.mxu0 0.0
        %2998 = vmatpush1.msra.mxu0 %v2917
        %2999 = vmatprep.mubr.f32.mxu0 %v2884
        %3000 = vmatmul.mubr.f32.gmra.mrb[0].mxu0 %v2883
        %v3001 = vpop.f32.mrb[0].mxu0
        %v3002 = vadd.f32 %v2934, %v3001
        %v3003 = vpop.f32.mrb[0].mxu0
        %3004 = vdwg.mxu0
        %3005 = vmatprep.subr.mxu0 0.0
        %3006 = vmatpush1.msra.mxu0 %v2918
        %3007 = vmatprep.subr.mxu0 0.0
        %3008 = vmatpush1.msra.mxu0 %v2919
        %3009 = vmatprep.subr.mxu0 0.0
        %3010 = vmatpush1.msra.mxu0 %v2920
        %3011 = vmatprep.subr.mxu0 0.0
        %3012 = vmatpush1.msra.mxu0 %v2921
        %3013 = vmatprep.subr.mxu0 0.0
        %3014 = vmatpush1.msra.mxu0 %v2922
        %3015 = vmatprep.subr.mxu0 0.0
        %3016 = vmatpush1.msra.mxu0 %v2923
        %3017 = vmatprep.subr.mxu0 0.0
        %3018 = vmatpush1.msra.mxu0 %v2924
        %3019 = vmatprep.subr.mxu0 0.0
        %3020 = vmatpush1.msra.mxu0 %v2925
        %3021 = vmatprep.subr.mxu0 0.0
        %3022 = vmatpush1.msra.mxu0 %v2926
        %3023 = vmatprep.subr.mxu0 0.0
        %3024 = vmatpush1.msra.mxu0 %v2927
        %3025 = vmatprep.subr.mxu0 0.0
        %3026 = vmatpush1.msra.mxu0 %v2928
        %3027 = vmatprep.subr.mxu0 0.0
        %3028 = vmatpush1.msra.mxu0 %v2929
        %3029 = vmatprep.subr.mxu0 0.0
        %3030 = vmatpush1.msra.mxu0 %v2930
        %3031 = vmatprep.subr.mxu0 0.0
        %3032 = vmatpush1.msra.mxu0 %v2931
        %3033 = vmatprep.subr.mxu0 0.0
        %3034 = vmatpush1.msra.mxu0 %v2932
        %3035 = vmatprep.subr.mxu0 0.0
        %3036 = vmatpush1.msra.mxu0 %v2933
        %3037 = vmatprep.subr.mxu0 0.0
        %3038 = vmatpush1.msra.mxu0 0.0
        %3039 = vmatprep.subr.mxu0 0.0
        %3040 = vmatpush1.msra.mxu0 0.0
        %3041 = vmatprep.subr.mxu0 0.0
        %3042 = vmatpush1.msra.mxu0 0.0
        %3043 = vmatprep.subr.mxu0 0.0
        %3044 = vmatpush1.msra.mxu0 0.0
        %3045 = vmatprep.subr.mxu0 0.0
        %3046 = vmatpush1.msra.mxu0 0.0
        %3047 = vmatprep.subr.mxu0 0.0
        %3048 = vmatpush1.msra.mxu0 0.0
        %3049 = vmatprep.subr.mxu0 0.0
        %3050 = vmatpush1.msra.mxu0 0.0
        %3051 = vmatprep.subr.mxu0 0.0
        %3052 = vmatpush1.msra.mxu0 0.0
        %3053 = vmatprep.subr.mxu0 0.0
        %3054 = vmatpush1.msra.mxu0 0.0
        %3055 = vmatprep.subr.mxu0 0.0
        %3056 = vmatpush1.msra.mxu0 0.0
        %3057 = vmatprep.subr.mxu0 0.0
        %3058 = vmatpush1.msra.mxu0 0.0
        %3059 = vmatprep.subr.mxu0 0.0
        %3060 = vmatpush1.msra.mxu0 0.0
        %3061 = vmatprep.subr.mxu0 0.0
        %3062 = vmatpush1.msra.mxu0 0.0
        %3063 = vmatprep.subr.mxu0 0.0
        %3064 = vmatpush1.msra.mxu0 0.0
        %3065 = vmatprep.subr.mxu0 0.0
        %3066 = vmatpush1.msra.mxu0 0.0
        %3067 = vmatprep.subr.mxu0 0.0
        %3068 = vmatpush1.msra.mxu0 0.0
        %3069 = vmatprep.mubr.f32.mxu0 0.0
        %3070 = vmatmul.mubr.f32.gmra.mrb[0].mxu0 %v2885
        %v3071 = vpop.f32.mrb[0].mxu0
        %v3072 = vadd.f32 %v3002, %v3071
        %v3073 = vpop.f32.mrb[0].mxu0
        %3074 = vdwg.mxu0
        %v3075 = vmax.f32 %v3072, 0.0
        %v3076 = vld [vmem:[#allocation4 + $0x820] sm:$0xff]
        %v3077 = vld [vmem:[#allocation4 + $0x828] sm:$0xff]
        %v3078 = vld [vmem:[#allocation4 + $0x830] sm:$0xff]
        %v3079 = vld [vmem:[#allocation4 + $0x838] sm:$0xff]
        %v3080 = vld [vmem:[#allocation4 + $0x840] sm:$0xff]
        %v3081 = vld [vmem:[#allocation4 + $0x848] sm:$0xff]
        %v3082 = vld [vmem:[#allocation4 + $0x850] sm:$0xff]
        %v3083 = vld [vmem:[#allocation4 + $0x858] sm:$0xff]
        %v3084 = vld [vmem:[#allocation4 + $0x860] sm:$0xff]
        %v3085 = vld [vmem:[#allocation4 + $0x868] sm:$0xff]
        %v3086 = vld [vmem:[#allocation4 + $0x870] sm:$0xff]
        %v3087 = vld [vmem:[#allocation4 + $0x878] sm:$0xff]
        %v3088 = vld [vmem:[#allocation4 + $0x880] sm:$0xff]
        %v3089 = vld [vmem:[#allocation4 + $0x888] sm:$0xff]
        %v3090 = vld [vmem:[#allocation4 + $0x890] sm:$0xff]
        %v3091 = vld [vmem:[#allocation4 + $0x898] sm:$0xff]
        %3092 = vmatprep.subr.mxu0 0.0
        %3093 = vmatpush1.msra.mxu0 %v3076
        %3094 = vmatprep.subr.mxu0 0.0
        %3095 = vmatpush1.msra.mxu0 %v3077
        %3096 = vmatprep.subr.mxu0 0.0
        %3097 = vmatpush1.msra.mxu0 %v3078
        %3098 = vmatprep.subr.mxu0 0.0
        %3099 = vmatpush1.msra.mxu0 %v3079
        %3100 = vmatprep.subr.mxu0 0.0
        %3101 = vmatpush1.msra.mxu0 %v3080
        %3102 = vmatprep.subr.mxu0 0.0
        %3103 = vmatpush1.msra.mxu0 %v3081
        %3104 = vmatprep.subr.mxu0 0.0
        %3105 = vmatpush1.msra.mxu0 %v3082
        %3106 = vmatprep.subr.mxu0 0.0
        %3107 = vmatpush1.msra.mxu0 %v3083
        %3108 = vmatprep.subr.mxu0 0.0
        %3109 = vmatpush1.msra.mxu0 %v3084
        %3110 = vmatprep.subr.mxu0 0.0
        %3111 = vmatpush1.msra.mxu0 %v3085
        %3112 = vmatprep.subr.mxu0 0.0
        %3113 = vmatpush1.msra.mxu0 %v3086
        %3114 = vmatprep.subr.mxu0 0.0
        %3115 = vmatpush1.msra.mxu0 %v3087
        %3116 = vmatprep.subr.mxu0 0.0
        %3117 = vmatpush1.msra.mxu0 %v3088
        %3118 = vmatprep.subr.mxu0 0.0
        %3119 = vmatpush1.msra.mxu0 %v3089
        %3120 = vmatprep.subr.mxu0 0.0
        %3121 = vmatpush1.msra.mxu0 %v3090
        %3122 = vmatprep.subr.mxu0 0.0
        %3123 = vmatpush1.msra.mxu0 %v3091
        %3124 = vmatprep.subr.mxu0 0.0
        %3125 = vmatpush1.msra.mxu0 0.0
        %3126 = vmatprep.subr.mxu0 0.0
        %3127 = vmatpush1.msra.mxu0 0.0
        %3128 = vmatprep.subr.mxu0 0.0
        %3129 = vmatpush1.msra.mxu0 0.0
        %3130 = vmatprep.subr.mxu0 0.0
        %3131 = vmatpush1.msra.mxu0 0.0
        %3132 = vmatprep.subr.mxu0 0.0
        %3133 = vmatpush1.msra.mxu0 0.0
        %3134 = vmatprep.subr.mxu0 0.0
        %3135 = vmatpush1.msra.mxu0 0.0
        %3136 = vmatprep.subr.mxu0 0.0
        %3137 = vmatpush1.msra.mxu0 0.0
        %3138 = vmatprep.subr.mxu0 0.0
        %3139 = vmatpush1.msra.mxu0 0.0
        %3140 = vmatprep.subr.mxu0 0.0
        %3141 = vmatpush1.msra.mxu0 0.0
        %3142 = vmatprep.subr.mxu0 0.0
        %3143 = vmatpush1.msra.mxu0 0.0
        %3144 = vmatprep.subr.mxu0 0.0
        %3145 = vmatpush1.msra.mxu0 0.0
        %3146 = vmatprep.subr.mxu0 0.0
        %3147 = vmatpush1.msra.mxu0 0.0
        %3148 = vmatprep.subr.mxu0 0.0
        %3149 = vmatpush1.msra.mxu0 0.0
        %3150 = vmatprep.subr.mxu0 0.0
        %3151 = vmatpush1.msra.mxu0 0.0
        %3152 = vmatprep.subr.mxu0 0.0
        %3153 = vmatpush1.msra.mxu0 0.0
        %3154 = vmatprep.subr.mxu0 0.0
        %3155 = vmatpush1.msra.mxu0 0.0
        %3156 = vmatprep.mubr.f32.mxu0 0.0
        %3157 = vmatmul.mubr.f32.gmra.mrb[0].mxu0 %v3075
        %v3158 = vpop.f32.mrb[0].mxu0
        %v3159 = vadd.f32 0.0, %v3158
        %v3160 = vpop.f32.mrb[0].mxu0
        %3161 = vdwg.mxu0
        %v3162 = vadd.f32 %v2547, %v3159
        %v3163 = vld [vmem:[#allocation4 + $0x8a0] sm:$0xff]
        %v3164 = vld [vmem:[#allocation4 + $0x8a8] sm:$0xff]
        %v3165 = vld [vmem:[#allocation4 + $0x8b0] sm:$0xff]
        %v3166 = vld [vmem:[#allocation4 + $0x8b8] sm:$0xff]
        %v3167 = vld [vmem:[#allocation4 + $0x8c0] sm:$0xff]
        %v3168 = vld [vmem:[#allocation4 + $0x8c8] sm:$0xff]
        %v3169 = vld [vmem:[#allocation4 + $0x8d0] sm:$0xff]
        %v3170 = vld [vmem:[#allocation4 + $0x8d8] sm:$0xff]
        %v3171 = vld [vmem:[#allocation4 + $0x8e0] sm:$0xff]
        %v3172 = vld [vmem:[#allocation4 + $0x8e8] sm:$0xff]
        %v3173 = vld [vmem:[#allocation4 + $0x8f0] sm:$0xff]
        %v3174 = vld [vmem:[#allocation4 + $0x8f8] sm:$0xff]
        %v3175 = vld [vmem:[#allocation4 + $0x900] sm:$0xff]
        %v3176 = vld [vmem:[#allocation4 + $0x908] sm:$0xff]
        %v3177 = vld [vmem:[#allocation4 + $0x910] sm:$0xff]
        %v3178 = vld [vmem:[#allocation4 + $0x918] sm:$0xff]
        %v3179 = vld [vmem:[#allocation4 + $0x920] sm:$0x1]
        %3180 = vmatprep.subr.mxu0 0.0
        %3181 = vmatpush1.msra.mxu0 %v3163
        %3182 = vmatprep.subr.mxu0 0.0
        %3183 = vmatpush1.msra.mxu0 %v3164
        %3184 = vmatprep.subr.mxu0 0.0
        %3185 = vmatpush1.msra.mxu0 %v3165
        %3186 = vmatprep.subr.mxu0 0.0
        %3187 = vmatpush1.msra.mxu0 %v3166
        %3188 = vmatprep.subr.mxu0 0.0
        %3189 = vmatpush1.msra.mxu0 %v3167
        %3190 = vmatprep.subr.mxu0 0.0
        %3191 = vmatpush1.msra.mxu0 %v3168
        %3192 = vmatprep.subr.mxu0 0.0
        %3193 = vmatpush1.msra.mxu0 %v3169
        %3194 = vmatprep.subr.mxu0 0.0
        %3195 = vmatpush1.msra.mxu0 %v3170
        %3196 = vmatprep.subr.mxu0 0.0
        %3197 = vmatpush1.msra.mxu0 %v3171
        %3198 = vmatprep.subr.mxu0 0.0
        %3199 = vmatpush1.msra.mxu0 %v3172
        %3200 = vmatprep.subr.mxu0 0.0
        %3201 = vmatpush1.msra.mxu0 %v3173
        %3202 = vmatprep.subr.mxu0 0.0
        %3203 = vmatpush1.msra.mxu0 %v3174
        %3204 = vmatprep.subr.mxu0 0.0
        %3205 = vmatpush1.msra.mxu0 %v3175
        %3206 = vmatprep.subr.mxu0 0.0
        %3207 = vmatpush1.msra.mxu0 %v3176
        %3208 = vmatprep.subr.mxu0 0.0
        %3209 = vmatpush1.msra.mxu0 %v3177
        %3210 = vmatprep.subr.mxu0 0.0
        %3211 = vmatpush1.msra.mxu0 %v3178
        %3212 = vmatprep.subr.mxu0 0.0
        %3213 = vmatpush1.msra.mxu0 0.0
        %3214 = vmatprep.subr.mxu0 0.0
        %3215 = vmatpush1.msra.mxu0 0.0
        %3216 = vmatprep.subr.mxu0 0.0
        %3217 = vmatpush1.msra.mxu0 0.0
        %3218 = vmatprep.subr.mxu0 0.0
        %3219 = vmatpush1.msra.mxu0 0.0
        %3220 = vmatprep.subr.mxu0 0.0
        %3221 = vmatpush1.msra.mxu0 0.0
        %3222 = vmatprep.subr.mxu0 0.0
        %3223 = vmatpush1.msra.mxu0 0.0
        %3224 = vmatprep.subr.mxu0 0.0
        %3225 = vmatpush1.msra.mxu0 0.0
        %3226 = vmatprep.subr.mxu0 0.0
        %3227 = vmatpush1.msra.mxu0 0.0
        %3228 = vmatprep.subr.mxu0 0.0
        %3229 = vmatpush1.msra.mxu0 0.0
        %3230 = vmatprep.subr.mxu0 0.0
        %3231 = vmatpush1.msra.mxu0 0.0
        %3232 = vmatprep.subr.mxu0 0.0
        %3233 = vmatpush1.msra.mxu0 0.0
        %3234 = vmatprep.subr.mxu0 0.0
        %3235 = vmatpush1.msra.mxu0 0.0
        %3236 = vmatprep.subr.mxu0 0.0
        %3237 = vmatpush1.msra.mxu0 0.0
        %3238 = vmatprep.subr.mxu0 0.0
        %3239 = vmatpush1.msra.mxu0 0.0
        %3240 = vmatprep.subr.mxu0 0.0
        %3241 = vmatpush1.msra.mxu0 0.0
        %3242 = vmatprep.subr.mxu0 0.0
        %3243 = vmatpush1.msra.mxu0 0.0
        %3244 = vmatprep.mubr.f32.mxu0 0.0
        %3245 = vmatmul.mubr.f32.gmra.mrb[0].mxu0 %v3162
        %v3246 = vpop.f32.mrb[0].mxu0
        %v3247 = vadd.f32 %v3179, %v3246
        %v3248 = vpop.f32.mrb[0].mxu0
        %3249 = vdwg.mxu0
        %3250 = vst [vmem:[%s193] sm:$0x1] %v3247
        %p3251 = scmp.lt.s32.totalorder %s16, 1
        %s3252 = scalar_select %p3251, %s16, 1
        %s3253 = scalar_lea.vmem %s3, %s3252
        // Predicated region
        $region41: #{fn.1} parent=31 // pred_check
          %p3254 = pneg %p102
        $region42: #{fn.1} parent=31 // pred_check_branch
          %3256 = sbr.rel (%p3254) target = $region44
        $region43: #{fn.1} parent=31 // pred_region
          _
        $region44: #{fn.1} parent=31 // pred_fallthru
          _
      $region32: #{fn.1} parent=5 // pred_fallthru
        _
      %p3257 = scmp.le.s32.totalorder 2, %s11
      // Predicated region
      $region45: #{fn.1} parent=5 // pred_check
        %p3258 = pneg %p3257
      $region46: #{fn.1} parent=5 // pred_check_branch
        %3260 = sbr.rel (%p3258) target = $region48
      $region47: #{fn.1} parent=5 // pred_region
        %s3261 = ssub.s32 %s11, 2
        // Predicated region
        $region49: #{fn.1} parent=47 // pred_check
          %p3262 = pneg %p108
        $region50: #{fn.1} parent=47 // pred_check_branch
          %3264 = sbr.rel (%p3262) target = $region52
        $region51: #{fn.1} parent=47 // pred_region
          %p3265 = scmp.lt.s32.totalorder %s17, 1
          %s3266 = scalar_select %p3265, %s17, 1
          %s3267 = scalar_lea.vmem %s3, %s3266
        $region52: #{fn.1} parent=47 // pred_fallthru
          _
      $region48: #{fn.1} parent=5 // pred_fallthru
        _
    $region6: #{fn.1} parent=1 // loop_footer
      %s15 = sadd.s32 1, %s11
    $region7: #{fn.1} parent=1 // loop_footer_branch
      %10 = sbr.rel target = $region3
    $region8: #{fn.1} parent=1 // loop_exit
      _
    %3268 = vsyncpa [#allocation3], 1
    %s3269 = scalar_lea.sflag [#allocation3], 1
    %3270 = vsyncpa %s3269, 1
    %3271 = vsyncpa [#allocation5], 1

</llo_original>
